<compile_context>
chip_gen: v7x
topology: tpu7x:2x2x1
jax: 0.10.0
libtpu: 0.0.40
codegen_flags: <defaults>
</compile_context>

<pallas_src>
import jax
import jax.numpy as jnp
import numpy as np
from jax import lax
from jax.experimental import pallas as pl
from jax.experimental.pallas import tpu as pltpu


# ---------------------------------------------------------------------------
# Pallas kernels
# ---------------------------------------------------------------------------

def _conv_pool_kernel(p_ref, w_ref, b_ref, o_ref):
    """Fused conv (4 matmuls, one per pool-window position) + bias + tanh + avg.

    p_ref: (1, 4, K, P*P) bf16  pool-aware im2col patches of one image;
           axis 1 = (row_parity*2 + col_parity) of the 2x2 pool window.
    w_ref: (O, K) bf16 flattened conv weight (O, C*KH*KW).
    b_ref: (O, 1) f32 bias.
    o_ref: (1, O, P*P) bf16 pooled activation (lane-dense spatial dim).
    """
    w = w_ref[...]
    bias = b_ref[...]
    acc = None
    for q in range(4):                                   # 2x2 pool window
        y = jnp.dot(w, p_ref[0, q], preferred_element_type=jnp.float32)
        t = jnp.tanh(y + bias)
        acc = t if acc is None else acc + t
    o_ref[0] = (acc * 0.25).astype(o_ref.dtype)


def _tail_kernel(p2_ref, w2_ref, b2_ref, fw1_ref, fb1_ref,
                 fw2_ref, fb2_ref, fw3_ref, fb3_ref, o_ref):
    """conv2 + tanh + pool2 + NCHW flatten + fc(256,120)+tanh + fc(120,84)+tanh
    + fc(84,1) + sigmoid, entirely in VMEM.

    p2_ref : (B, 4, 150, 16) bf16  pool-aware im2col patches of pool1 output
    w2_ref : (16, 150) bf16 ; b2_ref: (16, 1) f32
    fw1_ref: (16, 16, 120) f32  (= fc1.weight.T reshaped (C, H*W, 120))
    fb1_ref: (1, 120) f32
    fw2_ref: (120, 84) f32 ; fb2_ref: (1, 84) f32
    fw3_ref: (1, 84) f32  ; fb3_ref: (1, 1) f32
    o_ref  : (B, 1) f32
    """
    B = p2_ref.shape[0]
    w2 = w2_ref[...]
    b2 = b2_ref[...]
    rows = []
    for b in range(B):                                   # B is static and tiny
        # conv2 + tanh + pool2 -> (16 channels, 16 spatial) == NCHW flatten
        acc = None
        for q in range(4):
            y = jnp.dot(w2, p2_ref[b, q], preferred_element_type=jnp.float32)
            t = jnp.tanh(y + b2)
            acc = t if acc is None else acc + t
        feat = acc * 0.25                                # (16, 16)

        # fc1: sum_c feat[c, :] @ fw1[c]  ==  flatten_NCHW(feat) @ fc1.weight.T
        h = None
        for c in range(16):
            part = jnp.dot(feat[c:c + 1, :], fw1_ref[c],
                           preferred_element_type=jnp.float32)
            h = part if h is None else h + part
        h = jnp.tanh(h + fb1_ref[...])                                   # (1, 120)
        h = jnp.tanh(jnp.dot(h, fw2_ref[...],
                             preferred_element_type=jnp.float32)
                     + fb2_ref[...])                                     # (1, 84)
        # fc3 as a lane reduction (avoids an N=1 matmul)
        z = jnp.sum(h * fw3_ref[...], axis=1, keepdims=True) + fb3_ref[...]
        rows.append(1.0 / (1.0 + jnp.exp(-z)))           # exact sigmoid
    o_ref[...] = jnp.concatenate(rows, axis=0)


# ---------------------------------------------------------------------------
# pallas_call wrappers
# ---------------------------------------------------------------------------

def conv_pool(patches, w_flat, bias, out_dtype=jnp.bfloat16):
    """(B, 4, K, P2) patches -> pooled activation (B, O, P2); grid over images."""
    B, _, K, P2 = patches.shape
    O = w_flat.shape[0]
    return pl.pallas_call(
        _conv_pool_kernel,
        out_shape=jax.ShapeDtypeStruct((B, O, P2), out_dtype),
        grid=(B,),
        in_specs=[
            pl.BlockSpec((1, 4, K, P2), lambda b: (b, 0, 0, 0)),
            pl.BlockSpec((O, K), lambda b: (0, 0)),
            pl.BlockSpec((O, 1), lambda b: (0, 0)),
        ],
        out_specs=pl.BlockSpec((1, O, P2), lambda b: (b, 0, 0)),
        compiler_params=pltpu.CompilerParams(
            dimension_semantics=("parallel",)),
    )(patches, w_flat, bias)


def tail(p2, prep):
    """conv2 + pool2 + FC stack + sigmoid in a single (un-gridded) kernel."""
    B = p2.shape[0]
    return pl.pallas_call(
        _tail_kernel,
        out_shape=jax.ShapeDtypeStruct((B, 1), jnp.float32),
    )(p2, prep["w2k"], prep["b2k"], prep["fw1"], prep["fb1"],
      prep["fw2"], prep["fb2"], prep["fw3"], prep["fb3"])


# ---------------------------------------------------------------------------
# Glue: pool-aware im2col (XLA, data movement only)
# ---------------------------------------------------------------------------

def pooled_conv_patches(x_nchw, kh, kw, pool_out, pool_stride):
    """im2col restricted to the conv positions read by AvgPool2d(2, stride).

    Returns (B, 4, C*kh*kw, pool_out**2).  Axis 1 is the 2x2 pool-window
    position (row_parity*2 + col_parity); axis 2 order is (c, ki, kj), which
    matches weight.reshape(O, C*kh*kw).
    """
    B, C, H, W = x_nchw.shape
    P, S = pool_out, pool_stride
    span = S * (P - 1) + 1
    qs = []
    for rp in range(2):
        for cp in range(2):
            taps = []
            for ki in range(kh):
                for kj in range(kw):
                    r0, c0 = rp + ki, cp + kj
                    taps.append(x_nchw[:, :, r0:r0 + span:S, c0:c0 + span:S])
            t = jnp.stack(taps, axis=2)                  # (B, C, kh*kw, P, P)
            qs.append(t.reshape(B, C * kh * kw, P * P))
    return jnp.stack(qs, axis=1)                         # (B, 4, C*kh*kw, P*P)


# ---------------------------------------------------------------------------
# Parameter prep (hoisted out of the per-call path) and full forward
# ---------------------------------------------------------------------------

def prepare_params(p):
    """One-time reshapes / transposes / casts of the raw parameters."""
    return {
        "w1k": p["w1"].reshape(6, 75).astype(jnp.bfloat16),
        "b1k": p["b1"].reshape(6, 1).astype(jnp.float32),
        "w2k": p["w2"].reshape(16, 150).astype(jnp.bfloat16),
        "b2k": p["b2"].reshape(16, 1).astype(jnp.float32),
        # fc1.weight is (120, 256) with input index c*16 + (i*4 + j)  (NCHW)
        "fw1": p["fw1"].T.reshape(16, 16, 120).astype(jnp.float32),
        "fb1": p["fb1"].reshape(1, 120).astype(jnp.float32),
        "fw2": p["fw2"].T.astype(jnp.float32),           # (120, 84)
        "fb2": p["fb2"].reshape(1, 84).astype(jnp.float32),
        "fw3": p["fw3"].astype(jnp.float32),             # (1, 84)
        "fb3": p["fb3"].reshape(1, 1).astype(jnp.float32),
    }


def cnn_forward(x_nchw, prep):
    B = x_nchw.shape[0]
    xb = x_nchw.astype(jnp.bfloat16)
    # conv1 + tanh + pool1  ->  (B, 6, 25, 25)
    p1 = pooled_conv_patches(xb, 5, 5, 25, 5)            # (B, 4, 75, 625) bf16
    a1 = conv_pool(p1, prep["w1k"], prep["b1k"])         # (B, 6, 625)   bf16
    a1 = a1.reshape(B, 6, 25, 25)
    # conv2 + tanh + pool2 + flatten + FC stack + sigmoid, one kernel
    p2 = pooled_conv_patches(a1, 5, 5, 4, 5)             # (B, 4, 150, 16) bf16
    return tail(p2, prep)                                # (B, 1) f32


# ---------------------------------------------------------------------------
# Deterministic parameter init (PyTorch-like uniform(-1/sqrt(fan_in), ...))
# ---------------------------------------------------------------------------

def init_params(key):
    def uni(k, shape, fan_in):
        bound = 1.0 / np.sqrt(fan_in)
        return jax.random.uniform(k, shape, jnp.float32, -bound, bound)

    ks = jax.random.split(key, 10)
    return {
        "w1": uni(ks[0], (6, 3, 5, 5), 3 * 25),
        "b1": uni(ks[1], (6,), 3 * 25),
        "w2": uni(ks[2], (16, 6, 5, 5), 6 * 25),
        "b2": uni(ks[3], (16,), 6 * 25),
        "fw1": uni(ks[4], (120, 256), 256),
        "fb1": uni(ks[5], (120,), 256),
        "fw2": uni(ks[6], (84, 120), 120),
        "fb2": uni(ks[7], (84,), 120),
        "fw3": uni(ks[8], (1, 84), 84),
        "fb3": uni(ks[9], (1,), 84),
    }


# ---------------------------------------------------------------------------
# Plain-JAX reference (mirrors the PyTorch module, NCHW, f32)
# ---------------------------------------------------------------------------

def reference_forward(x, p):
    def conv(x, w, b):
        y = lax.conv_general_dilated(
            x, w, (1, 1), "VALID", dimension_numbers=("NCHW", "OIHW", "NCHW"))
        return y + b[None, :, None, None]

    def pool(x):
        s = lax.reduce_window(x, 0.0, lax.add, (1, 1, 2, 2), (1, 1, 5, 5), "VALID")
        return s * 0.25

    x = pool(jnp.tanh(conv(x, p["w1"], p["b1"])))
    x = pool(jnp.tanh(conv(x, p["w2"], p["b2"])))
    x = x.reshape(x.shape[0], -1)
    x = jnp.tanh(x @ p["fw1"].T + p["fb1"])
    x = jnp.tanh(x @ p["fw2"].T + p["fb2"])
    x = x @ p["fw3"].T + p["fb3"]
    return jax.nn.sigmoid(x)


if __name__ == "__main__":
    key = jax.random.PRNGKey(0)
    x_key, p_key = jax.random.split(key)

    # Input must be 3x128x128 so the flattened feature size is 16*4*4 = 256,
    # matching nn.Linear(in_features=256, out_features=120).
    x = jax.random.normal(x_key, (2, 3, 128, 128), jnp.float32)
    params = init_params(p_key)
    prep = prepare_params(params)        # hoisted weight prep, done once

    out = jax.jit(cnn_forward)(x, prep)
    out = jax.block_until_ready(out)
    assert out.shape == (2, 1), out.shape

    ref = jax.block_until_ready(reference_forward(x, params))
    max_err = float(jnp.max(jnp.abs(out - ref)))
    assert max_err < 2e-2, f"max abs err vs reference: {max_err}"

    print("KERNEL_OK")
</pallas_src>

<mosaic_0001>
module attributes {stable_mosaic.version = 11 : i64} {
  func.func @_conv_pool_kernel(%arg0: i32, %arg1: memref<1x4x75x625xbf16, #tpu.memory_space<vmem>>, %arg2: memref<6x75xbf16, #tpu.memory_space<vmem>>, %arg3: memref<6x1xf32, #tpu.memory_space<vmem>>, %arg4: memref<1x6x625xbf16, #tpu.memory_space<vmem>>) attributes {dimension_semantics = [#tpu.dimension_semantics<parallel>], iteration_bounds = array<i64: 2>, scalar_prefetch = 0 : i64, scratch_operands = 0 : i64, tpu.core_type = #tpu.core_type<tc>, window_params = [{transform_indices = @transform_0, window_bounds = array<i64: 1, 4, 75, 625>}, {pipeline_mode = #tpu.pipeline_mode<synchronous>, transform_indices = @transform_1, window_bounds = array<i64: 6, 75>}, {pipeline_mode = #tpu.pipeline_mode<synchronous>, transform_indices = @transform_2, window_bounds = array<i64: 6, 1>}, {transform_indices = @transform_3, window_bounds = array<i64: 1, 6, 625>}]} {
    %c0 = arith.constant 0 : index
    %c0_0 = arith.constant 0 : index
    %0 = vector.load %arg2[%c0, %c0_0] : memref<6x75xbf16, #tpu.memory_space<vmem>>, vector<6x75xbf16>
    %c0_1 = arith.constant 0 : index
    %c0_2 = arith.constant 0 : index
    %1 = vector.load %arg3[%c0_1, %c0_2] : memref<6x1xf32, #tpu.memory_space<vmem>>, vector<6x1xf32>
    %c0_3 = arith.constant 0 : index
    %c0_4 = arith.constant 0 : index
    %c0_5 = arith.constant 0 : index
    %c0_6 = arith.constant 0 : index
    %2 = vector.load %arg1[%c0_3, %c0_4, %c0_5, %c0_6] : memref<1x4x75x625xbf16, #tpu.memory_space<vmem>>, vector<1x1x75x625xbf16>
    %3 = vector.shape_cast %2 : vector<1x1x75x625xbf16> to vector<75x625xbf16>
    %cst = arith.constant dense<0.000000e+00> : vector<6x625xf32>
    %4 = tpu.matmul %0, %3, %cst {dimension_numbers = #tpu.dot_dimension_numbers<[1], [0], [0], [1], [0, 0, 1, 1], [], []>} : vector<6x75xbf16>, vector<75x625xbf16>, vector<6x625xf32> -> vector<6x625xf32>
    %5 = vector.broadcast %1 : vector<6x1xf32> to vector<6x625xf32>
    %6 = arith.addf %4, %5 : vector<6x625xf32>
    %7 = math.tanh %6 : vector<6x625xf32>
    %c0_7 = arith.constant 0 : index
    %c1 = arith.constant 1 : index
    %c0_8 = arith.constant 0 : index
    %c0_9 = arith.constant 0 : index
    %8 = vector.load %arg1[%c0_7, %c1, %c0_8, %c0_9] : memref<1x4x75x625xbf16, #tpu.memory_space<vmem>>, vector<1x1x75x625xbf16>
    %9 = vector.shape_cast %8 : vector<1x1x75x625xbf16> to vector<75x625xbf16>
    %cst_10 = arith.constant dense<0.000000e+00> : vector<6x625xf32>
    %10 = tpu.matmul %0, %9, %cst_10 {dimension_numbers = #tpu.dot_dimension_numbers<[1], [0], [0], [1], [0, 0, 1, 1], [], []>} : vector<6x75xbf16>, vector<75x625xbf16>, vector<6x625xf32> -> vector<6x625xf32>
    %11 = vector.broadcast %1 : vector<6x1xf32> to vector<6x625xf32>
    %12 = arith.addf %10, %11 : vector<6x625xf32>
    %13 = math.tanh %12 : vector<6x625xf32>
    %14 = arith.addf %7, %13 : vector<6x625xf32>
    %c0_11 = arith.constant 0 : index
    %c2 = arith.constant 2 : index
    %c0_12 = arith.constant 0 : index
    %c0_13 = arith.constant 0 : index
    %15 = vector.load %arg1[%c0_11, %c2, %c0_12, %c0_13] : memref<1x4x75x625xbf16, #tpu.memory_space<vmem>>, vector<1x1x75x625xbf16>
    %16 = vector.shape_cast %15 : vector<1x1x75x625xbf16> to vector<75x625xbf16>
    %cst_14 = arith.constant dense<0.000000e+00> : vector<6x625xf32>
    %17 = tpu.matmul %0, %16, %cst_14 {dimension_numbers = #tpu.dot_dimension_numbers<[1], [0], [0], [1], [0, 0, 1, 1], [], []>} : vector<6x75xbf16>, vector<75x625xbf16>, vector<6x625xf32> -> vector<6x625xf32>
    %18 = vector.broadcast %1 : vector<6x1xf32> to vector<6x625xf32>
    %19 = arith.addf %17, %18 : vector<6x625xf32>
    %20 = math.tanh %19 : vector<6x625xf32>
    %21 = arith.addf %14, %20 : vector<6x625xf32>
    %c0_15 = arith.constant 0 : index
    %c3 = arith.constant 3 : index
    %c0_16 = arith.constant 0 : index
    %c0_17 = arith.constant 0 : index
    %22 = vector.load %arg1[%c0_15, %c3, %c0_16, %c0_17] : memref<1x4x75x625xbf16, #tpu.memory_space<vmem>>, vector<1x1x75x625xbf16>
    %23 = vector.shape_cast %22 : vector<1x1x75x625xbf16> to vector<75x625xbf16>
    %cst_18 = arith.constant dense<0.000000e+00> : vector<6x625xf32>
    %24 = tpu.matmul %0, %23, %cst_18 {dimension_numbers = #tpu.dot_dimension_numbers<[1], [0], [0], [1], [0, 0, 1, 1], [], []>} : vector<6x75xbf16>, vector<75x625xbf16>, vector<6x625xf32> -> vector<6x625xf32>
    %25 = vector.broadcast %1 : vector<6x1xf32> to vector<6x625xf32>
    %26 = arith.addf %24, %25 : vector<6x625xf32>
    %27 = math.tanh %26 : vector<6x625xf32>
    %28 = arith.addf %21, %27 : vector<6x625xf32>
    %cst_19 = arith.constant 2.500000e-01 : f32
    %29 = vector.broadcast %cst_19 : f32 to vector<6x625xf32>
    %30 = arith.mulf %28, %29 : vector<6x625xf32>
    %31 = arith.truncf %30 : vector<6x625xf32> to vector<6x625xbf16>
    %c0_20 = arith.constant 0 : index
    %c0_21 = arith.constant 0 : index
    %c0_22 = arith.constant 0 : index
    %32 = vector.load %arg4[%c0_20, %c0_21, %c0_22] : memref<1x6x625xbf16, #tpu.memory_space<vmem>>, vector<1x6x625xbf16>
    %33 = vector.shape_cast %32 : vector<1x6x625xbf16> to vector<6x625xbf16>
    %34 = vector.shape_cast %31 : vector<6x625xbf16> to vector<1x6x625xbf16>
    tpu.vector_store %arg4[%c0_20, %c0_21, %c0_22], %34 {strides = array<i32>} : memref<1x6x625xbf16, #tpu.memory_space<vmem>>, vector<1x6x625xbf16>,
    return
  }
  func.func @transform_0(%arg0: i32) -> (i32, i32, i32, i32) {
    %c0_i32 = arith.constant 0 : i32
    %c0_i32_0 = arith.constant 0 : i32
    %c0_i32_1 = arith.constant 0 : i32
    %c0_i32_2 = arith.constant 0 : i32
    return %arg0, %c0_i32, %c0_i32_0, %c0_i32_1 : i32, i32, i32, i32
  }
  func.func @transform_1(%arg0: i32) -> (i32, i32) {
    %c0_i32 = arith.constant 0 : i32
    %c0_i32_0 = arith.constant 0 : i32
    %c0_i32_1 = arith.constant 0 : i32
    return %c0_i32, %c0_i32_0 : i32, i32
  }
  func.func @transform_2(%arg0: i32) -> (i32, i32) {
    %c0_i32 = arith.constant 0 : i32
    %c0_i32_0 = arith.constant 0 : i32
    %c0_i32_1 = arith.constant 0 : i32
    return %c0_i32, %c0_i32_0 : i32, i32
  }
  func.func @transform_3(%arg0: i32) -> (i32, i32, i32) {
    %c0_i32 = arith.constant 0 : i32
    %c0_i32_0 = arith.constant 0 : i32
    %c0_i32_1 = arith.constant 0 : i32
    return %arg0, %c0_i32, %c0_i32_0 : i32, i32, i32
  }
}

module attributes {stable_mosaic.version = 11 : i64} {
  func.func @_tail_kernel(%arg0: memref<2x4x150x16xbf16, #tpu.memory_space<vmem>>, %arg1: memref<16x150xbf16, #tpu.memory_space<vmem>>, %arg2: memref<16x1xf32, #tpu.memory_space<vmem>>, %arg3: memref<16x16x120xf32, #tpu.memory_space<vmem>>, %arg4: memref<1x120xf32, #tpu.memory_space<vmem>>, %arg5: memref<120x84xf32, #tpu.memory_space<vmem>>, %arg6: memref<1x84xf32, #tpu.memory_space<vmem>>, %arg7: memref<1x84xf32, #tpu.memory_space<vmem>>, %arg8: memref<1x1xf32, #tpu.memory_space<vmem>>, %arg9: memref<2x1xf32, #tpu.memory_space<vmem>>) attributes {dimension_semantics = [], scalar_prefetch = 0 : i64, scratch_operands = 0 : i64, tpu.core_type = #tpu.core_type<tc>} {
    %c0 = arith.constant 0 : index
    %c0_0 = arith.constant 0 : index
    %0 = vector.load %arg1[%c0, %c0_0] : memref<16x150xbf16, #tpu.memory_space<vmem>>, vector<16x150xbf16>
    %c0_1 = arith.constant 0 : index
    %c0_2 = arith.constant 0 : index
    %1 = vector.load %arg2[%c0_1, %c0_2] : memref<16x1xf32, #tpu.memory_space<vmem>>, vector<16x1xf32>
    %c0_3 = arith.constant 0 : index
    %c0_4 = arith.constant 0 : index
    %c0_5 = arith.constant 0 : index
    %c0_6 = arith.constant 0 : index
    %2 = vector.load %arg0[%c0_3, %c0_4, %c0_5, %c0_6] : memref<2x4x150x16xbf16, #tpu.memory_space<vmem>>, vector<1x1x150x16xbf16>
    %3 = vector.shape_cast %2 : vector<1x1x150x16xbf16> to vector<150x16xbf16>
    %cst = arith.constant dense<0.000000e+00> : vector<16x16xf32>
    %4 = tpu.matmul %0, %3, %cst {dimension_numbers = #tpu.dot_dimension_numbers<[1], [0], [0], [1], [0, 0, 1, 1], [], []>} : vector<16x150xbf16>, vector<150x16xbf16>, vector<16x16xf32> -> vector<16x16xf32>
    %5 = vector.broadcast %1 : vector<16x1xf32> to vector<16x16xf32>
    %6 = arith.addf %4, %5 : vector<16x16xf32>
    %7 = math.tanh %6 : vector<16x16xf32>
    %c0_7 = arith.constant 0 : index
    %c1 = arith.constant 1 : index
    %c0_8 = arith.constant 0 : index
    %c0_9 = arith.constant 0 : index
    %8 = vector.load %arg0[%c0_7, %c1, %c0_8, %c0_9] : memref<2x4x150x16xbf16, #tpu.memory_space<vmem>>, vector<1x1x150x16xbf16>
    %9 = vector.shape_cast %8 : vector<1x1x150x16xbf16> to vector<150x16xbf16>
    %cst_10 = arith.constant dense<0.000000e+00> : vector<16x16xf32>
    %10 = tpu.matmul %0, %9, %cst_10 {dimension_numbers = #tpu.dot_dimension_numbers<[1], [0], [0], [1], [0, 0, 1, 1], [], []>} : vector<16x150xbf16>, vector<150x16xbf16>, vector<16x16xf32> -> vector<16x16xf32>
    %11 = vector.broadcast %1 : vector<16x1xf32> to vector<16x16xf32>
    %12 = arith.addf %10, %11 : vector<16x16xf32>
    %13 = math.tanh %12 : vector<16x16xf32>
    %14 = arith.addf %7, %13 : vector<16x16xf32>
    %c0_11 = arith.constant 0 : index
    %c2 = arith.constant 2 : index
    %c0_12 = arith.constant 0 : index
    %c0_13 = arith.constant 0 : index
    %15 = vector.load %arg0[%c0_11, %c2, %c0_12, %c0_13] : memref<2x4x150x16xbf16, #tpu.memory_space<vmem>>, vector<1x1x150x16xbf16>
    %16 = vector.shape_cast %15 : vector<1x1x150x16xbf16> to vector<150x16xbf16>
    %cst_14 = arith.constant dense<0.000000e+00> : vector<16x16xf32>
    %17 = tpu.matmul %0, %16, %cst_14 {dimension_numbers = #tpu.dot_dimension_numbers<[1], [0], [0], [1], [0, 0, 1, 1], [], []>} : vector<16x150xbf16>, vector<150x16xbf16>, vector<16x16xf32> -> vector<16x16xf32>
    %18 = vector.broadcast %1 : vector<16x1xf32> to vector<16x16xf32>
    %19 = arith.addf %17, %18 : vector<16x16xf32>
    %20 = math.tanh %19 : vector<16x16xf32>
    %21 = arith.addf %14, %20 : vector<16x16xf32>
    %c0_15 = arith.constant 0 : index
    %c3 = arith.constant 3 : index
    %c0_16 = arith.constant 0 : index
    %c0_17 = arith.constant 0 : index
    %22 = vector.load %arg0[%c0_15, %c3, %c0_16, %c0_17] : memref<2x4x150x16xbf16, #tpu.memory_space<vmem>>, vector<1x1x150x16xbf16>
    %23 = vector.shape_cast %22 : vector<1x1x150x16xbf16> to vector<150x16xbf16>
    %cst_18 = arith.constant dense<0.000000e+00> : vector<16x16xf32>
    %24 = tpu.matmul %0, %23, %cst_18 {dimension_numbers = #tpu.dot_dimension_numbers<[1], [0], [0], [1], [0, 0, 1, 1], [], []>} : vector<16x150xbf16>, vector<150x16xbf16>, vector<16x16xf32> -> vector<16x16xf32>
    %25 = vector.broadcast %1 : vector<16x1xf32> to vector<16x16xf32>
    %26 = arith.addf %24, %25 : vector<16x16xf32>
    %27 = math.tanh %26 : vector<16x16xf32>
    %28 = arith.addf %21, %27 : vector<16x16xf32>
    %cst_19 = arith.constant 2.500000e-01 : f32
    %29 = vector.broadcast %cst_19 : f32 to vector<16x16xf32>
    %30 = arith.mulf %28, %29 : vector<16x16xf32>
    %31 = vector.extract_strided_slice %30 {offsets = [0, 0], sizes = [1, 16], strides = [1, 1]} : vector<16x16xf32> to vector<1x16xf32>
    %c0_20 = arith.constant 0 : index
    %c0_21 = arith.constant 0 : index
    %c0_22 = arith.constant 0 : index
    %32 = vector.load %arg3[%c0_20, %c0_21, %c0_22] : memref<16x16x120xf32, #tpu.memory_space<vmem>>, vector<1x16x120xf32>
    %33 = vector.shape_cast %32 : vector<1x16x120xf32> to vector<16x120xf32>
    %cst_23 = arith.constant dense<0.000000e+00> : vector<1x120xf32>
    %34 = tpu.matmul %31, %33, %cst_23 {dimension_numbers = #tpu.dot_dimension_numbers<[1], [0], [0], [1], [0, 0, 1, 1], [], []>} : vector<1x16xf32>, vector<16x120xf32>, vector<1x120xf32> -> vector<1x120xf32>
    %35 = vector.extract_strided_slice %30 {offsets = [1, 0], sizes = [1, 16], strides = [1, 1]} : vector<16x16xf32> to vector<1x16xf32>
    %c1_24 = arith.constant 1 : index
    %c0_25 = arith.constant 0 : index
    %c0_26 = arith.constant 0 : index
    %36 = vector.load %arg3[%c1_24, %c0_25, %c0_26] : memref<16x16x120xf32, #tpu.memory_space<vmem>>, vector<1x16x120xf32>
    %37 = vector.shape_cast %36 : vector<1x16x120xf32> to vector<16x120xf32>
    %cst_27 = arith.constant dense<0.000000e+00> : vector<1x120xf32>
    %38 = tpu.matmul %35, %37, %cst_27 {dimension_numbers = #tpu.dot_dimension_numbers<[1], [0], [0], [1], [0, 0, 1, 1], [], []>} : vector<1x16xf32>, vector<16x120xf32>, vector<1x120xf32> -> vector<1x120xf32>
    %39 = arith.addf %34, %38 : vector<1x120xf32>
    %40 = vector.extract_strided_slice %30 {offsets = [2, 0], sizes = [1, 16], strides = [1, 1]} : vector<16x16xf32> to vector<1x16xf32>
    %c2_28 = arith.constant 2 : index
    %c0_29 = arith.constant 0 : index
    %c0_30 = arith.constant 0 : index
    %41 = vector.load %arg3[%c2_28, %c0_29, %c0_30] : memref<16x16x120xf32, #tpu.memory_space<vmem>>, vector<1x16x120xf32>
    %42 = vector.shape_cast %41 : vector<1x16x120xf32> to vector<16x120xf32>
    %cst_31 = arith.constant dense<0.000000e+00> : vector<1x120xf32>
    %43 = tpu.matmul %40, %42, %cst_31 {dimension_numbers = #tpu.dot_dimension_numbers<[1], [0], [0], [1], [0, 0, 1, 1], [], []>} : vector<1x16xf32>, vector<16x120xf32>, vector<1x120xf32> -> vector<1x120xf32>
    %44 = arith.addf %39, %43 : vector<1x120xf32>
    %45 = vector.extract_strided_slice %30 {offsets = [3, 0], sizes = [1, 16], strides = [1, 1]} : vector<16x16xf32> to vector<1x16xf32>
    %c3_32 = arith.constant 3 : index
    %c0_33 = arith.constant 0 : index
    %c0_34 = arith.constant 0 : index
    %46 = vector.load %arg3[%c3_32, %c0_33, %c0_34] : memref<16x16x120xf32, #tpu.memory_space<vmem>>, vector<1x16x120xf32>
    %47 = vector.shape_cast %46 : vector<1x16x120xf32> to vector<16x120xf32>
    %cst_35 = arith.constant dense<0.000000e+00> : vector<1x120xf32>
    %48 = tpu.matmul %45, %47, %cst_35 {dimension_numbers = #tpu.dot_dimension_numbers<[1], [0], [0], [1], [0, 0, 1, 1], [], []>} : vector<1x16xf32>, vector<16x120xf32>, vector<1x120xf32> -> vector<1x120xf32>
    %49 = arith.addf %44, %48 : vector<1x120xf32>
    %50 = vector.extract_strided_slice %30 {offsets = [4, 0], sizes = [1, 16], strides = [1, 1]} : vector<16x16xf32> to vector<1x16xf32>
    %c4 = arith.constant 4 : index
    %c0_36 = arith.constant 0 : index
    %c0_37 = arith.constant 0 : index
    %51 = vector.load %arg3[%c4, %c0_36, %c0_37] : memref<16x16x120xf32, #tpu.memory_space<vmem>>, vector<1x16x120xf32>
    %52 = vector.shape_cast %51 : vector<1x16x120xf32> to vector<16x120xf32>
    %cst_38 = arith.constant dense<0.000000e+00> : vector<1x120xf32>
    %53 = tpu.matmul %50, %52, %cst_38 {dimension_numbers = #tpu.dot_dimension_numbers<[1], [0], [0], [1], [0, 0, 1, 1], [], []>} : vector<1x16xf32>, vector<16x120xf32>, vector<1x120xf32> -> vector<1x120xf32>
    %54 = arith.addf %49, %53 : vector<1x120xf32>
    %55 = vector.extract_strided_slice %30 {offsets = [5, 0], sizes = [1, 16], strides = [1, 1]} : vector<16x16xf32> to vector<1x16xf32>
    %c5 = arith.constant 5 : index
    %c0_39 = arith.constant 0 : index
    %c0_40 = arith.constant 0 : index
    %56 = vector.load %arg3[%c5, %c0_39, %c0_40] : memref<16x16x120xf32, #tpu.memory_space<vmem>>, vector<1x16x120xf32>
    %57 = vector.shape_cast %56 : vector<1x16x120xf32> to vector<16x120xf32>
    %cst_41 = arith.constant dense<0.000000e+00> : vector<1x120xf32>
    %58 = tpu.matmul %55, %57, %cst_41 {dimension_numbers = #tpu.dot_dimension_numbers<[1], [0], [0], [1], [0, 0, 1, 1], [], []>} : vector<1x16xf32>, vector<16x120xf32>, vector<1x120xf32> -> vector<1x120xf32>
    %59 = arith.addf %54, %58 : vector<1x120xf32>
    %60 = vector.extract_strided_slice %30 {offsets = [6, 0], sizes = [1, 16], strides = [1, 1]} : vector<16x16xf32> to vector<1x16xf32>
    %c6 = arith.constant 6 : index
    %c0_42 = arith.constant 0 : index
    %c0_43 = arith.constant 0 : index
    %61 = vector.load %arg3[%c6, %c0_42, %c0_43] : memref<16x16x120xf32, #tpu.memory_space<vmem>>, vector<1x16x120xf32>
    %62 = vector.shape_cast %61 : vector<1x16x120xf32> to vector<16x120xf32>
    %cst_44 = arith.constant dense<0.000000e+00> : vector<1x120xf32>
    %63 = tpu.matmul %60, %62, %cst_44 {dimension_numbers = #tpu.dot_dimension_numbers<[1], [0], [0], [1], [0, 0, 1, 1], [], []>} : vector<1x16xf32>, vector<16x120xf32>, vector<1x120xf32> -> vector<1x120xf32>
    %64 = arith.addf %59, %63 : vector<1x120xf32>
    %65 = vector.extract_strided_slice %30 {offsets = [7, 0], sizes = [1, 16], strides = [1, 1]} : vector<16x16xf32> to vector<1x16xf32>
    %c7 = arith.constant 7 : index
    %c0_45 = arith.constant 0 : index
    %c0_46 = arith.constant 0 : index
    %66 = vector.load %arg3[%c7, %c0_45, %c0_46] : memref<16x16x120xf32, #tpu.memory_space<vmem>>, vector<1x16x120xf32>
    %67 = vector.shape_cast %66 : vector<1x16x120xf32> to vector<16x120xf32>
    %cst_47 = arith.constant dense<0.000000e+00> : vector<1x120xf32>
    %68 = tpu.matmul %65, %67, %cst_47 {dimension_numbers = #tpu.dot_dimension_numbers<[1], [0], [0], [1], [0, 0, 1, 1], [], []>} : vector<1x16xf32>, vector<16x120xf32>, vector<1x120xf32> -> vector<1x120xf32>
    %69 = arith.addf %64, %68 : vector<1x120xf32>
    %70 = vector.extract_strided_slice %30 {offsets = [8, 0], sizes = [1, 16], strides = [1, 1]} : vector<16x16xf32> to vector<1x16xf32>
    %c8 = arith.constant 8 : index
    %c0_48 = arith.constant 0 : index
    %c0_49 = arith.constant 0 : index
    %71 = vector.load %arg3[%c8, %c0_48, %c0_49] : memref<16x16x120xf32, #tpu.memory_space<vmem>>, vector<1x16x120xf32>
    %72 = vector.shape_cast %71 : vector<1x16x120xf32> to vector<16x120xf32>
    %cst_50 = arith.constant dense<0.000000e+00> : vector<1x120xf32>
    %73 = tpu.matmul %70, %72, %cst_50 {dimension_numbers = #tpu.dot_dimension_numbers<[1], [0], [0], [1], [0, 0, 1, 1], [], []>} : vector<1x16xf32>, vector<16x120xf32>, vector<1x120xf32> -> vector<1x120xf32>
    %74 = arith.addf %69, %73 : vector<1x120xf32>
    %75 = vector.extract_strided_slice %30 {offsets = [9, 0], sizes = [1, 16], strides = [1, 1]} : vector<16x16xf32> to vector<1x16xf32>
    %c9 = arith.constant 9 : index
    %c0_51 = arith.constant 0 : index
    %c0_52 = arith.constant 0 : index
    %76 = vector.load %arg3[%c9, %c0_51, %c0_52] : memref<16x16x120xf32, #tpu.memory_space<vmem>>, vector<1x16x120xf32>
    %77 = vector.shape_cast %76 : vector<1x16x120xf32> to vector<16x120xf32>
    %cst_53 = arith.constant dense<0.000000e+00> : vector<1x120xf32>
    %78 = tpu.matmul %75, %77, %cst_53 {dimension_numbers = #tpu.dot_dimension_numbers<[1], [0], [0], [1], [0, 0, 1, 1], [], []>} : vector<1x16xf32>, vector<16x120xf32>, vector<1x120xf32> -> vector<1x120xf32>
    %79 = arith.addf %74, %78 : vector<1x120xf32>
    %80 = vector.extract_strided_slice %30 {offsets = [10, 0], sizes = [1, 16], strides = [1, 1]} : vector<16x16xf32> to vector<1x16xf32>
    %c10 = arith.constant 10 : index
    %c0_54 = arith.constant 0 : index
    %c0_55 = arith.constant 0 : index
    %81 = vector.load %arg3[%c10, %c0_54, %c0_55] : memref<16x16x120xf32, #tpu.memory_space<vmem>>, vector<1x16x120xf32>
    %82 = vector.shape_cast %81 : vector<1x16x120xf32> to vector<16x120xf32>
    %cst_56 = arith.constant dense<0.000000e+00> : vector<1x120xf32>
    %83 = tpu.matmul %80, %82, %cst_56 {dimension_numbers = #tpu.dot_dimension_numbers<[1], [0], [0], [1], [0, 0, 1, 1], [], []>} : vector<1x16xf32>, vector<16x120xf32>, vector<1x120xf32> -> vector<1x120xf32>
    %84 = arith.addf %79, %83 : vector<1x120xf32>
    %85 = vector.extract_strided_slice %30 {offsets = [11, 0], sizes = [1, 16], strides = [1, 1]} : vector<16x16xf32> to vector<1x16xf32>
    %c11 = arith.constant 11 : index
    %c0_57 = arith.constant 0 : index
    %c0_58 = arith.constant 0 : index
    %86 = vector.load %arg3[%c11, %c0_57, %c0_58] : memref<16x16x120xf32, #tpu.memory_space<vmem>>, vector<1x16x120xf32>
    %87 = vector.shape_cast %86 : vector<1x16x120xf32> to vector<16x120xf32>
    %cst_59 = arith.constant dense<0.000000e+00> : vector<1x120xf32>
    %88 = tpu.matmul %85, %87, %cst_59 {dimension_numbers = #tpu.dot_dimension_numbers<[1], [0], [0], [1], [0, 0, 1, 1], [], []>} : vector<1x16xf32>, vector<16x120xf32>, vector<1x120xf32> -> vector<1x120xf32>
    %89 = arith.addf %84, %88 : vector<1x120xf32>
    %90 = vector.extract_strided_slice %30 {offsets = [12, 0], sizes = [1, 16], strides = [1, 1]} : vector<16x16xf32> to vector<1x16xf32>
    %c12 = arith.constant 12 : index
    %c0_60 = arith.constant 0 : index
    %c0_61 = arith.constant 0 : index
    %91 = vector.load %arg3[%c12, %c0_60, %c0_61] : memref<16x16x120xf32, #tpu.memory_space<vmem>>, vector<1x16x120xf32>
    %92 = vector.shape_cast %91 : vector<1x16x120xf32> to vector<16x120xf32>
    %cst_62 = arith.constant dense<0.000000e+00> : vector<1x120xf32>
    %93 = tpu.matmul %90, %92, %cst_62 {dimension_numbers = #tpu.dot_dimension_numbers<[1], [0], [0], [1], [0, 0, 1, 1], [], []>} : vector<1x16xf32>, vector<16x120xf32>, vector<1x120xf32> -> vector<1x120xf32>
    %94 = arith.addf %89, %93 : vector<1x120xf32>
    %95 = vector.extract_strided_slice %30 {offsets = [13, 0], sizes = [1, 16], strides = [1, 1]} : vector<16x16xf32> to vector<1x16xf32>
    %c13 = arith.constant 13 : index
    %c0_63 = arith.constant 0 : index
    %c0_64 = arith.constant 0 : index
    %96 = vector.load %arg3[%c13, %c0_63, %c0_64] : memref<16x16x120xf32, #tpu.memory_space<vmem>>, vector<1x16x120xf32>
    %97 = vector.shape_cast %96 : vector<1x16x120xf32> to vector<16x120xf32>
    %cst_65 = arith.constant dense<0.000000e+00> : vector<1x120xf32>
    %98 = tpu.matmul %95, %97, %cst_65 {dimension_numbers = #tpu.dot_dimension_numbers<[1], [0], [0], [1], [0, 0, 1, 1], [], []>} : vector<1x16xf32>, vector<16x120xf32>, vector<1x120xf32> -> vector<1x120xf32>
    %99 = arith.addf %94, %98 : vector<1x120xf32>
    %100 = vector.extract_strided_slice %30 {offsets = [14, 0], sizes = [1, 16], strides = [1, 1]} : vector<16x16xf32> to vector<1x16xf32>
    %c14 = arith.constant 14 : index
    %c0_66 = arith.constant 0 : index
    %c0_67 = arith.constant 0 : index
    %101 = vector.load %arg3[%c14, %c0_66, %c0_67] : memref<16x16x120xf32, #tpu.memory_space<vmem>>, vector<1x16x120xf32>
    %102 = vector.shape_cast %101 : vector<1x16x120xf32> to vector<16x120xf32>
    %cst_68 = arith.constant dense<0.000000e+00> : vector<1x120xf32>
    %103 = tpu.matmul %100, %102, %cst_68 {dimension_numbers = #tpu.dot_dimension_numbers<[1], [0], [0], [1], [0, 0, 1, 1], [], []>} : vector<1x16xf32>, vector<16x120xf32>, vector<1x120xf32> -> vector<1x120xf32>
    %104 = arith.addf %99, %103 : vector<1x120xf32>
    %105 = vector.extract_strided_slice %30 {offsets = [15, 0], sizes = [1, 16], strides = [1, 1]} : vector<16x16xf32> to vector<1x16xf32>
    %c15 = arith.constant 15 : index
    %c0_69 = arith.constant 0 : index
    %c0_70 = arith.constant 0 : index
    %106 = vector.load %arg3[%c15, %c0_69, %c0_70] : memref<16x16x120xf32, #tpu.memory_space<vmem>>, vector<1x16x120xf32>
    %107 = vector.shape_cast %106 : vector<1x16x120xf32> to vector<16x120xf32>
    %cst_71 = arith.constant dense<0.000000e+00> : vector<1x120xf32>
    %108 = tpu.matmul %105, %107, %cst_71 {dimension_numbers = #tpu.dot_dimension_numbers<[1], [0], [0], [1], [0, 0, 1, 1], [], []>} : vector<1x16xf32>, vector<16x120xf32>, vector<1x120xf32> -> vector<1x120xf32>
    %109 = arith.addf %104, %108 : vector<1x120xf32>
    %c0_72 = arith.constant 0 : index
    %c0_73 = arith.constant 0 : index
    %110 = vector.load %arg4[%c0_72, %c0_73] : memref<1x120xf32, #tpu.memory_space<vmem>>, vector<1x120xf32>
    %111 = arith.addf %109, %110 : vector<1x120xf32>
    %112 = math.tanh %111 : vector<1x120xf32>
    %c0_74 = arith.constant 0 : index
    %c0_75 = arith.constant 0 : index
    %113 = vector.load %arg5[%c0_74, %c0_75] : memref<120x84xf32, #tpu.memory_space<vmem>>, vector<120x84xf32>
    %cst_76 = arith.constant dense<0.000000e+00> : vector<1x84xf32>
    %114 = tpu.matmul %112, %113, %cst_76 {dimension_numbers = #tpu.dot_dimension_numbers<[1], [0], [0], [1], [0, 0, 1, 1], [], []>} : vector<1x120xf32>, vector<120x84xf32>, vector<1x84xf32> -> vector<1x84xf32>
    %c0_77 = arith.constant 0 : index
    %c0_78 = arith.constant 0 : index
    %115 = vector.load %arg6[%c0_77, %c0_78] : memref<1x84xf32, #tpu.memory_space<vmem>>, vector<1x84xf32>
    %116 = arith.addf %114, %115 : vector<1x84xf32>
    %117 = math.tanh %116 : vector<1x84xf32>
    %c0_79 = arith.constant 0 : index
    %c0_80 = arith.constant 0 : index
    %118 = vector.load %arg7[%c0_79, %c0_80] : memref<1x84xf32, #tpu.memory_space<vmem>>, vector<1x84xf32>
    %119 = arith.mulf %117, %118 : vector<1x84xf32>
    %cst_81 = arith.constant dense<0.000000e+00> : vector<1xf32>
    %120 = vector.multi_reduction <add>, %119, %cst_81 [1] : vector<1x84xf32> to vector<1xf32>
    %121 = vector.shape_cast %120 : vector<1xf32> to vector<1x1xf32>
    %c0_82 = arith.constant 0 : index
    %c0_83 = arith.constant 0 : index
    %122 = vector.load %arg8[%c0_82, %c0_83] : memref<1x1xf32, #tpu.memory_space<vmem>>, vector<1x1xf32>
    %123 = arith.addf %121, %122 : vector<1x1xf32>
    %cst_84 = arith.constant 0.000000e+00 : f32
    %124 = vector.broadcast %cst_84 : f32 to vector<1x1xf32>
    %125 = arith.subf %124, %123 : vector<1x1xf32>
    %126 = math.exp %125 : vector<1x1xf32>
    %cst_85 = arith.constant 1.000000e+00 : f32
    %127 = vector.broadcast %cst_85 : f32 to vector<1x1xf32>
    %128 = arith.addf %127, %126 : vector<1x1xf32>
    %cst_86 = arith.constant 1.000000e+00 : f32
    %129 = vector.broadcast %cst_86 : f32 to vector<1x1xf32>
    %130 = arith.divf %129, %128 : vector<1x1xf32>
    %c1_87 = arith.constant 1 : index
    %c0_88 = arith.constant 0 : index
    %c0_89 = arith.constant 0 : index
    %c0_90 = arith.constant 0 : index
    %131 = vector.load %arg0[%c1_87, %c0_88, %c0_89, %c0_90] : memref<2x4x150x16xbf16, #tpu.memory_space<vmem>>, vector<1x1x150x16xbf16>
    %132 = vector.shape_cast %131 : vector<1x1x150x16xbf16> to vector<150x16xbf16>
    %cst_91 = arith.constant dense<0.000000e+00> : vector<16x16xf32>
    %133 = tpu.matmul %0, %132, %cst_91 {dimension_numbers = #tpu.dot_dimension_numbers<[1], [0], [0], [1], [0, 0, 1, 1], [], []>} : vector<16x150xbf16>, vector<150x16xbf16>, vector<16x16xf32> -> vector<16x16xf32>
    %134 = vector.broadcast %1 : vector<16x1xf32> to vector<16x16xf32>
    %135 = arith.addf %133, %134 : vector<16x16xf32>
    %136 = math.tanh %135 : vector<16x16xf32>
    %c1_92 = arith.constant 1 : index
    %c1_93 = arith.constant 1 : index
    %c0_94 = arith.constant 0 : index
    %c0_95 = arith.constant 0 : index
    %137 = vector.load %arg0[%c1_92, %c1_93, %c0_94, %c0_95] : memref<2x4x150x16xbf16, #tpu.memory_space<vmem>>, vector<1x1x150x16xbf16>
    %138 = vector.shape_cast %137 : vector<1x1x150x16xbf16> to vector<150x16xbf16>
    %cst_96 = arith.constant dense<0.000000e+00> : vector<16x16xf32>
    %139 = tpu.matmul %0, %138, %cst_96 {dimension_numbers = #tpu.dot_dimension_numbers<[1], [0], [0], [1], [0, 0, 1, 1], [], []>} : vector<16x150xbf16>, vector<150x16xbf16>, vector<16x16xf32> -> vector<16x16xf32>
    %140 = vector.broadcast %1 : vector<16x1xf32> to vector<16x16xf32>
    %141 = arith.addf %139, %140 : vector<16x16xf32>
    %142 = math.tanh %141 : vector<16x16xf32>
    %143 = arith.addf %136, %142 : vector<16x16xf32>
    %c1_97 = arith.constant 1 : index
    %c2_98 = arith.constant 2 : index
    %c0_99 = arith.constant 0 : index
    %c0_100 = arith.constant 0 : index
    %144 = vector.load %arg0[%c1_97, %c2_98, %c0_99, %c0_100] : memref<2x4x150x16xbf16, #tpu.memory_space<vmem>>, vector<1x1x150x16xbf16>
    %145 = vector.shape_cast %144 : vector<1x1x150x16xbf16> to vector<150x16xbf16>
    %cst_101 = arith.constant dense<0.000000e+00> : vector<16x16xf32>
    %146 = tpu.matmul %0, %145, %cst_101 {dimension_numbers = #tpu.dot_dimension_numbers<[1], [0], [0], [1], [0, 0, 1, 1], [], []>} : vector<16x150xbf16>, vector<150x16xbf16>, vector<16x16xf32> -> vector<16x16xf32>
    %147 = vector.broadcast %1 : vector<16x1xf32> to vector<16x16xf32>
    %148 = arith.addf %146, %147 : vector<16x16xf32>
    %149 = math.tanh %148 : vector<16x16xf32>
    %150 = arith.addf %143, %149 : vector<16x16xf32>
    %c1_102 = arith.constant 1 : index
    %c3_103 = arith.constant 3 : index
    %c0_104 = arith.constant 0 : index
    %c0_105 = arith.constant 0 : index
    %151 = vector.load %arg0[%c1_102, %c3_103, %c0_104, %c0_105] : memref<2x4x150x16xbf16, #tpu.memory_space<vmem>>, vector<1x1x150x16xbf16>
    %152 = vector.shape_cast %151 : vector<1x1x150x16xbf16> to vector<150x16xbf16>
    %cst_106 = arith.constant dense<0.000000e+00> : vector<16x16xf32>
    %153 = tpu.matmul %0, %152, %cst_106 {dimension_numbers = #tpu.dot_dimension_numbers<[1], [0], [0], [1], [0, 0, 1, 1], [], []>} : vector<16x150xbf16>, vector<150x16xbf16>, vector<16x16xf32> -> vector<16x16xf32>
    %154 = vector.broadcast %1 : vector<16x1xf32> to vector<16x16xf32>
    %155 = arith.addf %153, %154 : vector<16x16xf32>
    %156 = math.tanh %155 : vector<16x16xf32>
    %157 = arith.addf %150, %156 : vector<16x16xf32>
    %cst_107 = arith.constant 2.500000e-01 : f32
    %158 = vector.broadcast %cst_107 : f32 to vector<16x16xf32>
    %159 = arith.mulf %157, %158 : vector<16x16xf32>
    %160 = vector.extract_strided_slice %159 {offsets = [0, 0], sizes = [1, 16], strides = [1, 1]} : vector<16x16xf32> to vector<1x16xf32>
    %c0_108 = arith.constant 0 : index
    %c0_109 = arith.constant 0 : index
    %c0_110 = arith.constant 0 : index
    %161 = vector.load %arg3[%c0_108, %c0_109, %c0_110] : memref<16x16x120xf32, #tpu.memory_space<vmem>>, vector<1x16x120xf32>
    %162 = vector.shape_cast %161 : vector<1x16x120xf32> to vector<16x120xf32>
    %cst_111 = arith.constant dense<0.000000e+00> : vector<1x120xf32>
    %163 = tpu.matmul %160, %162, %cst_111 {dimension_numbers = #tpu.dot_dimension_numbers<[1], [0], [0], [1], [0, 0, 1, 1], [], []>} : vector<1x16xf32>, vector<16x120xf32>, vector<1x120xf32> -> vector<1x120xf32>
    %164 = vector.extract_strided_slice %159 {offsets = [1, 0], sizes = [1, 16], strides = [1, 1]} : vector<16x16xf32> to vector<1x16xf32>
    %c1_112 = arith.constant 1 : index
    %c0_113 = arith.constant 0 : index
    %c0_114 = arith.constant 0 : index
    %165 = vector.load %arg3[%c1_112, %c0_113, %c0_114] : memref<16x16x120xf32, #tpu.memory_space<vmem>>, vector<1x16x120xf32>
    %166 = vector.shape_cast %165 : vector<1x16x120xf32> to vector<16x120xf32>
    %cst_115 = arith.constant dense<0.000000e+00> : vector<1x120xf32>
    %167 = tpu.matmul %164, %166, %cst_115 {dimension_numbers = #tpu.dot_dimension_numbers<[1], [0], [0], [1], [0, 0, 1, 1], [], []>} : vector<1x16xf32>, vector<16x120xf32>, vector<1x120xf32> -> vector<1x120xf32>
    %168 = arith.addf %163, %167 : vector<1x120xf32>
    %169 = vector.extract_strided_slice %159 {offsets = [2, 0], sizes = [1, 16], strides = [1, 1]} : vector<16x16xf32> to vector<1x16xf32>
    %c2_116 = arith.constant 2 : index
    %c0_117 = arith.constant 0 : index
    %c0_118 = arith.constant 0 : index
    %170 = vector.load %arg3[%c2_116, %c0_117, %c0_118] : memref<16x16x120xf32, #tpu.memory_space<vmem>>, vector<1x16x120xf32>
    %171 = vector.shape_cast %170 : vector<1x16x120xf32> to vector<16x120xf32>
    %cst_119 = arith.constant dense<0.000000e+00> : vector<1x120xf32>
    %172 = tpu.matmul %169, %171, %cst_119 {dimension_numbers = #tpu.dot_dimension_numbers<[1], [0], [0], [1], [0, 0, 1, 1], [], []>} : vector<1x16xf32>, vector<16x120xf32>, vector<1x120xf32> -> vector<1x120xf32>
    %173 = arith.addf %168, %172 : vector<1x120xf32>
    %174 = vector.extract_strided_slice %159 {offsets = [3, 0], sizes = [1, 16], strides = [1, 1]} : vector<16x16xf32> to vector<1x16xf32>
    %c3_120 = arith.constant 3 : index
    %c0_121 = arith.constant 0 : index
    %c0_122 = arith.constant 0 : index
    %175 = vector.load %arg3[%c3_120, %c0_121, %c0_122] : memref<16x16x120xf32, #tpu.memory_space<vmem>>, vector<1x16x120xf32>
    %176 = vector.shape_cast %175 : vector<1x16x120xf32> to vector<16x120xf32>
    %cst_123 = arith.constant dense<0.000000e+00> : vector<1x120xf32>
    %177 = tpu.matmul %174, %176, %cst_123 {dimension_numbers = #tpu.dot_dimension_numbers<[1], [0], [0], [1], [0, 0, 1, 1], [], []>} : vector<1x16xf32>, vector<16x120xf32>, vector<1x120xf32> -> vector<1x120xf32>
    %178 = arith.addf %173, %177 : vector<1x120xf32>
    %179 = vector.extract_strided_slice %159 {offsets = [4, 0], sizes = [1, 16], strides = [1, 1]} : vector<16x16xf32> to vector<1x16xf32>
    %c4_124 = arith.constant 4 : index
    %c0_125 = arith.constant 0 : index
    %c0_126 = arith.constant 0 : index
    %180 = vector.load %arg3[%c4_124, %c0_125, %c0_126] : memref<16x16x120xf32, #tpu.memory_space<vmem>>, vector<1x16x120xf32>
    %181 = vector.shape_cast %180 : vector<1x16x120xf32> to vector<16x120xf32>
    %cst_127 = arith.constant dense<0.000000e+00> : vector<1x120xf32>
    %182 = tpu.matmul %179, %181, %cst_127 {dimension_numbers = #tpu.dot_dimension_numbers<[1], [0], [0], [1], [0, 0, 1, 1], [], []>} : vector<1x16xf32>, vector<16x120xf32>, vector<1x120xf32> -> vector<1x120xf32>
    %183 = arith.addf %178, %182 : vector<1x120xf32>
    %184 = vector.extract_strided_slice %159 {offsets = [5, 0], sizes = [1, 16], strides = [1, 1]} : vector<16x16xf32> to vector<1x16xf32>
    %c5_128 = arith.constant 5 : index
    %c0_129 = arith.constant 0 : index
    %c0_130 = arith.constant 0 : index
    %185 = vector.load %arg3[%c5_128, %c0_129, %c0_130] : memref<16x16x120xf32, #tpu.memory_space<vmem>>, vector<1x16x120xf32>
    %186 = vector.shape_cast %185 : vector<1x16x120xf32> to vector<16x120xf32>
    %cst_131 = arith.constant dense<0.000000e+00> : vector<1x120xf32>
    %187 = tpu.matmul %184, %186, %cst_131 {dimension_numbers = #tpu.dot_dimension_numbers<[1], [0], [0], [1], [0, 0, 1, 1], [], []>} : vector<1x16xf32>, vector<16x120xf32>, vector<1x120xf32> -> vector<1x120xf32>
    %188 = arith.addf %183, %187 : vector<1x120xf32>
    %189 = vector.extract_strided_slice %159 {offsets = [6, 0], sizes = [1, 16], strides = [1, 1]} : vector<16x16xf32> to vector<1x16xf32>
    %c6_132 = arith.constant 6 : index
    %c0_133 = arith.constant 0 : index
    %c0_134 = arith.constant 0 : index
    %190 = vector.load %arg3[%c6_132, %c0_133, %c0_134] : memref<16x16x120xf32, #tpu.memory_space<vmem>>, vector<1x16x120xf32>
    %191 = vector.shape_cast %190 : vector<1x16x120xf32> to vector<16x120xf32>
    %cst_135 = arith.constant dense<0.000000e+00> : vector<1x120xf32>
    %192 = tpu.matmul %189, %191, %cst_135 {dimension_numbers = #tpu.dot_dimension_numbers<[1], [0], [0], [1], [0, 0, 1, 1], [], []>} : vector<1x16xf32>, vector<16x120xf32>, vector<1x120xf32> -> vector<1x120xf32>
    %193 = arith.addf %188, %192 : vector<1x120xf32>
    %194 = vector.extract_strided_slice %159 {offsets = [7, 0], sizes = [1, 16], strides = [1, 1]} : vector<16x16xf32> to vector<1x16xf32>
    %c7_136 = arith.constant 7 : index
    %c0_137 = arith.constant 0 : index
    %c0_138 = arith.constant 0 : index
    %195 = vector.load %arg3[%c7_136, %c0_137, %c0_138] : memref<16x16x120xf32, #tpu.memory_space<vmem>>, vector<1x16x120xf32>
    %196 = vector.shape_cast %195 : vector<1x16x120xf32> to vector<16x120xf32>
    %cst_139 = arith.constant dense<0.000000e+00> : vector<1x120xf32>
    %197 = tpu.matmul %194, %196, %cst_139 {dimension_numbers = #tpu.dot_dimension_numbers<[1], [0], [0], [1], [0, 0, 1, 1], [], []>} : vector<1x16xf32>, vector<16x120xf32>, vector<1x120xf32> -> vector<1x120xf32>
    %198 = arith.addf %193, %197 : vector<1x120xf32>
    %199 = vector.extract_strided_slice %159 {offsets = [8, 0], sizes = [1, 16], strides = [1, 1]} : vector<16x16xf32> to vector<1x16xf32>
    %c8_140 = arith.constant 8 : index
    %c0_141 = arith.constant 0 : index
    %c0_142 = arith.constant 0 : index
    %200 = vector.load %arg3[%c8_140, %c0_141, %c0_142] : memref<16x16x120xf32, #tpu.memory_space<vmem>>, vector<1x16x120xf32>
    %201 = vector.shape_cast %200 : vector<1x16x120xf32> to vector<16x120xf32>
    %cst_143 = arith.constant dense<0.000000e+00> : vector<1x120xf32>
    %202 = tpu.matmul %199, %201, %cst_143 {dimension_numbers = #tpu.dot_dimension_numbers<[1], [0], [0], [1], [0, 0, 1, 1], [], []>} : vector<1x16xf32>, vector<16x120xf32>, vector<1x120xf32> -> vector<1x120xf32>
    %203 = arith.addf %198, %202 : vector<1x120xf32>
    %204 = vector.extract_strided_slice %159 {offsets = [9, 0], sizes = [1, 16], strides = [1, 1]} : vector<16x16xf32> to vector<1x16xf32>
    %c9_144 = arith.constant 9 : index
    %c0_145 = arith.constant 0 : index
    %c0_146 = arith.constant 0 : index
    %205 = vector.load %arg3[%c9_144, %c0_145, %c0_146] : memref<16x16x120xf32, #tpu.memory_space<vmem>>, vector<1x16x120xf32>
    %206 = vector.shape_cast %205 : vector<1x16x120xf32> to vector<16x120xf32>
    %cst_147 = arith.constant dense<0.000000e+00> : vector<1x120xf32>
    %207 = tpu.matmul %204, %206, %cst_147 {dimension_numbers = #tpu.dot_dimension_numbers<[1], [0], [0], [1], [0, 0, 1, 1], [], []>} : vector<1x16xf32>, vector<16x120xf32>, vector<1x120xf32> -> vector<1x120xf32>
    %208 = arith.addf %203, %207 : vector<1x120xf32>
    %209 = vector.extract_strided_slice %159 {offsets = [10, 0], sizes = [1, 16], strides = [1, 1]} : vector<16x16xf32> to vector<1x16xf32>
    %c10_148 = arith.constant 10 : index
    %c0_149 = arith.constant 0 : index
    %c0_150 = arith.constant 0 : index
    %210 = vector.load %arg3[%c10_148, %c0_149, %c0_150] : memref<16x16x120xf32, #tpu.memory_space<vmem>>, vector<1x16x120xf32>
    %211 = vector.shape_cast %210 : vector<1x16x120xf32> to vector<16x120xf32>
    %cst_151 = arith.constant dense<0.000000e+00> : vector<1x120xf32>
    %212 = tpu.matmul %209, %211, %cst_151 {dimension_numbers = #tpu.dot_dimension_numbers<[1], [0], [0], [1], [0, 0, 1, 1], [], []>} : vector<1x16xf32>, vector<16x120xf32>, vector<1x120xf32> -> vector<1x120xf32>
    %213 = arith.addf %208, %212 : vector<1x120xf32>
    %214 = vector.extract_strided_slice %159 {offsets = [11, 0], sizes = [1, 16], strides = [1, 1]} : vector<16x16xf32> to vector<1x16xf32>
    %c11_152 = arith.constant 11 : index
    %c0_153 = arith.constant 0 : index
    %c0_154 = arith.constant 0 : index
    %215 = vector.load %arg3[%c11_152, %c0_153, %c0_154] : memref<16x16x120xf32, #tpu.memory_space<vmem>>, vector<1x16x120xf32>
    %216 = vector.shape_cast %215 : vector<1x16x120xf32> to vector<16x120xf32>
    %cst_155 = arith.constant dense<0.000000e+00> : vector<1x120xf32>
    %217 = tpu.matmul %214, %216, %cst_155 {dimension_numbers = #tpu.dot_dimension_numbers<[1], [0], [0], [1], [0, 0, 1, 1], [], []>} : vector<1x16xf32>, vector<16x120xf32>, vector<1x120xf32> -> vector<1x120xf32>
    %218 = arith.addf %213, %217 : vector<1x120xf32>
    %219 = vector.extract_strided_slice %159 {offsets = [12, 0], sizes = [1, 16], strides = [1, 1]} : vector<16x16xf32> to vector<1x16xf32>
    %c12_156 = arith.constant 12 : index
    %c0_157 = arith.constant 0 : index
    %c0_158 = arith.constant 0 : index
    %220 = vector.load %arg3[%c12_156, %c0_157, %c0_158] : memref<16x16x120xf32, #tpu.memory_space<vmem>>, vector<1x16x120xf32>
    %221 = vector.shape_cast %220 : vector<1x16x120xf32> to vector<16x120xf32>
    %cst_159 = arith.constant dense<0.000000e+00> : vector<1x120xf32>
    %222 = tpu.matmul %219, %221, %cst_159 {dimension_numbers = #tpu.dot_dimension_numbers<[1], [0], [0], [1], [0, 0, 1, 1], [], []>} : vector<1x16xf32>, vector<16x120xf32>, vector<1x120xf32> -> vector<1x120xf32>
    %223 = arith.addf %218, %222 : vector<1x120xf32>
    %224 = vector.extract_strided_slice %159 {offsets = [13, 0], sizes = [1, 16], strides = [1, 1]} : vector<16x16xf32> to vector<1x16xf32>
    %c13_160 = arith.constant 13 : index
    %c0_161 = arith.constant 0 : index
    %c0_162 = arith.constant 0 : index
    %225 = vector.load %arg3[%c13_160, %c0_161, %c0_162] : memref<16x16x120xf32, #tpu.memory_space<vmem>>, vector<1x16x120xf32>
    %226 = vector.shape_cast %225 : vector<1x16x120xf32> to vector<16x120xf32>
    %cst_163 = arith.constant dense<0.000000e+00> : vector<1x120xf32>
    %227 = tpu.matmul %224, %226, %cst_163 {dimension_numbers = #tpu.dot_dimension_numbers<[1], [0], [0], [1], [0, 0, 1, 1], [], []>} : vector<1x16xf32>, vector<16x120xf32>, vector<1x120xf32> -> vector<1x120xf32>
    %228 = arith.addf %223, %227 : vector<1x120xf32>
    %229 = vector.extract_strided_slice %159 {offsets = [14, 0], sizes = [1, 16], strides = [1, 1]} : vector<16x16xf32> to vector<1x16xf32>
    %c14_164 = arith.constant 14 : index
    %c0_165 = arith.constant 0 : index
    %c0_166 = arith.constant 0 : index
    %230 = vector.load %arg3[%c14_164, %c0_165, %c0_166] : memref<16x16x120xf32, #tpu.memory_space<vmem>>, vector<1x16x120xf32>
    %231 = vector.shape_cast %230 : vector<1x16x120xf32> to vector<16x120xf32>
    %cst_167 = arith.constant dense<0.000000e+00> : vector<1x120xf32>
    %232 = tpu.matmul %229, %231, %cst_167 {dimension_numbers = #tpu.dot_dimension_numbers<[1], [0], [0], [1], [0, 0, 1, 1], [], []>} : vector<1x16xf32>, vector<16x120xf32>, vector<1x120xf32> -> vector<1x120xf32>
    %233 = arith.addf %228, %232 : vector<1x120xf32>
    %234 = vector.extract_strided_slice %159 {offsets = [15, 0], sizes = [1, 16], strides = [1, 1]} : vector<16x16xf32> to vector<1x16xf32>
    %c15_168 = arith.constant 15 : index
    %c0_169 = arith.constant 0 : index
    %c0_170 = arith.constant 0 : index
    %235 = vector.load %arg3[%c15_168, %c0_169, %c0_170] : memref<16x16x120xf32, #tpu.memory_space<vmem>>, vector<1x16x120xf32>
    %236 = vector.shape_cast %235 : vector<1x16x120xf32> to vector<16x120xf32>
    %cst_171 = arith.constant dense<0.000000e+00> : vector<1x120xf32>
    %237 = tpu.matmul %234, %236, %cst_171 {dimension_numbers = #tpu.dot_dimension_numbers<[1], [0], [0], [1], [0, 0, 1, 1], [], []>} : vector<1x16xf32>, vector<16x120xf32>, vector<1x120xf32> -> vector<1x120xf32>
    %238 = arith.addf %233, %237 : vector<1x120xf32>
    %c0_172 = arith.constant 0 : index
    %c0_173 = arith.constant 0 : index
    %239 = vector.load %arg4[%c0_172, %c0_173] : memref<1x120xf32, #tpu.memory_space<vmem>>, vector<1x120xf32>
    %240 = arith.addf %238, %239 : vector<1x120xf32>
    %241 = math.tanh %240 : vector<1x120xf32>
    %c0_174 = arith.constant 0 : index
    %c0_175 = arith.constant 0 : index
    %242 = vector.load %arg5[%c0_174, %c0_175] : memref<120x84xf32, #tpu.memory_space<vmem>>, vector<120x84xf32>
    %cst_176 = arith.constant dense<0.000000e+00> : vector<1x84xf32>
    %243 = tpu.matmul %241, %242, %cst_176 {dimension_numbers = #tpu.dot_dimension_numbers<[1], [0], [0], [1], [0, 0, 1, 1], [], []>} : vector<1x120xf32>, vector<120x84xf32>, vector<1x84xf32> -> vector<1x84xf32>
    %c0_177 = arith.constant 0 : index
    %c0_178 = arith.constant 0 : index
    %244 = vector.load %arg6[%c0_177, %c0_178] : memref<1x84xf32, #tpu.memory_space<vmem>>, vector<1x84xf32>
    %245 = arith.addf %243, %244 : vector<1x84xf32>
    %246 = math.tanh %245 : vector<1x84xf32>
    %c0_179 = arith.constant 0 : index
    %c0_180 = arith.constant 0 : index
    %247 = vector.load %arg7[%c0_179, %c0_180] : memref<1x84xf32, #tpu.memory_space<vmem>>, vector<1x84xf32>
    %248 = arith.mulf %246, %247 : vector<1x84xf32>
    %cst_181 = arith.constant dense<0.000000e+00> : vector<1xf32>
    %249 = vector.multi_reduction <add>, %248, %cst_181 [1] : vector<1x84xf32> to vector<1xf32>
    %250 = vector.shape_cast %249 : vector<1xf32> to vector<1x1xf32>
    %c0_182 = arith.constant 0 : index
    %c0_183 = arith.constant 0 : index
    %251 = vector.load %arg8[%c0_182, %c0_183] : memref<1x1xf32, #tpu.memory_space<vmem>>, vector<1x1xf32>
    %252 = arith.addf %250, %251 : vector<1x1xf32>
    %cst_184 = arith.constant 0.000000e+00 : f32
    %253 = vector.broadcast %cst_184 : f32 to vector<1x1xf32>
    %254 = arith.subf %253, %252 : vector<1x1xf32>
    %255 = math.exp %254 : vector<1x1xf32>
    %cst_185 = arith.constant 1.000000e+00 : f32
    %256 = vector.broadcast %cst_185 : f32 to vector<1x1xf32>
    %257 = arith.addf %256, %255 : vector<1x1xf32>
    %cst_186 = arith.constant 1.000000e+00 : f32
    %258 = vector.broadcast %cst_186 : f32 to vector<1x1xf32>
    %259 = arith.divf %258, %257 : vector<1x1xf32>
    %260 = tpu.concatenate %130, %259 in 0 : vector<1x1xf32>, vector<1x1xf32> -> vector<2x1xf32>
    %c0_187 = arith.constant 0 : index
    %c0_188 = arith.constant 0 : index
    %261 = vector.load %arg9[%c0_187, %c0_188] : memref<2x1xf32, #tpu.memory_space<vmem>>, vector<2x1xf32>
    tpu.vector_store %arg9[%c0_187, %c0_188], %260 {strides = array<i32>} : memref<2x1xf32, #tpu.memory_space<vmem>>, vector<2x1xf32>,
    return
  }
}

</mosaic_0001>

<llo_original>
// kernel: cnn_forward.2
$region0: #{cnn_forward.2}
  #allocation0 [shape = 'u32[]', space=smem, size = 0x4, offset = 0x4, fixed_abs, tag = 'smem constant byte address 0x4 - core index']
  #allocation1 [shape = 'u32[144,128]{1,0:T(1,128)}', space=vmem, size = 0x12000, scoped, tag = 'internal scratch']
  %s0 = inlined_call_operand.vmem [shape: bf16[2,4,75,625], index: 0, kind: input, shape index: {}]
  %s1 = inlined_call_operand.vmem [shape: bf16[6,75], index: 1, kind: input, shape index: {}]
  %s2 = inlined_call_operand.vmem [shape: f32[6,1], index: 2, kind: input, shape index: {}]
  %s3 = inlined_call_operand.vmem [shape: bf16[2,6,625], index: 3, kind: output, shape index: {}]
  %s4 = sld [smem:[#allocation0]]
  $region45: #{cnn_forward.2} parent=0
    _
  %s6 = ssub.s32 1, %s4
  %s7 = scalar_select 0, %s6, %s4
  loop: start=0, step=1, limit=4
  $region2: #{cnn_forward.2} parent=0 // loop_pre_header
    _
  $region3: #{cnn_forward.2} parent=0 // loop_header
    %s9 = sphi 0, %s13
    %p10 = scmp.ge.s32.totalorder %s9, 4
    %s19 = sphi 0, %s21
    %s22 = sphi 0, %s19
    %s23 = sphi 0, %s22
    %s39 = sphi 0, %s23
    %s43 = sphi 0, %s43
    %s45 = sphi 0, %s43
    %s46 = sphi 0, %s45
    %s60 = sphi 0, %s46
    %s64 = sphi 0, %s64
    %s66 = sphi 0, %s64
    %s67 = sphi 0, %s66
    %s81 = sphi 0, %s67
    %s87 = sphi 0, %s89
    %s90 = sphi 0, %s87
    %s91 = sphi 0, %s90
    %s107 = sphi 0, %s91
  $region4: #{cnn_forward.2} parent=0 // loop_header_branch
    %12 = sbr.rel (%p10) target = $region8
  $region5: #{cnn_forward.2} parent=0 // loop_body
    %s14 = ssub.s32 %s9, 1
    %s15 = ssub.s32 %s9, 2
    %s16 = sadd.s32 %s9, 1
    %s17 = ssub.s32 %s9, %s16
    %p18 = scmp.eq.s32.totalorder %s17, 0
    %s20 = sadd.s32 %s19, 1
    %s21 = scalar_select %p18, %s19, %s20
    %p24 = pneg %p18
    %p25 = scmp.eq.s32.totalorder %s9, 1
    %p26 = por %p24, %p25
    %p27 = scmp.ne.s32.totalorder %s19, %s22
    %p28 = scmp.eq.s32.totalorder %s9, 0
    %p29 = por %p27, %p28
    %p30 = scmp.ne.s32.totalorder %s19, %s22
    %p31 = scmp.eq.s32.totalorder %s14, 1
    %p32 = por %p30, %p31
    %p33 = scmp.ne.s32.totalorder %s22, %s23
    %p34 = scmp.eq.s32.totalorder %s14, 0
    %p35 = por %p33, %p34
    %p36 = scmp.ne.s32.totalorder %s22, %s23
    %p37 = scmp.eq.s32.totalorder %s15, 1
    %p38 = por %p36, %p37
    %p40 = scmp.ne.s32.totalorder %s23, %s39
    %p41 = scmp.eq.s32.totalorder %s15, 0
    %p42 = por %p40, %p41
    %s44 = sadd.s32 %s43, 1
    %p47 = scmp.eq.s32.totalorder %s9, 1
    %p48 = scmp.ne.s32.totalorder %s43, %s45
    %p49 = scmp.eq.s32.totalorder %s9, 0
    %p50 = por %p48, %p49
    %p51 = scmp.ne.s32.totalorder %s43, %s45
    %p52 = scmp.eq.s32.totalorder %s14, 1
    %p53 = por %p51, %p52
    %p54 = scmp.ne.s32.totalorder %s45, %s46
    %p55 = scmp.eq.s32.totalorder %s14, 0
    %p56 = por %p54, %p55
    %p57 = scmp.ne.s32.totalorder %s45, %s46
    %p58 = scmp.eq.s32.totalorder %s15, 1
    %p59 = por %p57, %p58
    %p61 = scmp.ne.s32.totalorder %s46, %s60
    %p62 = scmp.eq.s32.totalorder %s15, 0
    %p63 = por %p61, %p62
    %s65 = sadd.s32 %s64, 1
    %p68 = scmp.eq.s32.totalorder %s9, 1
    %p69 = scmp.ne.s32.totalorder %s64, %s66
    %p70 = scmp.eq.s32.totalorder %s9, 0
    %p71 = por %p69, %p70
    %p72 = scmp.ne.s32.totalorder %s64, %s66
    %p73 = scmp.eq.s32.totalorder %s14, 1
    %p74 = por %p72, %p73
    %p75 = scmp.ne.s32.totalorder %s66, %s67
    %p76 = scmp.eq.s32.totalorder %s14, 0
    %p77 = por %p75, %p76
    %p78 = scmp.ne.s32.totalorder %s66, %s67
    %p79 = scmp.eq.s32.totalorder %s15, 1
    %p80 = por %p78, %p79
    %p82 = scmp.ne.s32.totalorder %s67, %s81
    %p83 = scmp.eq.s32.totalorder %s15, 0
    %p84 = por %p82, %p83
    %s85 = ssub.s32 %s9, %s16
    %p86 = scmp.eq.s32.totalorder %s85, 0
    %s88 = sadd.s32 %s87, 1
    %s89 = scalar_select %p86, %s87, %s88
    %p92 = pneg %p86
    %p93 = scmp.eq.s32.totalorder %s9, 1
    %p94 = por %p92, %p93
    %p95 = scmp.ne.s32.totalorder %s87, %s90
    %p96 = scmp.eq.s32.totalorder %s9, 0
    %p97 = por %p95, %p96
    %p98 = scmp.ne.s32.totalorder %s87, %s90
    %p99 = scmp.eq.s32.totalorder %s14, 1
    %p100 = por %p98, %p99
    %p101 = scmp.ne.s32.totalorder %s90, %s91
    %p102 = scmp.eq.s32.totalorder %s14, 0
    %p103 = por %p101, %p102
    %p104 = scmp.ne.s32.totalorder %s90, %s91
    %p105 = scmp.eq.s32.totalorder %s15, 1
    %p106 = por %p104, %p105
    %p108 = scmp.ne.s32.totalorder %s91, %s107
    %p109 = scmp.eq.s32.totalorder %s15, 0
    %p110 = por %p108, %p109
    %p111 = scmp.le.s32.totalorder 1, %s9
    %p112 = scmp.lt.s32.totalorder %s9, 3
    %p113 = pnand %p111, %p112
    %p114 = pneg %p113
    // Predicated region
    $region9: #{cnn_forward.2} parent=5 // pred_check
      _
    $region10: #{cnn_forward.2} parent=5 // pred_check_branch
      %116 = sbr.rel (%p113) target = $region12
    $region11: #{cnn_forward.2} parent=5 // pred_region
      %s117 = ssub.s32 %s9, 1
      // Predicated region
      $region13: #{cnn_forward.2} parent=11 // pred_check
        %p118 = pneg %p56
      $region14: #{cnn_forward.2} parent=11 // pred_check_branch
        %120 = sbr.rel (%p118) target = $region16
      $region15: #{cnn_forward.2} parent=11 // pred_region
        _
      $region16: #{cnn_forward.2} parent=11 // pred_fallthru
        _
      // Predicated region
      $region17: #{cnn_forward.2} parent=11 // pred_check
        %p121 = pneg %p77
      $region18: #{cnn_forward.2} parent=11 // pred_check_branch
        %123 = sbr.rel (%p121) target = $region20
      $region19: #{cnn_forward.2} parent=11 // pred_region
        _
      $region20: #{cnn_forward.2} parent=11 // pred_fallthru
        _
    $region12: #{cnn_forward.2} parent=5 // pred_fallthru
      _
    %p124 = scmp.lt.s32.totalorder %s9, 2
    // Predicated region
    $region21: #{cnn_forward.2} parent=5 // pred_check
      %p125 = pneg %p124
    $region22: #{cnn_forward.2} parent=5 // pred_check_branch
      %127 = sbr.rel (%p125) target = $region24
    $region23: #{cnn_forward.2} parent=5 // pred_region
      // Predicated region
      $region25: #{cnn_forward.2} parent=23 // pred_check
        %p128 = pneg %p29
      $region26: #{cnn_forward.2} parent=23 // pred_check_branch
        %130 = sbr.rel (%p128) target = $region28
      $region27: #{cnn_forward.2} parent=23 // pred_region
        %p131 = scmp.lt.s32.totalorder %s9, 1
        %s132 = scalar_select %p131, %s9, 1
        %s133 = smul.addr %s132, 200
        %s134 = smul.addr %s133, 4
        %s135 = scalar_lea.vmem %s0, %s134
      $region28: #{cnn_forward.2} parent=23 // pred_fallthru
        _
    $region24: #{cnn_forward.2} parent=5 // pred_fallthru
      _
    %p136 = scmp.le.s32.totalorder 1, %s9
    %p137 = scmp.lt.s32.totalorder %s9, 3
    %p138 = pnand %p136, %p137
    %p139 = pneg %p138
    // Predicated region
    $region29: #{cnn_forward.2} parent=5 // pred_check
      _
    $region30: #{cnn_forward.2} parent=5 // pred_check_branch
      %141 = sbr.rel (%p138) target = $region32
    $region31: #{cnn_forward.2} parent=5 // pred_region
      %s142 = ssub.s32 %s9, 1
      %p143 = scmp.lt.s32.totalorder %s14, 1
      %s144 = scalar_select %p143, %s14, 1
      %s145 = smul.addr %s144, 200
      %s146 = smul.addr %s145, 4
      %s147 = scalar_lea.vmem %s0, %s146
      %p148 = pneg %p35
      %p149 = pneg %p32
      %p150 = pneg %p56
      %p151 = pneg %p53
      %p152 = pneg %p77
      %p153 = pneg %p74
      %p154 = pneg %p103
      %p155 = pneg %p100
      %p156 = scmp.lt.s32.totalorder %s14, 1
      %s157 = scalar_select %p156, %s14, 1
      %s158 = smul.addr %s157, 5
      %s159 = smul.addr %s158, 4
      %s160 = scalar_lea.vmem %s3, %s159
      %p161 = scmp.lt.s32.totalorder %s14, 1
      %s162 = scalar_select %p161, %s14, 1
      %s163 = smul.addr %s162, 200
      %s164 = smul.addr %s163, 4
      %s165 = scalar_lea.vmem %s0, %s164
      %p166 = scmp.lt.s32.totalorder %s14, 1
      %s167 = scalar_select %p166, %s14, 1
      %s168 = smul.addr %s167, 5
      %s169 = smul.addr %s168, 4
      %s170 = scalar_lea.vmem %s3, %s169
      %v172 = vld [vmem:[%s1] sm:$0x7]
      %v173 = vld [vmem:[%s2] sm:$0x3f]
      %v174 = vld [vmem:[%s165] sm:$0xff]
      %v175 = vld [vmem:[%s165 + $0x8] sm:$0xff]
      %v176 = vld [vmem:[%s165 + $0x10] sm:$0xf]
      %v177 = vld [vmem:[%s165 + $0x14] sm:$0xff]
      %v178 = vld [vmem:[%s165 + $0x1c] sm:$0xff]
      %v179 = vld [vmem:[%s165 + $0x24] sm:$0xf]
      %v180 = vld [vmem:[%s165 + $0x28] sm:$0xff]
      %v181 = vld [vmem:[%s165 + $0x30] sm:$0xff]
      %v182 = vld [vmem:[%s165 + $0x38] sm:$0xf]
      %v183 = vld [vmem:[%s165 + $0x3c] sm:$0xff]
      %v184 = vld [vmem:[%s165 + $0x44] sm:$0xff]
      %v185 = vld [vmem:[%s165 + $0x4c] sm:$0xf]
      %v186 = vld [vmem:[%s165 + $0x50] sm:$0xff]
      %v187 = vld [vmem:[%s165 + $0x58] sm:$0xff]
      %v188 = vld [vmem:[%s165 + $0x60] sm:$0xf]
      %v189 = vld [vmem:[%s165 + $0x64] sm:$0xff]
      %v190 = vld [vmem:[%s165 + $0x6c] sm:$0xff]
      %v191 = vld [vmem:[%s165 + $0x74] sm:$0xf]
      %v192 = vld [vmem:[%s165 + $0x78] sm:$0xff]
      %v193 = vld [vmem:[%s165 + $0x80] sm:$0xff]
      %v194 = vld [vmem:[%s165 + $0x88] sm:$0xf]
      %v195 = vld [vmem:[%s165 + $0x8c] sm:$0xff]
      %v196 = vld [vmem:[%s165 + $0x94] sm:$0xff]
      %v197 = vld [vmem:[%s165 + $0x9c] sm:$0xf]
      %v198 = vld [vmem:[%s165 + $0xa0] sm:$0xff]
      %v199 = vld [vmem:[%s165 + $0xa8] sm:$0xff]
      %v200 = vld [vmem:[%s165 + $0xb0] sm:$0xf]
      %v201 = vld [vmem:[%s165 + $0xb4] sm:$0x33]
      %v202 = vld [vmem:[%s165 + $0xbc] sm:$0x33]
      %v203 = vld [vmem:[%s165 + $0xc4] sm:$0x3]
      %205 = vset.pattern.permute.xlu0 0
      %206 = vperm.xlu0 %205, %v173
      %v207 = vpop.permute.xlu0 %206
      %v239 = vunpack.c.l.b16 %v174
      %v240 = vunpack.c.h.b16 %v174
      %v241 = vunpack.c.l.b16 %v175
      %v242 = vunpack.c.h.b16 %v175
      %v243 = vunpack.c.l.b16 %v176
      %v244 = vunpack.c.l.b16 %v177
      %v245 = vunpack.c.h.b16 %v177
      %v246 = vunpack.c.l.b16 %v178
      %v247 = vunpack.c.h.b16 %v178
      %v248 = vunpack.c.l.b16 %v179
      %v249 = vunpack.c.l.b16 %v180
      %v250 = vunpack.c.h.b16 %v180
      %v251 = vunpack.c.l.b16 %v181
      %v252 = vunpack.c.h.b16 %v181
      %v253 = vunpack.c.l.b16 %v182
      %v254 = vunpack.c.l.b16 %v183
      %v255 = vunpack.c.h.b16 %v183
      %v256 = vunpack.c.l.b16 %v184
      %v257 = vunpack.c.h.b16 %v184
      %v258 = vunpack.c.l.b16 %v185
      %v259 = vunpack.c.l.b16 %v186
      %v260 = vunpack.c.h.b16 %v186
      %v261 = vunpack.c.l.b16 %v187
      %v262 = vunpack.c.h.b16 %v187
      %v263 = vunpack.c.l.b16 %v188
      %v264 = vunpack.c.l.b16 %v189
      %v265 = vunpack.c.h.b16 %v189
      %v266 = vunpack.c.l.b16 %v190
      %v267 = vunpack.c.h.b16 %v190
      %v268 = vunpack.c.l.b16 %v191
      %v269 = vunpack.c.l.b16 %v192
      %v270 = vunpack.c.h.b16 %v192
      %v271 = vunpack.c.l.b16 %v193
      %v272 = vunpack.c.h.b16 %v193
      %v273 = vunpack.c.l.b16 %v194
      %v274 = vunpack.c.l.b16 %v195
      %v275 = vunpack.c.h.b16 %v195
      %v276 = vunpack.c.l.b16 %v196
      %v277 = vunpack.c.h.b16 %v196
      %v278 = vunpack.c.l.b16 %v197
      %v279 = vunpack.c.l.b16 %v198
      %v280 = vunpack.c.h.b16 %v198
      %v281 = vunpack.c.l.b16 %v199
      %v282 = vunpack.c.h.b16 %v199
      %v283 = vunpack.c.l.b16 %v200
      %v284 = vunpack.c.l.b16 %v201
      %v285 = vunpack.c.h.b16 %v201
      %v286 = vunpack.c.l.b16 %v202
      %v287 = vunpack.c.h.b16 %v202
      %v288 = vunpack.c.l.b16 %v203
      %v289 = vpack.c.b16 %v244, %v239
      %v290 = vpack.c.b16 %v245, %v240
      %v291 = vpack.c.b16 %v246, %v241
      %v292 = vpack.c.b16 %v247, %v242
      %v293 = vpack.c.b16 %v248, %v243
      %v294 = vpack.c.b16 %v254, %v249
      %v295 = vpack.c.b16 %v255, %v250
      %v296 = vpack.c.b16 %v256, %v251
      %v297 = vpack.c.b16 %v257, %v252
      %v298 = vpack.c.b16 %v258, %v253
      %v299 = vpack.c.b16 %v264, %v259
      %v300 = vpack.c.b16 %v265, %v260
      %v301 = vpack.c.b16 %v266, %v261
      %v302 = vpack.c.b16 %v267, %v262
      %v303 = vpack.c.b16 %v268, %v263
      %v304 = vpack.c.b16 %v274, %v269
      %v305 = vpack.c.b16 %v275, %v270
      %v306 = vpack.c.b16 %v276, %v271
      %v307 = vpack.c.b16 %v277, %v272
      %v308 = vpack.c.b16 %v278, %v273
      %v309 = vpack.c.b16 %v284, %v279
      %v310 = vpack.c.b16 %v285, %v280
      %v311 = vpack.c.b16 %v286, %v281
      %v312 = vpack.c.b16 %v287, %v282
      %v313 = vpack.c.b16 %v288, %v283
      %vm334 = vcmask 613376
      %v336 = vsel %vm334, %v172, 0
      %vm338 = vcmask 1044480
      %vm339 = vcmask 1045504
      %v340 = vsel %vm338, 4294967295, 65535
      %v341 = vsel %vm339, %v340, 0
      %v343 = vand.u32 %v309, %v341
      %v346 = vand.u32 %v310, %v341
      %v349 = vand.u32 %v311, %v341
      %v352 = vand.u32 %v312, %v341
      %v355 = vand.u32 %v313, %v341
      %357 = vmatprep.subr.bf16.mxu0 %v290
      %358 = vmatpush1.bf16.msra.mxu0 %v289
      %359 = vmatprep.subr.bf16.mxu0 %v295
      %360 = vmatpush1.bf16.msra.mxu0 %v294
      %361 = vmatprep.subr.bf16.mxu0 %v300
      %362 = vmatpush1.bf16.msra.mxu0 %v299
      %363 = vmatprep.subr.bf16.mxu0 %v305
      %364 = vmatpush1.bf16.msra.mxu0 %v304
      %365 = vmatprep.subr.bf16.mxu0 %v346
      %366 = vmatpush1.bf16.msra.mxu0 %v343
      %367 = vmatprep.subr.bf16.mxu0 0
      %368 = vmatpush1.bf16.msra.mxu0 0
      %369 = vmatprep.subr.bf16.mxu0 0
      %370 = vmatpush1.bf16.msra.mxu0 0
      %371 = vmatprep.subr.bf16.mxu0 0
      %372 = vmatpush1.bf16.msra.mxu0 0
      %373 = vmatprep.subr.bf16.mxu0 0
      %374 = vmatpush1.bf16.msra.mxu0 0
      %375 = vmatprep.subr.bf16.mxu0 0
      %376 = vmatpush1.bf16.msra.mxu0 0
      %377 = vmatprep.subr.bf16.mxu0 0
      %378 = vmatpush1.bf16.msra.mxu0 0
      %379 = vmatprep.subr.bf16.mxu0 0
      %380 = vmatpush1.bf16.msra.mxu0 0
      %381 = vmatprep.subr.bf16.mxu0 0
      %382 = vmatpush1.bf16.msra.mxu0 0
      %383 = vmatprep.subr.bf16.mxu0 0
      %384 = vmatpush1.bf16.msra.mxu0 0
      %385 = vmatprep.subr.bf16.mxu0 0
      %386 = vmatpush1.bf16.msra.mxu0 0
      %387 = vmatprep.subr.bf16.mxu0 0
      %388 = vmatpush1.bf16.msra.mxu0 0
      %389 = vmatprep.mubr.bf16.mxu0 0
      %390 = vmatmul.mubr.bf16.gmra.mrb[0].mxu0 %v336
      %v391 = vpop.f32.mrb[0].mxu0
      %v392 = vadd.f32 %v207, %v391
      %v393 = vpop.f32.mrb[0].mxu0
      %v394 = vadd.f32 %v207, %v393
      %v395 = vpop.f32.mrb[0].mxu0
      %v396 = vpop.f32.mrb[0].mxu0
      %397 = vdwg.mxu0
      %398 = vmatprep.subr.bf16.mxu0 %v292
      %399 = vmatpush1.bf16.msra.mxu0 %v291
      %400 = vmatprep.subr.bf16.mxu0 %v297
      %401 = vmatpush1.bf16.msra.mxu0 %v296
      %402 = vmatprep.subr.bf16.mxu0 %v302
      %403 = vmatpush1.bf16.msra.mxu0 %v301
      %404 = vmatprep.subr.bf16.mxu0 %v307
      %405 = vmatpush1.bf16.msra.mxu0 %v306
      %406 = vmatprep.subr.bf16.mxu0 %v352
      %407 = vmatpush1.bf16.msra.mxu0 %v349
      %408 = vmatprep.subr.bf16.mxu0 0
      %409 = vmatpush1.bf16.msra.mxu0 0
      %410 = vmatprep.subr.bf16.mxu0 0
      %411 = vmatpush1.bf16.msra.mxu0 0
      %412 = vmatprep.subr.bf16.mxu0 0
      %413 = vmatpush1.bf16.msra.mxu0 0
      %414 = vmatprep.subr.bf16.mxu0 0
      %415 = vmatpush1.bf16.msra.mxu0 0
      %416 = vmatprep.subr.bf16.mxu0 0
      %417 = vmatpush1.bf16.msra.mxu0 0
      %418 = vmatprep.subr.bf16.mxu0 0
      %419 = vmatpush1.bf16.msra.mxu0 0
      %420 = vmatprep.subr.bf16.mxu0 0
      %421 = vmatpush1.bf16.msra.mxu0 0
      %422 = vmatprep.subr.bf16.mxu0 0
      %423 = vmatpush1.bf16.msra.mxu0 0
      %424 = vmatprep.subr.bf16.mxu0 0
      %425 = vmatpush1.bf16.msra.mxu0 0
      %426 = vmatprep.subr.bf16.mxu0 0
      %427 = vmatpush1.bf16.msra.mxu0 0
      %428 = vmatprep.subr.bf16.mxu0 0
      %429 = vmatpush1.bf16.msra.mxu0 0
      %430 = vmatprep.mubr.bf16.mxu0 0
      %431 = vmatmul.mubr.bf16.gmra.mrb[0].mxu0 %v336
      %v432 = vpop.f32.mrb[0].mxu0
      %v433 = vadd.f32 %v207, %v432
      %v434 = vpop.f32.mrb[0].mxu0
      %v435 = vadd.f32 %v207, %v434
      %v436 = vpop.f32.mrb[0].mxu0
      %v437 = vpop.f32.mrb[0].mxu0
      %438 = vdwg.mxu0
      %439 = vmatprep.subr.bf16.mxu0 0
      %440 = vmatpush1.bf16.msra.mxu0 %v293
      %441 = vmatprep.subr.bf16.mxu0 0
      %442 = vmatpush1.bf16.msra.mxu0 %v298
      %443 = vmatprep.subr.bf16.mxu0 0
      %444 = vmatpush1.bf16.msra.mxu0 %v303
      %445 = vmatprep.subr.bf16.mxu0 0
      %446 = vmatpush1.bf16.msra.mxu0 %v308
      %447 = vmatprep.subr.bf16.mxu0 0
      %448 = vmatpush1.bf16.msra.mxu0 %v355
      %449 = vmatprep.subr.bf16.mxu0 0
      %450 = vmatpush1.bf16.msra.mxu0 0
      %451 = vmatprep.subr.bf16.mxu0 0
      %452 = vmatpush1.bf16.msra.mxu0 0
      %453 = vmatprep.subr.bf16.mxu0 0
      %454 = vmatpush1.bf16.msra.mxu0 0
      %455 = vmatprep.subr.bf16.mxu0 0
      %456 = vmatpush1.bf16.msra.mxu0 0
      %457 = vmatprep.subr.bf16.mxu0 0
      %458 = vmatpush1.bf16.msra.mxu0 0
      %459 = vmatprep.subr.bf16.mxu0 0
      %460 = vmatpush1.bf16.msra.mxu0 0
      %461 = vmatprep.subr.bf16.mxu0 0
      %462 = vmatpush1.bf16.msra.mxu0 0
      %463 = vmatprep.subr.bf16.mxu0 0
      %464 = vmatpush1.bf16.msra.mxu0 0
      %465 = vmatprep.subr.bf16.mxu0 0
      %466 = vmatpush1.bf16.msra.mxu0 0
      %467 = vmatprep.subr.bf16.mxu0 0
      %468 = vmatpush1.bf16.msra.mxu0 0
      %469 = vmatprep.subr.bf16.mxu0 0
      %470 = vmatpush1.bf16.msra.mxu0 0
      %471 = vmatprep.mubr.bf16.mxu0 0
      %472 = vmatmul.mubr.bf16.gmra.mrb[0].mxu0 %v336
      %v473 = vpop.f32.mrb[0].mxu0
      %v474 = vadd.f32 %v207, %v473
      %v475 = vpop.f32.mrb[0].mxu0
      %v476 = vpop.f32.mrb[0].mxu0
      %v477 = vpop.f32.mrb[0].mxu0
      %478 = vdwg.mxu0
      %v479 = vtanh.pop %v392
      %v480 = vtanh.pop %v394
      %v481 = vtanh.pop %v433
      %v482 = vtanh.pop %v435
      %v483 = vtanh.pop %v474
      %s484 = scalar_lea.vmem %s165, 200
      %v485 = vld [vmem:[%s484] sm:$0xff]
      %v486 = vld [vmem:[%s484 + $0x8] sm:$0xff]
      %v487 = vld [vmem:[%s484 + $0x10] sm:$0xf]
      %v488 = vld [vmem:[%s484 + $0x14] sm:$0xff]
      %v489 = vld [vmem:[%s484 + $0x1c] sm:$0xff]
      %v490 = vld [vmem:[%s484 + $0x24] sm:$0xf]
      %v491 = vld [vmem:[%s484 + $0x28] sm:$0xff]
      %v492 = vld [vmem:[%s484 + $0x30] sm:$0xff]
      %v493 = vld [vmem:[%s484 + $0x38] sm:$0xf]
      %v494 = vld [vmem:[%s484 + $0x3c] sm:$0xff]
      %v495 = vld [vmem:[%s484 + $0x44] sm:$0xff]
      %v496 = vld [vmem:[%s484 + $0x4c] sm:$0xf]
      %v497 = vld [vmem:[%s484 + $0x50] sm:$0xff]
      %v498 = vld [vmem:[%s484 + $0x58] sm:$0xff]
      %v499 = vld [vmem:[%s484 + $0x60] sm:$0xf]
      %v500 = vld [vmem:[%s484 + $0x64] sm:$0xff]
      %v501 = vld [vmem:[%s484 + $0x6c] sm:$0xff]
      %v502 = vld [vmem:[%s484 + $0x74] sm:$0xf]
      %v503 = vld [vmem:[%s484 + $0x78] sm:$0xff]
      %v504 = vld [vmem:[%s484 + $0x80] sm:$0xff]
      %v505 = vld [vmem:[%s484 + $0x88] sm:$0xf]
      %v506 = vld [vmem:[%s484 + $0x8c] sm:$0xff]
      %v507 = vld [vmem:[%s484 + $0x94] sm:$0xff]
      %v508 = vld [vmem:[%s484 + $0x9c] sm:$0xf]
      %v509 = vld [vmem:[%s484 + $0xa0] sm:$0xff]
      %v510 = vld [vmem:[%s484 + $0xa8] sm:$0xff]
      %v511 = vld [vmem:[%s484 + $0xb0] sm:$0xf]
      %v512 = vld [vmem:[%s484 + $0xb4] sm:$0x33]
      %v513 = vld [vmem:[%s484 + $0xbc] sm:$0x33]
      %v514 = vld [vmem:[%s484 + $0xc4] sm:$0x3]
      %v545 = vunpack.c.l.b16 %v485
      %v546 = vunpack.c.h.b16 %v485
      %v547 = vunpack.c.l.b16 %v486
      %v548 = vunpack.c.h.b16 %v486
      %v549 = vunpack.c.l.b16 %v487
      %v550 = vunpack.c.l.b16 %v488
      %v551 = vunpack.c.h.b16 %v488
      %v552 = vunpack.c.l.b16 %v489
      %v553 = vunpack.c.h.b16 %v489
      %v554 = vunpack.c.l.b16 %v490
      %v555 = vunpack.c.l.b16 %v491
      %v556 = vunpack.c.h.b16 %v491
      %v557 = vunpack.c.l.b16 %v492
      %v558 = vunpack.c.h.b16 %v492
      %v559 = vunpack.c.l.b16 %v493
      %v560 = vunpack.c.l.b16 %v494
      %v561 = vunpack.c.h.b16 %v494
      %v562 = vunpack.c.l.b16 %v495
      %v563 = vunpack.c.h.b16 %v495
      %v564 = vunpack.c.l.b16 %v496
      %v565 = vunpack.c.l.b16 %v497
      %v566 = vunpack.c.h.b16 %v497
      %v567 = vunpack.c.l.b16 %v498
      %v568 = vunpack.c.h.b16 %v498
      %v569 = vunpack.c.l.b16 %v499
      %v570 = vunpack.c.l.b16 %v500
      %v571 = vunpack.c.h.b16 %v500
      %v572 = vunpack.c.l.b16 %v501
      %v573 = vunpack.c.h.b16 %v501
      %v574 = vunpack.c.l.b16 %v502
      %v575 = vunpack.c.l.b16 %v503
      %v576 = vunpack.c.h.b16 %v503
      %v577 = vunpack.c.l.b16 %v504
      %v578 = vunpack.c.h.b16 %v504
      %v579 = vunpack.c.l.b16 %v505
      %v580 = vunpack.c.l.b16 %v506
      %v581 = vunpack.c.h.b16 %v506
      %v582 = vunpack.c.l.b16 %v507
      %v583 = vunpack.c.h.b16 %v507
      %v584 = vunpack.c.l.b16 %v508
      %v585 = vunpack.c.l.b16 %v509
      %v586 = vunpack.c.h.b16 %v509
      %v587 = vunpack.c.l.b16 %v510
      %v588 = vunpack.c.h.b16 %v510
      %v589 = vunpack.c.l.b16 %v511
      %v590 = vunpack.c.l.b16 %v512
      %v591 = vunpack.c.h.b16 %v512
      %v592 = vunpack.c.l.b16 %v513
      %v593 = vunpack.c.h.b16 %v513
      %v594 = vunpack.c.l.b16 %v514
      %v595 = vpack.c.b16 %v550, %v545
      %v596 = vpack.c.b16 %v551, %v546
      %v597 = vpack.c.b16 %v552, %v547
      %v598 = vpack.c.b16 %v553, %v548
      %v599 = vpack.c.b16 %v554, %v549
      %v600 = vpack.c.b16 %v560, %v555
      %v601 = vpack.c.b16 %v561, %v556
      %v602 = vpack.c.b16 %v562, %v557
      %v603 = vpack.c.b16 %v563, %v558
      %v604 = vpack.c.b16 %v564, %v559
      %v605 = vpack.c.b16 %v570, %v565
      %v606 = vpack.c.b16 %v571, %v566
      %v607 = vpack.c.b16 %v572, %v567
      %v608 = vpack.c.b16 %v573, %v568
      %v609 = vpack.c.b16 %v574, %v569
      %v610 = vpack.c.b16 %v580, %v575
      %v611 = vpack.c.b16 %v581, %v576
      %v612 = vpack.c.b16 %v582, %v577
      %v613 = vpack.c.b16 %v583, %v578
      %v614 = vpack.c.b16 %v584, %v579
      %v615 = vpack.c.b16 %v590, %v585
      %v616 = vpack.c.b16 %v591, %v586
      %v617 = vpack.c.b16 %v592, %v587
      %v618 = vpack.c.b16 %v593, %v588
      %v619 = vpack.c.b16 %v594, %v589
      %v641 = vand.u32 %v615, %v341
      %v644 = vand.u32 %v616, %v341
      %v647 = vand.u32 %v617, %v341
      %v650 = vand.u32 %v618, %v341
      %v653 = vand.u32 %v619, %v341
      %655 = vmatprep.subr.bf16.mxu0 %v596
      %656 = vmatpush1.bf16.msra.mxu0 %v595
      %657 = vmatprep.subr.bf16.mxu0 %v601
      %658 = vmatpush1.bf16.msra.mxu0 %v600
      %659 = vmatprep.subr.bf16.mxu0 %v606
      %660 = vmatpush1.bf16.msra.mxu0 %v605
      %661 = vmatprep.subr.bf16.mxu0 %v611
      %662 = vmatpush1.bf16.msra.mxu0 %v610
      %663 = vmatprep.subr.bf16.mxu0 %v644
      %664 = vmatpush1.bf16.msra.mxu0 %v641
      %665 = vmatprep.subr.bf16.mxu0 0
      %666 = vmatpush1.bf16.msra.mxu0 0
      %667 = vmatprep.subr.bf16.mxu0 0
      %668 = vmatpush1.bf16.msra.mxu0 0
      %669 = vmatprep.subr.bf16.mxu0 0
      %670 = vmatpush1.bf16.msra.mxu0 0
      %671 = vmatprep.subr.bf16.mxu0 0
      %672 = vmatpush1.bf16.msra.mxu0 0
      %673 = vmatprep.subr.bf16.mxu0 0
      %674 = vmatpush1.bf16.msra.mxu0 0
      %675 = vmatprep.subr.bf16.mxu0 0
      %676 = vmatpush1.bf16.msra.mxu0 0
      %677 = vmatprep.subr.bf16.mxu0 0
      %678 = vmatpush1.bf16.msra.mxu0 0
      %679 = vmatprep.subr.bf16.mxu0 0
      %680 = vmatpush1.bf16.msra.mxu0 0
      %681 = vmatprep.subr.bf16.mxu0 0
      %682 = vmatpush1.bf16.msra.mxu0 0
      %683 = vmatprep.subr.bf16.mxu0 0
      %684 = vmatpush1.bf16.msra.mxu0 0
      %685 = vmatprep.subr.bf16.mxu0 0
      %686 = vmatpush1.bf16.msra.mxu0 0
      %687 = vmatprep.mubr.bf16.mxu0 0
      %688 = vmatmul.mubr.bf16.gmra.mrb[0].mxu0 %v336
      %v689 = vpop.f32.mrb[0].mxu0
      %v690 = vadd.f32 %v207, %v689
      %v691 = vpop.f32.mrb[0].mxu0
      %v692 = vadd.f32 %v207, %v691
      %v693 = vpop.f32.mrb[0].mxu0
      %v694 = vpop.f32.mrb[0].mxu0
      %695 = vdwg.mxu0
      %696 = vmatprep.subr.bf16.mxu0 %v598
      %697 = vmatpush1.bf16.msra.mxu0 %v597
      %698 = vmatprep.subr.bf16.mxu0 %v603
      %699 = vmatpush1.bf16.msra.mxu0 %v602
      %700 = vmatprep.subr.bf16.mxu0 %v608
      %701 = vmatpush1.bf16.msra.mxu0 %v607
      %702 = vmatprep.subr.bf16.mxu0 %v613
      %703 = vmatpush1.bf16.msra.mxu0 %v612
      %704 = vmatprep.subr.bf16.mxu0 %v650
      %705 = vmatpush1.bf16.msra.mxu0 %v647
      %706 = vmatprep.subr.bf16.mxu0 0
      %707 = vmatpush1.bf16.msra.mxu0 0
      %708 = vmatprep.subr.bf16.mxu0 0
      %709 = vmatpush1.bf16.msra.mxu0 0
      %710 = vmatprep.subr.bf16.mxu0 0
      %711 = vmatpush1.bf16.msra.mxu0 0
      %712 = vmatprep.subr.bf16.mxu0 0
      %713 = vmatpush1.bf16.msra.mxu0 0
      %714 = vmatprep.subr.bf16.mxu0 0
      %715 = vmatpush1.bf16.msra.mxu0 0
      %716 = vmatprep.subr.bf16.mxu0 0
      %717 = vmatpush1.bf16.msra.mxu0 0
      %718 = vmatprep.subr.bf16.mxu0 0
      %719 = vmatpush1.bf16.msra.mxu0 0
      %720 = vmatprep.subr.bf16.mxu0 0
      %721 = vmatpush1.bf16.msra.mxu0 0
      %722 = vmatprep.subr.bf16.mxu0 0
      %723 = vmatpush1.bf16.msra.mxu0 0
      %724 = vmatprep.subr.bf16.mxu0 0
      %725 = vmatpush1.bf16.msra.mxu0 0
      %726 = vmatprep.subr.bf16.mxu0 0
      %727 = vmatpush1.bf16.msra.mxu0 0
      %728 = vmatprep.mubr.bf16.mxu0 0
      %729 = vmatmul.mubr.bf16.gmra.mrb[0].mxu0 %v336
      %v730 = vpop.f32.mrb[0].mxu0
      %v731 = vadd.f32 %v207, %v730
      %v732 = vpop.f32.mrb[0].mxu0
      %v733 = vadd.f32 %v207, %v732
      %v734 = vpop.f32.mrb[0].mxu0
      %v735 = vpop.f32.mrb[0].mxu0
      %736 = vdwg.mxu0
      %737 = vmatprep.subr.bf16.mxu0 0
      %738 = vmatpush1.bf16.msra.mxu0 %v599
      %739 = vmatprep.subr.bf16.mxu0 0
      %740 = vmatpush1.bf16.msra.mxu0 %v604
      %741 = vmatprep.subr.bf16.mxu0 0
      %742 = vmatpush1.bf16.msra.mxu0 %v609
      %743 = vmatprep.subr.bf16.mxu0 0
      %744 = vmatpush1.bf16.msra.mxu0 %v614
      %745 = vmatprep.subr.bf16.mxu0 0
      %746 = vmatpush1.bf16.msra.mxu0 %v653
      %747 = vmatprep.subr.bf16.mxu0 0
      %748 = vmatpush1.bf16.msra.mxu0 0
      %749 = vmatprep.subr.bf16.mxu0 0
      %750 = vmatpush1.bf16.msra.mxu0 0
      %751 = vmatprep.subr.bf16.mxu0 0
      %752 = vmatpush1.bf16.msra.mxu0 0
      %753 = vmatprep.subr.bf16.mxu0 0
      %754 = vmatpush1.bf16.msra.mxu0 0
      %755 = vmatprep.subr.bf16.mxu0 0
      %756 = vmatpush1.bf16.msra.mxu0 0
      %757 = vmatprep.subr.bf16.mxu0 0
      %758 = vmatpush1.bf16.msra.mxu0 0
      %759 = vmatprep.subr.bf16.mxu0 0
      %760 = vmatpush1.bf16.msra.mxu0 0
      %761 = vmatprep.subr.bf16.mxu0 0
      %762 = vmatpush1.bf16.msra.mxu0 0
      %763 = vmatprep.subr.bf16.mxu0 0
      %764 = vmatpush1.bf16.msra.mxu0 0
      %765 = vmatprep.subr.bf16.mxu0 0
      %766 = vmatpush1.bf16.msra.mxu0 0
      %767 = vmatprep.subr.bf16.mxu0 0
      %768 = vmatpush1.bf16.msra.mxu0 0
      %769 = vmatprep.mubr.bf16.mxu0 0
      %770 = vmatmul.mubr.bf16.gmra.mrb[0].mxu0 %v336
      %v771 = vpop.f32.mrb[0].mxu0
      %v772 = vadd.f32 %v207, %v771
      %v773 = vpop.f32.mrb[0].mxu0
      %v774 = vpop.f32.mrb[0].mxu0
      %v775 = vpop.f32.mrb[0].mxu0
      %776 = vdwg.mxu0
      %v777 = vtanh.pop %v690
      %v778 = vtanh.pop %v692
      %v779 = vtanh.pop %v731
      %v780 = vtanh.pop %v733
      %v781 = vtanh.pop %v772
      %v782 = vadd.f32 %v479, %v777
      %v783 = vadd.f32 %v480, %v778
      %v784 = vadd.f32 %v481, %v779
      %v785 = vadd.f32 %v482, %v780
      %v786 = vadd.f32 %v483, %v781
      %s787 = scalar_lea.vmem %s165, 400
      %v788 = vld [vmem:[%s787] sm:$0xff]
      %v789 = vld [vmem:[%s787 + $0x8] sm:$0xff]
      %v790 = vld [vmem:[%s787 + $0x10] sm:$0xf]
      %v791 = vld [vmem:[%s787 + $0x14] sm:$0xff]
      %v792 = vld [vmem:[%s787 + $0x1c] sm:$0xff]
      %v793 = vld [vmem:[%s787 + $0x24] sm:$0xf]
      %v794 = vld [vmem:[%s787 + $0x28] sm:$0xff]
      %v795 = vld [vmem:[%s787 + $0x30] sm:$0xff]
      %v796 = vld [vmem:[%s787 + $0x38] sm:$0xf]
      %v797 = vld [vmem:[%s787 + $0x3c] sm:$0xff]
      %v798 = vld [vmem:[%s787 + $0x44] sm:$0xff]
      %v799 = vld [vmem:[%s787 + $0x4c] sm:$0xf]
      %v800 = vld [vmem:[%s787 + $0x50] sm:$0xff]
      %v801 = vld [vmem:[%s787 + $0x58] sm:$0xff]
      %v802 = vld [vmem:[%s787 + $0x60] sm:$0xf]
      %v803 = vld [vmem:[%s787 + $0x64] sm:$0xff]
      %v804 = vld [vmem:[%s787 + $0x6c] sm:$0xff]
      %v805 = vld [vmem:[%s787 + $0x74] sm:$0xf]
      %v806 = vld [vmem:[%s787 + $0x78] sm:$0xff]
      %v807 = vld [vmem:[%s787 + $0x80] sm:$0xff]
      %v808 = vld [vmem:[%s787 + $0x88] sm:$0xf]
      %v809 = vld [vmem:[%s787 + $0x8c] sm:$0xff]
      %v810 = vld [vmem:[%s787 + $0x94] sm:$0xff]
      %v811 = vld [vmem:[%s787 + $0x9c] sm:$0xf]
      %v812 = vld [vmem:[%s787 + $0xa0] sm:$0xff]
      %v813 = vld [vmem:[%s787 + $0xa8] sm:$0xff]
      %v814 = vld [vmem:[%s787 + $0xb0] sm:$0xf]
      %v815 = vld [vmem:[%s787 + $0xb4] sm:$0x33]
      %v816 = vld [vmem:[%s787 + $0xbc] sm:$0x33]
      %v817 = vld [vmem:[%s787 + $0xc4] sm:$0x3]
      %v848 = vunpack.c.l.b16 %v788
      %v849 = vunpack.c.h.b16 %v788
      %v850 = vunpack.c.l.b16 %v789
      %v851 = vunpack.c.h.b16 %v789
      %v852 = vunpack.c.l.b16 %v790
      %v853 = vunpack.c.l.b16 %v791
      %v854 = vunpack.c.h.b16 %v791
      %v855 = vunpack.c.l.b16 %v792
      %v856 = vunpack.c.h.b16 %v792
      %v857 = vunpack.c.l.b16 %v793
      %v858 = vunpack.c.l.b16 %v794
      %v859 = vunpack.c.h.b16 %v794
      %v860 = vunpack.c.l.b16 %v795
      %v861 = vunpack.c.h.b16 %v795
      %v862 = vunpack.c.l.b16 %v796
      %v863 = vunpack.c.l.b16 %v797
      %v864 = vunpack.c.h.b16 %v797
      %v865 = vunpack.c.l.b16 %v798
      %v866 = vunpack.c.h.b16 %v798
      %v867 = vunpack.c.l.b16 %v799
      %v868 = vunpack.c.l.b16 %v800
      %v869 = vunpack.c.h.b16 %v800
      %v870 = vunpack.c.l.b16 %v801
      %v871 = vunpack.c.h.b16 %v801
      %v872 = vunpack.c.l.b16 %v802
      %v873 = vunpack.c.l.b16 %v803
      %v874 = vunpack.c.h.b16 %v803
      %v875 = vunpack.c.l.b16 %v804
      %v876 = vunpack.c.h.b16 %v804
      %v877 = vunpack.c.l.b16 %v805
      %v878 = vunpack.c.l.b16 %v806
      %v879 = vunpack.c.h.b16 %v806
      %v880 = vunpack.c.l.b16 %v807
      %v881 = vunpack.c.h.b16 %v807
      %v882 = vunpack.c.l.b16 %v808
      %v883 = vunpack.c.l.b16 %v809
      %v884 = vunpack.c.h.b16 %v809
      %v885 = vunpack.c.l.b16 %v810
      %v886 = vunpack.c.h.b16 %v810
      %v887 = vunpack.c.l.b16 %v811
      %v888 = vunpack.c.l.b16 %v812
      %v889 = vunpack.c.h.b16 %v812
      %v890 = vunpack.c.l.b16 %v813
      %v891 = vunpack.c.h.b16 %v813
      %v892 = vunpack.c.l.b16 %v814
      %v893 = vunpack.c.l.b16 %v815
      %v894 = vunpack.c.h.b16 %v815
      %v895 = vunpack.c.l.b16 %v816
      %v896 = vunpack.c.h.b16 %v816
      %v897 = vunpack.c.l.b16 %v817
      %v898 = vpack.c.b16 %v853, %v848
      %v899 = vpack.c.b16 %v854, %v849
      %v900 = vpack.c.b16 %v855, %v850
      %v901 = vpack.c.b16 %v856, %v851
      %v902 = vpack.c.b16 %v857, %v852
      %v903 = vpack.c.b16 %v863, %v858
      %v904 = vpack.c.b16 %v864, %v859
      %v905 = vpack.c.b16 %v865, %v860
      %v906 = vpack.c.b16 %v866, %v861
      %v907 = vpack.c.b16 %v867, %v862
      %v908 = vpack.c.b16 %v873, %v868
      %v909 = vpack.c.b16 %v874, %v869
      %v910 = vpack.c.b16 %v875, %v870
      %v911 = vpack.c.b16 %v876, %v871
      %v912 = vpack.c.b16 %v877, %v872
      %v913 = vpack.c.b16 %v883, %v878
      %v914 = vpack.c.b16 %v884, %v879
      %v915 = vpack.c.b16 %v885, %v880
      %v916 = vpack.c.b16 %v886, %v881
      %v917 = vpack.c.b16 %v887, %v882
      %v918 = vpack.c.b16 %v893, %v888
      %v919 = vpack.c.b16 %v894, %v889
      %v920 = vpack.c.b16 %v895, %v890
      %v921 = vpack.c.b16 %v896, %v891
      %v922 = vpack.c.b16 %v897, %v892
      %v944 = vand.u32 %v918, %v341
      %v947 = vand.u32 %v919, %v341
      %v950 = vand.u32 %v920, %v341
      %v953 = vand.u32 %v921, %v341
      %v956 = vand.u32 %v922, %v341
      %958 = vmatprep.subr.bf16.mxu0 %v899
      %959 = vmatpush1.bf16.msra.mxu0 %v898
      %960 = vmatprep.subr.bf16.mxu0 %v904
      %961 = vmatpush1.bf16.msra.mxu0 %v903
      %962 = vmatprep.subr.bf16.mxu0 %v909
      %963 = vmatpush1.bf16.msra.mxu0 %v908
      %964 = vmatprep.subr.bf16.mxu0 %v914
      %965 = vmatpush1.bf16.msra.mxu0 %v913
      %966 = vmatprep.subr.bf16.mxu0 %v947
      %967 = vmatpush1.bf16.msra.mxu0 %v944
      %968 = vmatprep.subr.bf16.mxu0 0
      %969 = vmatpush1.bf16.msra.mxu0 0
      %970 = vmatprep.subr.bf16.mxu0 0
      %971 = vmatpush1.bf16.msra.mxu0 0
      %972 = vmatprep.subr.bf16.mxu0 0
      %973 = vmatpush1.bf16.msra.mxu0 0
      %974 = vmatprep.subr.bf16.mxu0 0
      %975 = vmatpush1.bf16.msra.mxu0 0
      %976 = vmatprep.subr.bf16.mxu0 0
      %977 = vmatpush1.bf16.msra.mxu0 0
      %978 = vmatprep.subr.bf16.mxu0 0
      %979 = vmatpush1.bf16.msra.mxu0 0
      %980 = vmatprep.subr.bf16.mxu0 0
      %981 = vmatpush1.bf16.msra.mxu0 0
      %982 = vmatprep.subr.bf16.mxu0 0
      %983 = vmatpush1.bf16.msra.mxu0 0
      %984 = vmatprep.subr.bf16.mxu0 0
      %985 = vmatpush1.bf16.msra.mxu0 0
      %986 = vmatprep.subr.bf16.mxu0 0
      %987 = vmatpush1.bf16.msra.mxu0 0
      %988 = vmatprep.subr.bf16.mxu0 0
      %989 = vmatpush1.bf16.msra.mxu0 0
      %990 = vmatprep.mubr.bf16.mxu0 0
      %991 = vmatmul.mubr.bf16.gmra.mrb[0].mxu0 %v336
      %v992 = vpop.f32.mrb[0].mxu0
      %v993 = vadd.f32 %v207, %v992
      %v994 = vpop.f32.mrb[0].mxu0
      %v995 = vadd.f32 %v207, %v994
      %v996 = vpop.f32.mrb[0].mxu0
      %v997 = vpop.f32.mrb[0].mxu0
      %998 = vdwg.mxu0
      %999 = vmatprep.subr.bf16.mxu0 %v901
      %1000 = vmatpush1.bf16.msra.mxu0 %v900
      %1001 = vmatprep.subr.bf16.mxu0 %v906
      %1002 = vmatpush1.bf16.msra.mxu0 %v905
      %1003 = vmatprep.subr.bf16.mxu0 %v911
      %1004 = vmatpush1.bf16.msra.mxu0 %v910
      %1005 = vmatprep.subr.bf16.mxu0 %v916
      %1006 = vmatpush1.bf16.msra.mxu0 %v915
      %1007 = vmatprep.subr.bf16.mxu0 %v953
      %1008 = vmatpush1.bf16.msra.mxu0 %v950
      %1009 = vmatprep.subr.bf16.mxu0 0
      %1010 = vmatpush1.bf16.msra.mxu0 0
      %1011 = vmatprep.subr.bf16.mxu0 0
      %1012 = vmatpush1.bf16.msra.mxu0 0
      %1013 = vmatprep.subr.bf16.mxu0 0
      %1014 = vmatpush1.bf16.msra.mxu0 0
      %1015 = vmatprep.subr.bf16.mxu0 0
      %1016 = vmatpush1.bf16.msra.mxu0 0
      %1017 = vmatprep.subr.bf16.mxu0 0
      %1018 = vmatpush1.bf16.msra.mxu0 0
      %1019 = vmatprep.subr.bf16.mxu0 0
      %1020 = vmatpush1.bf16.msra.mxu0 0
      %1021 = vmatprep.subr.bf16.mxu0 0
      %1022 = vmatpush1.bf16.msra.mxu0 0
      %1023 = vmatprep.subr.bf16.mxu0 0
      %1024 = vmatpush1.bf16.msra.mxu0 0
      %1025 = vmatprep.subr.bf16.mxu0 0
      %1026 = vmatpush1.bf16.msra.mxu0 0
      %1027 = vmatprep.subr.bf16.mxu0 0
      %1028 = vmatpush1.bf16.msra.mxu0 0
      %1029 = vmatprep.subr.bf16.mxu0 0
      %1030 = vmatpush1.bf16.msra.mxu0 0
      %1031 = vmatprep.mubr.bf16.mxu0 0
      %1032 = vmatmul.mubr.bf16.gmra.mrb[0].mxu0 %v336
      %v1033 = vpop.f32.mrb[0].mxu0
      %v1034 = vadd.f32 %v207, %v1033
      %v1035 = vpop.f32.mrb[0].mxu0
      %v1036 = vadd.f32 %v207, %v1035
      %v1037 = vpop.f32.mrb[0].mxu0
      %v1038 = vpop.f32.mrb[0].mxu0
      %1039 = vdwg.mxu0
      %1040 = vmatprep.subr.bf16.mxu0 0
      %1041 = vmatpush1.bf16.msra.mxu0 %v902
      %1042 = vmatprep.subr.bf16.mxu0 0
      %1043 = vmatpush1.bf16.msra.mxu0 %v907
      %1044 = vmatprep.subr.bf16.mxu0 0
      %1045 = vmatpush1.bf16.msra.mxu0 %v912
      %1046 = vmatprep.subr.bf16.mxu0 0
      %1047 = vmatpush1.bf16.msra.mxu0 %v917
      %1048 = vmatprep.subr.bf16.mxu0 0
      %1049 = vmatpush1.bf16.msra.mxu0 %v956
      %1050 = vmatprep.subr.bf16.mxu0 0
      %1051 = vmatpush1.bf16.msra.mxu0 0
      %1052 = vmatprep.subr.bf16.mxu0 0
      %1053 = vmatpush1.bf16.msra.mxu0 0
      %1054 = vmatprep.subr.bf16.mxu0 0
      %1055 = vmatpush1.bf16.msra.mxu0 0
      %1056 = vmatprep.subr.bf16.mxu0 0
      %1057 = vmatpush1.bf16.msra.mxu0 0
      %1058 = vmatprep.subr.bf16.mxu0 0
      %1059 = vmatpush1.bf16.msra.mxu0 0
      %1060 = vmatprep.subr.bf16.mxu0 0
      %1061 = vmatpush1.bf16.msra.mxu0 0
      %1062 = vmatprep.subr.bf16.mxu0 0
      %1063 = vmatpush1.bf16.msra.mxu0 0
      %1064 = vmatprep.subr.bf16.mxu0 0
      %1065 = vmatpush1.bf16.msra.mxu0 0
      %1066 = vmatprep.subr.bf16.mxu0 0
      %1067 = vmatpush1.bf16.msra.mxu0 0
      %1068 = vmatprep.subr.bf16.mxu0 0
      %1069 = vmatpush1.bf16.msra.mxu0 0
      %1070 = vmatprep.subr.bf16.mxu0 0
      %1071 = vmatpush1.bf16.msra.mxu0 0
      %1072 = vmatprep.mubr.bf16.mxu0 0
      %1073 = vmatmul.mubr.bf16.gmra.mrb[0].mxu0 %v336
      %v1074 = vpop.f32.mrb[0].mxu0
      %v1075 = vadd.f32 %v207, %v1074
      %v1076 = vpop.f32.mrb[0].mxu0
      %v1077 = vpop.f32.mrb[0].mxu0
      %v1078 = vpop.f32.mrb[0].mxu0
      %1079 = vdwg.mxu0
      %v1080 = vtanh.pop %v993
      %v1081 = vtanh.pop %v995
      %v1082 = vtanh.pop %v1034
      %v1083 = vtanh.pop %v1036
      %v1084 = vtanh.pop %v1075
      %v1085 = vadd.f32 %v782, %v1080
      %v1086 = vadd.f32 %v783, %v1081
      %v1087 = vadd.f32 %v784, %v1082
      %v1088 = vadd.f32 %v785, %v1083
      %v1089 = vadd.f32 %v786, %v1084
      %s1090 = scalar_lea.vmem %s165, 600
      %v1091 = vld [vmem:[%s1090] sm:$0xff]
      %v1092 = vld [vmem:[%s1090 + $0x8] sm:$0xff]
      %v1093 = vld [vmem:[%s1090 + $0x10] sm:$0xf]
      %v1094 = vld [vmem:[%s1090 + $0x14] sm:$0xff]
      %v1095 = vld [vmem:[%s1090 + $0x1c] sm:$0xff]
      %v1096 = vld [vmem:[%s1090 + $0x24] sm:$0xf]
      %v1097 = vld [vmem:[%s1090 + $0x28] sm:$0xff]
      %v1098 = vld [vmem:[%s1090 + $0x30] sm:$0xff]
      %v1099 = vld [vmem:[%s1090 + $0x38] sm:$0xf]
      %v1100 = vld [vmem:[%s1090 + $0x3c] sm:$0xff]
      %v1101 = vld [vmem:[%s1090 + $0x44] sm:$0xff]
      %v1102 = vld [vmem:[%s1090 + $0x4c] sm:$0xf]
      %v1103 = vld [vmem:[%s1090 + $0x50] sm:$0xff]
      %v1104 = vld [vmem:[%s1090 + $0x58] sm:$0xff]
      %v1105 = vld [vmem:[%s1090 + $0x60] sm:$0xf]
      %v1106 = vld [vmem:[%s1090 + $0x64] sm:$0xff]
      %v1107 = vld [vmem:[%s1090 + $0x6c] sm:$0xff]
      %v1108 = vld [vmem:[%s1090 + $0x74] sm:$0xf]
      %v1109 = vld [vmem:[%s1090 + $0x78] sm:$0xff]
      %v1110 = vld [vmem:[%s1090 + $0x80] sm:$0xff]
      %v1111 = vld [vmem:[%s1090 + $0x88] sm:$0xf]
      %v1112 = vld [vmem:[%s1090 + $0x8c] sm:$0xff]
      %v1113 = vld [vmem:[%s1090 + $0x94] sm:$0xff]
      %v1114 = vld [vmem:[%s1090 + $0x9c] sm:$0xf]
      %v1115 = vld [vmem:[%s1090 + $0xa0] sm:$0xff]
      %v1116 = vld [vmem:[%s1090 + $0xa8] sm:$0xff]
      %v1117 = vld [vmem:[%s1090 + $0xb0] sm:$0xf]
      %v1118 = vld [vmem:[%s1090 + $0xb4] sm:$0x33]
      %v1119 = vld [vmem:[%s1090 + $0xbc] sm:$0x33]
      %v1120 = vld [vmem:[%s1090 + $0xc4] sm:$0x3]
      %v1151 = vunpack.c.l.b16 %v1091
      %v1152 = vunpack.c.h.b16 %v1091
      %v1153 = vunpack.c.l.b16 %v1092
      %v1154 = vunpack.c.h.b16 %v1092
      %v1155 = vunpack.c.l.b16 %v1093
      %v1156 = vunpack.c.l.b16 %v1094
      %v1157 = vunpack.c.h.b16 %v1094
      %v1158 = vunpack.c.l.b16 %v1095
      %v1159 = vunpack.c.h.b16 %v1095
      %v1160 = vunpack.c.l.b16 %v1096
      %v1161 = vunpack.c.l.b16 %v1097
      %v1162 = vunpack.c.h.b16 %v1097
      %v1163 = vunpack.c.l.b16 %v1098
      %v1164 = vunpack.c.h.b16 %v1098
      %v1165 = vunpack.c.l.b16 %v1099
      %v1166 = vunpack.c.l.b16 %v1100
      %v1167 = vunpack.c.h.b16 %v1100
      %v1168 = vunpack.c.l.b16 %v1101
      %v1169 = vunpack.c.h.b16 %v1101
      %v1170 = vunpack.c.l.b16 %v1102
      %v1171 = vunpack.c.l.b16 %v1103
      %v1172 = vunpack.c.h.b16 %v1103
      %v1173 = vunpack.c.l.b16 %v1104
      %v1174 = vunpack.c.h.b16 %v1104
      %v1175 = vunpack.c.l.b16 %v1105
      %v1176 = vunpack.c.l.b16 %v1106
      %v1177 = vunpack.c.h.b16 %v1106
      %v1178 = vunpack.c.l.b16 %v1107
      %v1179 = vunpack.c.h.b16 %v1107
      %v1180 = vunpack.c.l.b16 %v1108
      %v1181 = vunpack.c.l.b16 %v1109
      %v1182 = vunpack.c.h.b16 %v1109
      %v1183 = vunpack.c.l.b16 %v1110
      %v1184 = vunpack.c.h.b16 %v1110
      %v1185 = vunpack.c.l.b16 %v1111
      %v1186 = vunpack.c.l.b16 %v1112
      %v1187 = vunpack.c.h.b16 %v1112
      %v1188 = vunpack.c.l.b16 %v1113
      %v1189 = vunpack.c.h.b16 %v1113
      %v1190 = vunpack.c.l.b16 %v1114
      %v1191 = vunpack.c.l.b16 %v1115
      %v1192 = vunpack.c.h.b16 %v1115
      %v1193 = vunpack.c.l.b16 %v1116
      %v1194 = vunpack.c.h.b16 %v1116
      %v1195 = vunpack.c.l.b16 %v1117
      %v1196 = vunpack.c.l.b16 %v1118
      %v1197 = vunpack.c.h.b16 %v1118
      %v1198 = vunpack.c.l.b16 %v1119
      %v1199 = vunpack.c.h.b16 %v1119
      %v1200 = vunpack.c.l.b16 %v1120
      %v1201 = vpack.c.b16 %v1156, %v1151
      %v1202 = vpack.c.b16 %v1157, %v1152
      %v1203 = vpack.c.b16 %v1158, %v1153
      %v1204 = vpack.c.b16 %v1159, %v1154
      %v1205 = vpack.c.b16 %v1160, %v1155
      %v1206 = vpack.c.b16 %v1166, %v1161
      %v1207 = vpack.c.b16 %v1167, %v1162
      %v1208 = vpack.c.b16 %v1168, %v1163
      %v1209 = vpack.c.b16 %v1169, %v1164
      %v1210 = vpack.c.b16 %v1170, %v1165
      %v1211 = vpack.c.b16 %v1176, %v1171
      %v1212 = vpack.c.b16 %v1177, %v1172
      %v1213 = vpack.c.b16 %v1178, %v1173
      %v1214 = vpack.c.b16 %v1179, %v1174
      %v1215 = vpack.c.b16 %v1180, %v1175
      %v1216 = vpack.c.b16 %v1186, %v1181
      %v1217 = vpack.c.b16 %v1187, %v1182
      %v1218 = vpack.c.b16 %v1188, %v1183
      %v1219 = vpack.c.b16 %v1189, %v1184
      %v1220 = vpack.c.b16 %v1190, %v1185
      %v1221 = vpack.c.b16 %v1196, %v1191
      %v1222 = vpack.c.b16 %v1197, %v1192
      %v1223 = vpack.c.b16 %v1198, %v1193
      %v1224 = vpack.c.b16 %v1199, %v1194
      %v1225 = vpack.c.b16 %v1200, %v1195
      %v1247 = vand.u32 %v1221, %v341
      %v1250 = vand.u32 %v1222, %v341
      %v1253 = vand.u32 %v1223, %v341
      %v1256 = vand.u32 %v1224, %v341
      %v1259 = vand.u32 %v1225, %v341
      %1261 = vmatprep.subr.bf16.mxu0 %v1202
      %1262 = vmatpush1.bf16.msra.mxu0 %v1201
      %1263 = vmatprep.subr.bf16.mxu0 %v1207
      %1264 = vmatpush1.bf16.msra.mxu0 %v1206
      %1265 = vmatprep.subr.bf16.mxu0 %v1212
      %1266 = vmatpush1.bf16.msra.mxu0 %v1211
      %1267 = vmatprep.subr.bf16.mxu0 %v1217
      %1268 = vmatpush1.bf16.msra.mxu0 %v1216
      %1269 = vmatprep.subr.bf16.mxu0 %v1250
      %1270 = vmatpush1.bf16.msra.mxu0 %v1247
      %1271 = vmatprep.subr.bf16.mxu0 0
      %1272 = vmatpush1.bf16.msra.mxu0 0
      %1273 = vmatprep.subr.bf16.mxu0 0
      %1274 = vmatpush1.bf16.msra.mxu0 0
      %1275 = vmatprep.subr.bf16.mxu0 0
      %1276 = vmatpush1.bf16.msra.mxu0 0
      %1277 = vmatprep.subr.bf16.mxu0 0
      %1278 = vmatpush1.bf16.msra.mxu0 0
      %1279 = vmatprep.subr.bf16.mxu0 0
      %1280 = vmatpush1.bf16.msra.mxu0 0
      %1281 = vmatprep.subr.bf16.mxu0 0
      %1282 = vmatpush1.bf16.msra.mxu0 0
      %1283 = vmatprep.subr.bf16.mxu0 0
      %1284 = vmatpush1.bf16.msra.mxu0 0
      %1285 = vmatprep.subr.bf16.mxu0 0
      %1286 = vmatpush1.bf16.msra.mxu0 0
      %1287 = vmatprep.subr.bf16.mxu0 0
      %1288 = vmatpush1.bf16.msra.mxu0 0
      %1289 = vmatprep.subr.bf16.mxu0 0
      %1290 = vmatpush1.bf16.msra.mxu0 0
      %1291 = vmatprep.subr.bf16.mxu0 0
      %1292 = vmatpush1.bf16.msra.mxu0 0
      %1293 = vmatprep.mubr.bf16.mxu0 0
      %1294 = vmatmul.mubr.bf16.gmra.mrb[0].mxu0 %v336
      %v1295 = vpop.f32.mrb[0].mxu0
      %v1296 = vadd.f32 %v207, %v1295
      %v1297 = vpop.f32.mrb[0].mxu0
      %v1298 = vadd.f32 %v207, %v1297
      %v1299 = vpop.f32.mrb[0].mxu0
      %v1300 = vpop.f32.mrb[0].mxu0
      %1301 = vdwg.mxu0
      %1302 = vmatprep.subr.bf16.mxu0 %v1204
      %1303 = vmatpush1.bf16.msra.mxu0 %v1203
      %1304 = vmatprep.subr.bf16.mxu0 %v1209
      %1305 = vmatpush1.bf16.msra.mxu0 %v1208
      %1306 = vmatprep.subr.bf16.mxu0 %v1214
      %1307 = vmatpush1.bf16.msra.mxu0 %v1213
      %1308 = vmatprep.subr.bf16.mxu0 %v1219
      %1309 = vmatpush1.bf16.msra.mxu0 %v1218
      %1310 = vmatprep.subr.bf16.mxu0 %v1256
      %1311 = vmatpush1.bf16.msra.mxu0 %v1253
      %1312 = vmatprep.subr.bf16.mxu0 0
      %1313 = vmatpush1.bf16.msra.mxu0 0
      %1314 = vmatprep.subr.bf16.mxu0 0
      %1315 = vmatpush1.bf16.msra.mxu0 0
      %1316 = vmatprep.subr.bf16.mxu0 0
      %1317 = vmatpush1.bf16.msra.mxu0 0
      %1318 = vmatprep.subr.bf16.mxu0 0
      %1319 = vmatpush1.bf16.msra.mxu0 0
      %1320 = vmatprep.subr.bf16.mxu0 0
      %1321 = vmatpush1.bf16.msra.mxu0 0
      %1322 = vmatprep.subr.bf16.mxu0 0
      %1323 = vmatpush1.bf16.msra.mxu0 0
      %1324 = vmatprep.subr.bf16.mxu0 0
      %1325 = vmatpush1.bf16.msra.mxu0 0
      %1326 = vmatprep.subr.bf16.mxu0 0
      %1327 = vmatpush1.bf16.msra.mxu0 0
      %1328 = vmatprep.subr.bf16.mxu0 0
      %1329 = vmatpush1.bf16.msra.mxu0 0
      %1330 = vmatprep.subr.bf16.mxu0 0
      %1331 = vmatpush1.bf16.msra.mxu0 0
      %1332 = vmatprep.subr.bf16.mxu0 0
      %1333 = vmatpush1.bf16.msra.mxu0 0
      %1334 = vmatprep.mubr.bf16.mxu0 0
      %1335 = vmatmul.mubr.bf16.gmra.mrb[0].mxu0 %v336
      %v1336 = vpop.f32.mrb[0].mxu0
      %v1337 = vadd.f32 %v207, %v1336
      %v1338 = vpop.f32.mrb[0].mxu0
      %v1339 = vadd.f32 %v207, %v1338
      %v1340 = vpop.f32.mrb[0].mxu0
      %v1341 = vpop.f32.mrb[0].mxu0
      %1342 = vdwg.mxu0
      %1343 = vmatprep.subr.bf16.mxu0 0
      %1344 = vmatpush1.bf16.msra.mxu0 %v1205
      %1345 = vmatprep.subr.bf16.mxu0 0
      %1346 = vmatpush1.bf16.msra.mxu0 %v1210
      %1347 = vmatprep.subr.bf16.mxu0 0
      %1348 = vmatpush1.bf16.msra.mxu0 %v1215
      %1349 = vmatprep.subr.bf16.mxu0 0
      %1350 = vmatpush1.bf16.msra.mxu0 %v1220
      %1351 = vmatprep.subr.bf16.mxu0 0
      %1352 = vmatpush1.bf16.msra.mxu0 %v1259
      %1353 = vmatprep.subr.bf16.mxu0 0
      %1354 = vmatpush1.bf16.msra.mxu0 0
      %1355 = vmatprep.subr.bf16.mxu0 0
      %1356 = vmatpush1.bf16.msra.mxu0 0
      %1357 = vmatprep.subr.bf16.mxu0 0
      %1358 = vmatpush1.bf16.msra.mxu0 0
      %1359 = vmatprep.subr.bf16.mxu0 0
      %1360 = vmatpush1.bf16.msra.mxu0 0
      %1361 = vmatprep.subr.bf16.mxu0 0
      %1362 = vmatpush1.bf16.msra.mxu0 0
      %1363 = vmatprep.subr.bf16.mxu0 0
      %1364 = vmatpush1.bf16.msra.mxu0 0
      %1365 = vmatprep.subr.bf16.mxu0 0
      %1366 = vmatpush1.bf16.msra.mxu0 0
      %1367 = vmatprep.subr.bf16.mxu0 0
      %1368 = vmatpush1.bf16.msra.mxu0 0
      %1369 = vmatprep.subr.bf16.mxu0 0
      %1370 = vmatpush1.bf16.msra.mxu0 0
      %1371 = vmatprep.subr.bf16.mxu0 0
      %1372 = vmatpush1.bf16.msra.mxu0 0
      %1373 = vmatprep.subr.bf16.mxu0 0
      %1374 = vmatpush1.bf16.msra.mxu0 0
      %1375 = vmatprep.mubr.bf16.mxu0 0
      %1376 = vmatmul.mubr.bf16.gmra.mrb[0].mxu0 %v336
      %v1377 = vpop.f32.mrb[0].mxu0
      %v1378 = vadd.f32 %v207, %v1377
      %v1379 = vpop.f32.mrb[0].mxu0
      %v1380 = vpop.f32.mrb[0].mxu0
      %v1381 = vpop.f32.mrb[0].mxu0
      %1382 = vdwg.mxu0
      %v1383 = vtanh.pop %v1296
      %v1384 = vtanh.pop %v1298
      %v1385 = vtanh.pop %v1337
      %v1386 = vtanh.pop %v1339
      %v1387 = vtanh.pop %v1378
      %v1388 = vadd.f32 %v1085, %v1383
      %v1389 = vadd.f32 %v1086, %v1384
      %v1390 = vadd.f32 %v1087, %v1385
      %v1391 = vadd.f32 %v1088, %v1386
      %v1392 = vadd.f32 %v1089, %v1387
      %v1393 = vmul.f32 %v1388, 0.25
      %v1394 = vmul.f32 %v1389, 0.25
      %v1395 = vmul.f32 %v1390, 0.25
      %v1396 = vmul.f32 %v1391, 0.25
      %v1397 = vmul.f32 %v1392, 0.25
      %v1398 = vpack.c.bf16 %v1393, %v1393
      %v1399 = vpack.c.bf16 %v1394, %v1394
      %v1400 = vpack.c.bf16 %v1395, %v1395
      %v1401 = vpack.c.bf16 %v1396, %v1396
      %v1402 = vpack.c.bf16 %v1397, %v1397
      %v1408 = vunpack.c.l.b16 %v1398
      %v1409 = vunpack.c.l.b16 %v1399
      %v1410 = vunpack.c.l.b16 %v1400
      %v1411 = vunpack.c.l.b16 %v1401
      %v1412 = vunpack.c.l.b16 %v1402
      %v1413 = vpack.c.b16 %v1409, %v1408
      %v1414 = vpack.c.b16 %v1411, %v1410
      %v1415 = vpack.c.b16 %v1412, %v1412
      %1419 = vst [vmem:[%s170] sm:$0x77] %v1413
      %1420 = vst [vmem:[%s170 + $0x8] sm:$0x77] %v1414
      %vm1421 = vcmask 919552
      %1422 = vst.msk [vmem:[%s170 + $0x10] sm:$0x7] %vm1421, %v1415
      %p1423 = scmp.lt.s32.totalorder %s14, 1
      %s1424 = scalar_select %p1423, %s14, 1
      %s1425 = smul.addr %s1424, 5
      %s1426 = smul.addr %s1425, 4
      %s1427 = scalar_lea.vmem %s3, %s1426
      // Predicated region
      $region33: #{cnn_forward.2} parent=31 // pred_check
        %p1428 = pneg %p100
      $region34: #{cnn_forward.2} parent=31 // pred_check_branch
        %1430 = sbr.rel (%p1428) target = $region36
      $region35: #{cnn_forward.2} parent=31 // pred_region
        _
      $region36: #{cnn_forward.2} parent=31 // pred_fallthru
        _
    $region32: #{cnn_forward.2} parent=5 // pred_fallthru
      _
    %p1431 = scmp.le.s32.totalorder 2, %s9
    // Predicated region
    $region37: #{cnn_forward.2} parent=5 // pred_check
      %p1432 = pneg %p1431
    $region38: #{cnn_forward.2} parent=5 // pred_check_branch
      %1434 = sbr.rel (%p1432) target = $region40
    $region39: #{cnn_forward.2} parent=5 // pred_region
      %s1435 = ssub.s32 %s9, 2
      // Predicated region
      $region41: #{cnn_forward.2} parent=39 // pred_check
        %p1436 = pneg %p106
      $region42: #{cnn_forward.2} parent=39 // pred_check_branch
        %1438 = sbr.rel (%p1436) target = $region44
      $region43: #{cnn_forward.2} parent=39 // pred_region
        %p1439 = scmp.lt.s32.totalorder %s15, 1
        %s1440 = scalar_select %p1439, %s15, 1
        %s1441 = smul.addr %s1440, 5
        %s1442 = smul.addr %s1441, 4
        %s1443 = scalar_lea.vmem %s3, %s1442
      $region44: #{cnn_forward.2} parent=39 // pred_fallthru
        _
    $region40: #{cnn_forward.2} parent=5 // pred_fallthru
      _
  $region6: #{cnn_forward.2} parent=0 // loop_footer
    %s13 = sadd.s32 1, %s9
  $region7: #{cnn_forward.2} parent=0 // loop_footer_branch
    %8 = sbr.rel target = $region3
  $region8: #{cnn_forward.2} parent=0 // loop_exit
    _

// kernel: cnn_forward.3
$region0: #{cnn_forward.3}
  #allocation0 [shape = 'u32[]', space=smem, size = 0x4, offset = 0x4, fixed_abs, tag = 'smem constant byte address 0x4 - core index']
  #allocation1 [shape = 'u32[144,128]{1,0:T(1,128)}', space=vmem, size = 0x12000, scoped, tag = 'internal scratch']
  #allocation2 [shape = 'f32[1,1]{1,0:T(1,128)S(1)}', space=vmem, size = 0x200, scoped, tag = 'scoped memory for cnn_forward.3']
  %s0 = inlined_call_operand.vmem [shape: bf16[2,4,150,16], index: 0, kind: input, shape index: {}]
  %s1 = inlined_call_operand.vmem [shape: bf16[16,150], index: 1, kind: input, shape index: {}]
  %s2 = inlined_call_operand.vmem [shape: f32[16,1], index: 2, kind: input, shape index: {}]
  %s3 = inlined_call_operand.vmem [shape: f32[16,16,120], index: 3, kind: input, shape index: {}]
  %s4 = inlined_call_operand.vmem [shape: f32[1,120], index: 4, kind: input, shape index: {}]
  %s5 = inlined_call_operand.vmem [shape: f32[120,84], index: 5, kind: input, shape index: {}]
  %s6 = inlined_call_operand.vmem [shape: f32[1,84], index: 6, kind: input, shape index: {}]
  %s7 = inlined_call_operand.vmem [shape: f32[1,84], index: 7, kind: input, shape index: {}]
  %s8 = inlined_call_operand.<no memory space> [shape: f32[1,1], index: 8, kind: input, shape index: {}]
  %s9 = inlined_call_operand.vmem [shape: f32[2,1], index: 9, kind: output, shape index: {}]
  %s10 = sld [smem:[#allocation0]]
  $region46: #{cnn_forward.3} parent=0
    _
  %s12 = ssub.s32 1, %s10
  %s13 = scalar_select 0, %s12, %s10
  %v14 = vstv %s8
  %15 = vst [vmem:[#allocation2] sm:$0x1] %v14
  // Predicated region
  $region2: #{cnn_forward.3} parent=0 // pred_check
    _
  $region3: #{cnn_forward.3} parent=0 // pred_check_branch
    %17 = sbr.rel (0) target = $region5
  $region4: #{cnn_forward.3} parent=0 // pred_region
    _
  $region5: #{cnn_forward.3} parent=0 // pred_fallthru
    _
  // Predicated region
  $region6: #{cnn_forward.3} parent=0 // pred_check
    _
  $region7: #{cnn_forward.3} parent=0 // pred_check_branch
    %19 = sbr.rel (0) target = $region9
  $region8: #{cnn_forward.3} parent=0 // pred_region
    _
  $region9: #{cnn_forward.3} parent=0 // pred_fallthru
    _
  // Predicated region
  $region10: #{cnn_forward.3} parent=0 // pred_check
    _
  $region11: #{cnn_forward.3} parent=0 // pred_check_branch
    %21 = sbr.rel (0) target = $region13
  $region12: #{cnn_forward.3} parent=0 // pred_region
    _
  $region13: #{cnn_forward.3} parent=0 // pred_fallthru
    _
  // Predicated region
  $region14: #{cnn_forward.3} parent=0 // pred_check
    _
  $region15: #{cnn_forward.3} parent=0 // pred_check_branch
    %23 = sbr.rel (0) target = $region17
  $region16: #{cnn_forward.3} parent=0 // pred_region
    _
  $region17: #{cnn_forward.3} parent=0 // pred_fallthru
    _
  // Predicated region
  $region18: #{cnn_forward.3} parent=0 // pred_check
    _
  $region19: #{cnn_forward.3} parent=0 // pred_check_branch
    %25 = sbr.rel (0) target = $region21
  $region20: #{cnn_forward.3} parent=0 // pred_region
    _
  $region21: #{cnn_forward.3} parent=0 // pred_fallthru
    _
  // Predicated region
  $region22: #{cnn_forward.3} parent=0 // pred_check
    _
  $region23: #{cnn_forward.3} parent=0 // pred_check_branch
    %27 = sbr.rel (0) target = $region25
  $region24: #{cnn_forward.3} parent=0 // pred_region
    _
  $region25: #{cnn_forward.3} parent=0 // pred_fallthru
    _
  // Predicated region
  $region26: #{cnn_forward.3} parent=0 // pred_check
    _
  $region27: #{cnn_forward.3} parent=0 // pred_check_branch
    %29 = sbr.rel (0) target = $region29
  $region28: #{cnn_forward.3} parent=0 // pred_region
    _
  $region29: #{cnn_forward.3} parent=0 // pred_fallthru
    _
  // Predicated region
  $region30: #{cnn_forward.3} parent=0 // pred_check
    _
  $region31: #{cnn_forward.3} parent=0 // pred_check_branch
    %31 = sbr.rel (0) target = $region33
  $region32: #{cnn_forward.3} parent=0 // pred_region
    _
  $region33: #{cnn_forward.3} parent=0 // pred_fallthru
    _
  // Predicated region
  $region34: #{cnn_forward.3} parent=0 // pred_check
    _
  $region35: #{cnn_forward.3} parent=0 // pred_check_branch
    %33 = sbr.rel (0) target = $region37
  $region36: #{cnn_forward.3} parent=0 // pred_region
    _
  $region37: #{cnn_forward.3} parent=0 // pred_fallthru
    _
  %v35 = vld [vmem:[%s1] sm:$0xff]
  %v36 = vld [vmem:[%s1 + $0x8] sm:$0xff]
  %v37 = vld [vmem:[%s2] sm:$0xff]
  %v38 = vld [vmem:[%s2 + $0x8] sm:$0xff]
  %v39 = vld [vmem:[%s0] sm:$0xf]
  %v40 = vld [vmem:[%s0 + $0x4] sm:$0xf]
  %v41 = vld [vmem:[%s0 + $0x8] sm:$0xf]
  %v42 = vld [vmem:[%s0 + $0xc] sm:$0xf]
  %v43 = vld [vmem:[%s0 + $0x10] sm:$0xf]
  %v44 = vld [vmem:[%s0 + $0x14] sm:$0xf]
  %v45 = vld [vmem:[%s0 + $0x18] sm:$0xf]
  %v46 = vld [vmem:[%s0 + $0x1c] sm:$0xf]
  %v47 = vld [vmem:[%s0 + $0x20] sm:$0xf]
  %v48 = vld [vmem:[%s0 + $0x24] sm:$0xf]
  %v49 = vld [vmem:[%s0 + $0x28] sm:$0xf]
  %v50 = vld [vmem:[%s0 + $0x2c] sm:$0xf]
  %v51 = vld [vmem:[%s0 + $0x30] sm:$0xf]
  %v52 = vld [vmem:[%s0 + $0x34] sm:$0xf]
  %v53 = vld [vmem:[%s0 + $0x38] sm:$0xf]
  %v54 = vld [vmem:[%s0 + $0x3c] sm:$0xf]
  %v55 = vld [vmem:[%s0 + $0x40] sm:$0xf]
  %v56 = vld [vmem:[%s0 + $0x44] sm:$0xf]
  %v57 = vld [vmem:[%s0 + $0x48] sm:$0x7]
  %59 = vset.pattern.permute.xlu0 0
  %60 = vperm.xlu0 %59, %v37
  %v61 = vpop.permute.xlu0 %60
  %64 = vset.pattern.permute.xlu0 0
  %65 = vperm.xlu0 %64, %v38
  %v66 = vpop.permute.xlu0 %65
  %v70 = vunpack.c.l.b16 %v35
  %v71 = vunpack.c.h.b16 %v35
  %v72 = vunpack.c.l.b16 %v36
  %v73 = vunpack.c.h.b16 %v36
  %v74 = vpack.c.b16 %v72, %v70
  %v75 = vpack.c.b16 %v73, %v71
  %v96 = vunpack.c.l.b16 %v39
  %v97 = vunpack.c.l.b16 %v40
  %v98 = vunpack.c.l.b16 %v41
  %v99 = vunpack.c.l.b16 %v42
  %v100 = vunpack.c.l.b16 %v43
  %v101 = vunpack.c.l.b16 %v44
  %v102 = vunpack.c.l.b16 %v45
  %v103 = vunpack.c.l.b16 %v46
  %v104 = vunpack.c.l.b16 %v47
  %v105 = vunpack.c.l.b16 %v48
  %v106 = vunpack.c.l.b16 %v49
  %v107 = vunpack.c.l.b16 %v50
  %v108 = vunpack.c.l.b16 %v51
  %v109 = vunpack.c.l.b16 %v52
  %v110 = vunpack.c.l.b16 %v53
  %v111 = vunpack.c.l.b16 %v54
  %v112 = vunpack.c.l.b16 %v55
  %v113 = vunpack.c.l.b16 %v56
  %v114 = vunpack.c.l.b16 %v57
  %v115 = vpack.c.b16 %v97, %v96
  %v116 = vpack.c.b16 %v99, %v98
  %v117 = vpack.c.b16 %v101, %v100
  %v118 = vpack.c.b16 %v103, %v102
  %v119 = vpack.c.b16 %v105, %v104
  %v120 = vpack.c.b16 %v107, %v106
  %v121 = vpack.c.b16 %v109, %v108
  %v122 = vpack.c.b16 %v111, %v110
  %v123 = vpack.c.b16 %v113, %v112
  %v124 = vpack.c.b16 %v114, %v114
  %vm134 = vcmask 179200
  %v136 = vsel %vm134, %v75, 0
  %vm138 = vcmask 1042432
  %v140 = vsel %vm138, %v124, 0
  %142 = vmatprep.subr.bf16.mxu0 0
  %143 = vmatpush1.bf16.msra.mxu0 %v115
  %144 = vmatprep.subr.bf16.mxu0 0
  %145 = vmatpush1.bf16.msra.mxu0 %v116
  %146 = vmatprep.subr.bf16.mxu0 0
  %147 = vmatpush1.bf16.msra.mxu0 %v117
  %148 = vmatprep.subr.bf16.mxu0 0
  %149 = vmatpush1.bf16.msra.mxu0 %v118
  %150 = vmatprep.subr.bf16.mxu0 0
  %151 = vmatpush1.bf16.msra.mxu0 %v119
  %152 = vmatprep.subr.bf16.mxu0 0
  %153 = vmatpush1.bf16.msra.mxu0 %v120
  %154 = vmatprep.subr.bf16.mxu0 0
  %155 = vmatpush1.bf16.msra.mxu0 %v121
  %156 = vmatprep.subr.bf16.mxu0 0
  %157 = vmatpush1.bf16.msra.mxu0 %v122
  %158 = vmatprep.subr.bf16.mxu0 0
  %159 = vmatpush1.bf16.msra.mxu0 %v123
  %160 = vmatprep.subr.bf16.mxu0 0
  %161 = vmatpush1.bf16.msra.mxu0 %v140
  %162 = vmatprep.subr.bf16.mxu0 0
  %163 = vmatpush1.bf16.msra.mxu0 0
  %164 = vmatprep.subr.bf16.mxu0 0
  %165 = vmatpush1.bf16.msra.mxu0 0
  %166 = vmatprep.subr.bf16.mxu0 0
  %167 = vmatpush1.bf16.msra.mxu0 0
  %168 = vmatprep.subr.bf16.mxu0 0
  %169 = vmatpush1.bf16.msra.mxu0 0
  %170 = vmatprep.subr.bf16.mxu0 0
  %171 = vmatpush1.bf16.msra.mxu0 0
  %172 = vmatprep.subr.bf16.mxu0 0
  %173 = vmatpush1.bf16.msra.mxu0 0
  %174 = vmatprep.mubr.bf16.mxu0 %v136
  %175 = vmatmul.mubr.bf16.gmra.mrb[0].mxu0 %v74
  %v176 = vpop.f32.mrb[0].mxu0
  %v177 = vadd.f32 %v61, %v176
  %v178 = vpop.f32.mrb[0].mxu0
  %v179 = vpop.f32.mrb[0].mxu0
  %v180 = vadd.f32 %v66, %v179
  %v181 = vpop.f32.mrb[0].mxu0
  %182 = vdwg.mxu0
  %v183 = vtanh.pop %v177
  %v184 = vtanh.pop %v180
  %s185 = scalar_lea.vmem %s0, 76
  %v186 = vld [vmem:[%s185] sm:$0xf]
  %v187 = vld [vmem:[%s185 + $0x4] sm:$0xf]
  %v188 = vld [vmem:[%s185 + $0x8] sm:$0xf]
  %v189 = vld [vmem:[%s185 + $0xc] sm:$0xf]
  %v190 = vld [vmem:[%s185 + $0x10] sm:$0xf]
  %v191 = vld [vmem:[%s185 + $0x14] sm:$0xf]
  %v192 = vld [vmem:[%s185 + $0x18] sm:$0xf]
  %v193 = vld [vmem:[%s185 + $0x1c] sm:$0xf]
  %v194 = vld [vmem:[%s185 + $0x20] sm:$0xf]
  %v195 = vld [vmem:[%s185 + $0x24] sm:$0xf]
  %v196 = vld [vmem:[%s185 + $0x28] sm:$0xf]
  %v197 = vld [vmem:[%s185 + $0x2c] sm:$0xf]
  %v198 = vld [vmem:[%s185 + $0x30] sm:$0xf]
  %v199 = vld [vmem:[%s185 + $0x34] sm:$0xf]
  %v200 = vld [vmem:[%s185 + $0x38] sm:$0xf]
  %v201 = vld [vmem:[%s185 + $0x3c] sm:$0xf]
  %v202 = vld [vmem:[%s185 + $0x40] sm:$0xf]
  %v203 = vld [vmem:[%s185 + $0x44] sm:$0xf]
  %v204 = vld [vmem:[%s185 + $0x48] sm:$0x7]
  %v224 = vunpack.c.l.b16 %v186
  %v225 = vunpack.c.l.b16 %v187
  %v226 = vunpack.c.l.b16 %v188
  %v227 = vunpack.c.l.b16 %v189
  %v228 = vunpack.c.l.b16 %v190
  %v229 = vunpack.c.l.b16 %v191
  %v230 = vunpack.c.l.b16 %v192
  %v231 = vunpack.c.l.b16 %v193
  %v232 = vunpack.c.l.b16 %v194
  %v233 = vunpack.c.l.b16 %v195
  %v234 = vunpack.c.l.b16 %v196
  %v235 = vunpack.c.l.b16 %v197
  %v236 = vunpack.c.l.b16 %v198
  %v237 = vunpack.c.l.b16 %v199
  %v238 = vunpack.c.l.b16 %v200
  %v239 = vunpack.c.l.b16 %v201
  %v240 = vunpack.c.l.b16 %v202
  %v241 = vunpack.c.l.b16 %v203
  %v242 = vunpack.c.l.b16 %v204
  %v243 = vpack.c.b16 %v225, %v224
  %v244 = vpack.c.b16 %v227, %v226
  %v245 = vpack.c.b16 %v229, %v228
  %v246 = vpack.c.b16 %v231, %v230
  %v247 = vpack.c.b16 %v233, %v232
  %v248 = vpack.c.b16 %v235, %v234
  %v249 = vpack.c.b16 %v237, %v236
  %v250 = vpack.c.b16 %v239, %v238
  %v251 = vpack.c.b16 %v241, %v240
  %v252 = vpack.c.b16 %v242, %v242
  %v263 = vsel %vm138, %v252, 0
  %265 = vmatprep.subr.bf16.mxu0 0
  %266 = vmatpush1.bf16.msra.mxu0 %v243
  %267 = vmatprep.subr.bf16.mxu0 0
  %268 = vmatpush1.bf16.msra.mxu0 %v244
  %269 = vmatprep.subr.bf16.mxu0 0
  %270 = vmatpush1.bf16.msra.mxu0 %v245
  %271 = vmatprep.subr.bf16.mxu0 0
  %272 = vmatpush1.bf16.msra.mxu0 %v246
  %273 = vmatprep.subr.bf16.mxu0 0
  %274 = vmatpush1.bf16.msra.mxu0 %v247
  %275 = vmatprep.subr.bf16.mxu0 0
  %276 = vmatpush1.bf16.msra.mxu0 %v248
  %277 = vmatprep.subr.bf16.mxu0 0
  %278 = vmatpush1.bf16.msra.mxu0 %v249
  %279 = vmatprep.subr.bf16.mxu0 0
  %280 = vmatpush1.bf16.msra.mxu0 %v250
  %281 = vmatprep.subr.bf16.mxu0 0
  %282 = vmatpush1.bf16.msra.mxu0 %v251
  %283 = vmatprep.subr.bf16.mxu0 0
  %284 = vmatpush1.bf16.msra.mxu0 %v263
  %285 = vmatprep.subr.bf16.mxu0 0
  %286 = vmatpush1.bf16.msra.mxu0 0
  %287 = vmatprep.subr.bf16.mxu0 0
  %288 = vmatpush1.bf16.msra.mxu0 0
  %289 = vmatprep.subr.bf16.mxu0 0
  %290 = vmatpush1.bf16.msra.mxu0 0
  %291 = vmatprep.subr.bf16.mxu0 0
  %292 = vmatpush1.bf16.msra.mxu0 0
  %293 = vmatprep.subr.bf16.mxu0 0
  %294 = vmatpush1.bf16.msra.mxu0 0
  %295 = vmatprep.subr.bf16.mxu0 0
  %296 = vmatpush1.bf16.msra.mxu0 0
  %297 = vmatprep.mubr.bf16.mxu0 %v136
  %298 = vmatmul.mubr.bf16.gmra.mrb[0].mxu0 %v74
  %v299 = vpop.f32.mrb[0].mxu0
  %v300 = vadd.f32 %v61, %v299
  %v301 = vpop.f32.mrb[0].mxu0
  %v302 = vpop.f32.mrb[0].mxu0
  %v303 = vadd.f32 %v66, %v302
  %v304 = vpop.f32.mrb[0].mxu0
  %305 = vdwg.mxu0
  %v306 = vtanh.pop %v300
  %v307 = vtanh.pop %v303
  %v308 = vadd.f32 %v183, %v306
  %v309 = vadd.f32 %v184, %v307
  %s310 = scalar_lea.vmem %s0, 152
  %v311 = vld [vmem:[%s310] sm:$0xf]
  %v312 = vld [vmem:[%s310 + $0x4] sm:$0xf]
  %v313 = vld [vmem:[%s310 + $0x8] sm:$0xf]
  %v314 = vld [vmem:[%s310 + $0xc] sm:$0xf]
  %v315 = vld [vmem:[%s310 + $0x10] sm:$0xf]
  %v316 = vld [vmem:[%s310 + $0x14] sm:$0xf]
  %v317 = vld [vmem:[%s310 + $0x18] sm:$0xf]
  %v318 = vld [vmem:[%s310 + $0x1c] sm:$0xf]
  %v319 = vld [vmem:[%s310 + $0x20] sm:$0xf]
  %v320 = vld [vmem:[%s310 + $0x24] sm:$0xf]
  %v321 = vld [vmem:[%s310 + $0x28] sm:$0xf]
  %v322 = vld [vmem:[%s310 + $0x2c] sm:$0xf]
  %v323 = vld [vmem:[%s310 + $0x30] sm:$0xf]
  %v324 = vld [vmem:[%s310 + $0x34] sm:$0xf]
  %v325 = vld [vmem:[%s310 + $0x38] sm:$0xf]
  %v326 = vld [vmem:[%s310 + $0x3c] sm:$0xf]
  %v327 = vld [vmem:[%s310 + $0x40] sm:$0xf]
  %v328 = vld [vmem:[%s310 + $0x44] sm:$0xf]
  %v329 = vld [vmem:[%s310 + $0x48] sm:$0x7]
  %v349 = vunpack.c.l.b16 %v311
  %v350 = vunpack.c.l.b16 %v312
  %v351 = vunpack.c.l.b16 %v313
  %v352 = vunpack.c.l.b16 %v314
  %v353 = vunpack.c.l.b16 %v315
  %v354 = vunpack.c.l.b16 %v316
  %v355 = vunpack.c.l.b16 %v317
  %v356 = vunpack.c.l.b16 %v318
  %v357 = vunpack.c.l.b16 %v319
  %v358 = vunpack.c.l.b16 %v320
  %v359 = vunpack.c.l.b16 %v321
  %v360 = vunpack.c.l.b16 %v322
  %v361 = vunpack.c.l.b16 %v323
  %v362 = vunpack.c.l.b16 %v324
  %v363 = vunpack.c.l.b16 %v325
  %v364 = vunpack.c.l.b16 %v326
  %v365 = vunpack.c.l.b16 %v327
  %v366 = vunpack.c.l.b16 %v328
  %v367 = vunpack.c.l.b16 %v329
  %v368 = vpack.c.b16 %v350, %v349
  %v369 = vpack.c.b16 %v352, %v351
  %v370 = vpack.c.b16 %v354, %v353
  %v371 = vpack.c.b16 %v356, %v355
  %v372 = vpack.c.b16 %v358, %v357
  %v373 = vpack.c.b16 %v360, %v359
  %v374 = vpack.c.b16 %v362, %v361
  %v375 = vpack.c.b16 %v364, %v363
  %v376 = vpack.c.b16 %v366, %v365
  %v377 = vpack.c.b16 %v367, %v367
  %v388 = vsel %vm138, %v377, 0
  %390 = vmatprep.subr.bf16.mxu0 0
  %391 = vmatpush1.bf16.msra.mxu0 %v368
  %392 = vmatprep.subr.bf16.mxu0 0
  %393 = vmatpush1.bf16.msra.mxu0 %v369
  %394 = vmatprep.subr.bf16.mxu0 0
  %395 = vmatpush1.bf16.msra.mxu0 %v370
  %396 = vmatprep.subr.bf16.mxu0 0
  %397 = vmatpush1.bf16.msra.mxu0 %v371
  %398 = vmatprep.subr.bf16.mxu0 0
  %399 = vmatpush1.bf16.msra.mxu0 %v372
  %400 = vmatprep.subr.bf16.mxu0 0
  %401 = vmatpush1.bf16.msra.mxu0 %v373
  %402 = vmatprep.subr.bf16.mxu0 0
  %403 = vmatpush1.bf16.msra.mxu0 %v374
  %404 = vmatprep.subr.bf16.mxu0 0
  %405 = vmatpush1.bf16.msra.mxu0 %v375
  %406 = vmatprep.subr.bf16.mxu0 0
  %407 = vmatpush1.bf16.msra.mxu0 %v376
  %408 = vmatprep.subr.bf16.mxu0 0
  %409 = vmatpush1.bf16.msra.mxu0 %v388
  %410 = vmatprep.subr.bf16.mxu0 0
  %411 = vmatpush1.bf16.msra.mxu0 0
  %412 = vmatprep.subr.bf16.mxu0 0
  %413 = vmatpush1.bf16.msra.mxu0 0
  %414 = vmatprep.subr.bf16.mxu0 0
  %415 = vmatpush1.bf16.msra.mxu0 0
  %416 = vmatprep.subr.bf16.mxu0 0
  %417 = vmatpush1.bf16.msra.mxu0 0
  %418 = vmatprep.subr.bf16.mxu0 0
  %419 = vmatpush1.bf16.msra.mxu0 0
  %420 = vmatprep.subr.bf16.mxu0 0
  %421 = vmatpush1.bf16.msra.mxu0 0
  %422 = vmatprep.mubr.bf16.mxu0 %v136
  %423 = vmatmul.mubr.bf16.gmra.mrb[0].mxu0 %v74
  %v424 = vpop.f32.mrb[0].mxu0
  %v425 = vadd.f32 %v61, %v424
  %v426 = vpop.f32.mrb[0].mxu0
  %v427 = vpop.f32.mrb[0].mxu0
  %v428 = vadd.f32 %v66, %v427
  %v429 = vpop.f32.mrb[0].mxu0
  %430 = vdwg.mxu0
  %v431 = vtanh.pop %v425
  %v432 = vtanh.pop %v428
  %v433 = vadd.f32 %v308, %v431
  %v434 = vadd.f32 %v309, %v432
  %s435 = scalar_lea.vmem %s0, 228
  %v436 = vld [vmem:[%s435] sm:$0xf]
  %v437 = vld [vmem:[%s435 + $0x4] sm:$0xf]
  %v438 = vld [vmem:[%s435 + $0x8] sm:$0xf]
  %v439 = vld [vmem:[%s435 + $0xc] sm:$0xf]
  %v440 = vld [vmem:[%s435 + $0x10] sm:$0xf]
  %v441 = vld [vmem:[%s435 + $0x14] sm:$0xf]
  %v442 = vld [vmem:[%s435 + $0x18] sm:$0xf]
  %v443 = vld [vmem:[%s435 + $0x1c] sm:$0xf]
  %v444 = vld [vmem:[%s435 + $0x20] sm:$0xf]
  %v445 = vld [vmem:[%s435 + $0x24] sm:$0xf]
  %v446 = vld [vmem:[%s435 + $0x28] sm:$0xf]
  %v447 = vld [vmem:[%s435 + $0x2c] sm:$0xf]
  %v448 = vld [vmem:[%s435 + $0x30] sm:$0xf]
  %v449 = vld [vmem:[%s435 + $0x34] sm:$0xf]
  %v450 = vld [vmem:[%s435 + $0x38] sm:$0xf]
  %v451 = vld [vmem:[%s435 + $0x3c] sm:$0xf]
  %v452 = vld [vmem:[%s435 + $0x40] sm:$0xf]
  %v453 = vld [vmem:[%s435 + $0x44] sm:$0xf]
  %v454 = vld [vmem:[%s435 + $0x48] sm:$0x7]
  %v474 = vunpack.c.l.b16 %v436
  %v475 = vunpack.c.l.b16 %v437
  %v476 = vunpack.c.l.b16 %v438
  %v477 = vunpack.c.l.b16 %v439
  %v478 = vunpack.c.l.b16 %v440
  %v479 = vunpack.c.l.b16 %v441
  %v480 = vunpack.c.l.b16 %v442
  %v481 = vunpack.c.l.b16 %v443
  %v482 = vunpack.c.l.b16 %v444
  %v483 = vunpack.c.l.b16 %v445
  %v484 = vunpack.c.l.b16 %v446
  %v485 = vunpack.c.l.b16 %v447
  %v486 = vunpack.c.l.b16 %v448
  %v487 = vunpack.c.l.b16 %v449
  %v488 = vunpack.c.l.b16 %v450
  %v489 = vunpack.c.l.b16 %v451
  %v490 = vunpack.c.l.b16 %v452
  %v491 = vunpack.c.l.b16 %v453
  %v492 = vunpack.c.l.b16 %v454
  %v493 = vpack.c.b16 %v475, %v474
  %v494 = vpack.c.b16 %v477, %v476
  %v495 = vpack.c.b16 %v479, %v478
  %v496 = vpack.c.b16 %v481, %v480
  %v497 = vpack.c.b16 %v483, %v482
  %v498 = vpack.c.b16 %v485, %v484
  %v499 = vpack.c.b16 %v487, %v486
  %v500 = vpack.c.b16 %v489, %v488
  %v501 = vpack.c.b16 %v491, %v490
  %v502 = vpack.c.b16 %v492, %v492
  %v513 = vsel %vm138, %v502, 0
  %515 = vmatprep.subr.bf16.mxu0 0
  %516 = vmatpush1.bf16.msra.mxu0 %v493
  %517 = vmatprep.subr.bf16.mxu0 0
  %518 = vmatpush1.bf16.msra.mxu0 %v494
  %519 = vmatprep.subr.bf16.mxu0 0
  %520 = vmatpush1.bf16.msra.mxu0 %v495
  %521 = vmatprep.subr.bf16.mxu0 0
  %522 = vmatpush1.bf16.msra.mxu0 %v496
  %523 = vmatprep.subr.bf16.mxu0 0
  %524 = vmatpush1.bf16.msra.mxu0 %v497
  %525 = vmatprep.subr.bf16.mxu0 0
  %526 = vmatpush1.bf16.msra.mxu0 %v498
  %527 = vmatprep.subr.bf16.mxu0 0
  %528 = vmatpush1.bf16.msra.mxu0 %v499
  %529 = vmatprep.subr.bf16.mxu0 0
  %530 = vmatpush1.bf16.msra.mxu0 %v500
  %531 = vmatprep.subr.bf16.mxu0 0
  %532 = vmatpush1.bf16.msra.mxu0 %v501
  %533 = vmatprep.subr.bf16.mxu0 0
  %534 = vmatpush1.bf16.msra.mxu0 %v513
  %535 = vmatprep.subr.bf16.mxu0 0
  %536 = vmatpush1.bf16.msra.mxu0 0
  %537 = vmatprep.subr.bf16.mxu0 0
  %538 = vmatpush1.bf16.msra.mxu0 0
  %539 = vmatprep.subr.bf16.mxu0 0
  %540 = vmatpush1.bf16.msra.mxu0 0
  %541 = vmatprep.subr.bf16.mxu0 0
  %542 = vmatpush1.bf16.msra.mxu0 0
  %543 = vmatprep.subr.bf16.mxu0 0
  %544 = vmatpush1.bf16.msra.mxu0 0
  %545 = vmatprep.subr.bf16.mxu0 0
  %546 = vmatpush1.bf16.msra.mxu0 0
  %547 = vmatprep.mubr.bf16.mxu0 %v136
  %548 = vmatmul.mubr.bf16.gmra.mrb[0].mxu0 %v74
  %v549 = vpop.f32.mrb[0].mxu0
  %v550 = vadd.f32 %v61, %v549
  %v551 = vpop.f32.mrb[0].mxu0
  %v552 = vpop.f32.mrb[0].mxu0
  %v553 = vadd.f32 %v66, %v552
  %v554 = vpop.f32.mrb[0].mxu0
  %555 = vdwg.mxu0
  %v556 = vtanh.pop %v550
  %v557 = vtanh.pop %v553
  %v558 = vadd.f32 %v433, %v556
  %v559 = vadd.f32 %v434, %v557
  %v560 = vmul.f32 %v558, 0.25
  %v561 = vmul.f32 %v559, 0.25
  %v562 = vld [vmem:[%s3] sm:$0xff]
  %v563 = vld [vmem:[%s3 + $0x8] sm:$0xff]
  %s564 = scalar_lea.vmem %s3, 16
  %v565 = vld [vmem:[%s564] sm:$0xff]
  %v566 = vld [vmem:[%s564 + $0x8] sm:$0xff]
  %v568 = vrot.slane %v560, 1
  %vm569 = vcmask 130048
  %v570 = vsel %vm569, %v568, 0
  %572 = vmatprep.subr.mxu0 0.0
  %573 = vmatpush1.msra.mxu0 %v565
  %574 = vmatprep.subr.mxu0 0.0
  %575 = vmatpush1.msra.mxu0 %v566
  %576 = vmatprep.subr.mxu0 0.0
  %577 = vmatpush1.msra.mxu0 0.0
  %578 = vmatprep.subr.mxu0 0.0
  %579 = vmatpush1.msra.mxu0 0.0
  %580 = vmatprep.subr.mxu0 0.0
  %581 = vmatpush1.msra.mxu0 0.0
  %582 = vmatprep.subr.mxu0 0.0
  %583 = vmatpush1.msra.mxu0 0.0
  %584 = vmatprep.subr.mxu0 0.0
  %585 = vmatpush1.msra.mxu0 0.0
  %586 = vmatprep.subr.mxu0 0.0
  %587 = vmatpush1.msra.mxu0 0.0
  %588 = vmatprep.subr.mxu0 0.0
  %589 = vmatpush1.msra.mxu0 0.0
  %590 = vmatprep.subr.mxu0 0.0
  %591 = vmatpush1.msra.mxu0 0.0
  %592 = vmatprep.subr.mxu0 0.0
  %593 = vmatpush1.msra.mxu0 0.0
  %594 = vmatprep.subr.mxu0 0.0
  %595 = vmatpush1.msra.mxu0 0.0
  %596 = vmatprep.subr.mxu0 0.0
  %597 = vmatpush1.msra.mxu0 0.0
  %598 = vmatprep.subr.mxu0 0.0
  %599 = vmatpush1.msra.mxu0 0.0
  %600 = vmatprep.subr.mxu0 0.0
  %601 = vmatpush1.msra.mxu0 0.0
  %602 = vmatprep.subr.mxu0 0.0
  %603 = vmatpush1.msra.mxu0 0.0
  %604 = vmatprep.subr.mxu0 0.0
  %605 = vmatpush1.msra.mxu0 0.0
  %606 = vmatprep.subr.mxu0 0.0
  %607 = vmatpush1.msra.mxu0 0.0
  %608 = vmatprep.subr.mxu0 0.0
  %609 = vmatpush1.msra.mxu0 0.0
  %610 = vmatprep.subr.mxu0 0.0
  %611 = vmatpush1.msra.mxu0 0.0
  %612 = vmatprep.subr.mxu0 0.0
  %613 = vmatpush1.msra.mxu0 0.0
  %614 = vmatprep.subr.mxu0 0.0
  %615 = vmatpush1.msra.mxu0 0.0
  %616 = vmatprep.subr.mxu0 0.0
  %617 = vmatpush1.msra.mxu0 0.0
  %618 = vmatprep.subr.mxu0 0.0
  %619 = vmatpush1.msra.mxu0 0.0
  %620 = vmatprep.subr.mxu0 0.0
  %621 = vmatpush1.msra.mxu0 0.0
  %622 = vmatprep.subr.mxu0 0.0
  %623 = vmatpush1.msra.mxu0 0.0
  %624 = vmatprep.subr.mxu0 0.0
  %625 = vmatpush1.msra.mxu0 0.0
  %626 = vmatprep.subr.mxu0 0.0
  %627 = vmatpush1.msra.mxu0 0.0
  %628 = vmatprep.subr.mxu0 0.0
  %629 = vmatpush1.msra.mxu0 0.0
  %630 = vmatprep.subr.mxu0 0.0
  %631 = vmatpush1.msra.mxu0 0.0
  %632 = vmatprep.subr.mxu0 0.0
  %633 = vmatpush1.msra.mxu0 0.0
  %634 = vmatprep.subr.mxu0 0.0
  %635 = vmatpush1.msra.mxu0 0.0
  %636 = vmatprep.mubr.f32.mxu0 0.0
  %637 = vmatmul.mubr.f32.gmra.mrb[0].mxu0 %v570
  %v638 = vpop.f32.mrb[0].mxu0
  %v639 = vadd.f32 0.0, %v638
  %v640 = vpop.f32.mrb[0].mxu0
  %641 = vdwg.mxu0
  %v642 = vsel %vm569, %v560, 0
  %644 = vmatprep.subr.mxu0 0.0
  %645 = vmatpush1.msra.mxu0 %v562
  %646 = vmatprep.subr.mxu0 0.0
  %647 = vmatpush1.msra.mxu0 %v563
  %648 = vmatprep.subr.mxu0 0.0
  %649 = vmatpush1.msra.mxu0 0.0
  %650 = vmatprep.subr.mxu0 0.0
  %651 = vmatpush1.msra.mxu0 0.0
  %652 = vmatprep.subr.mxu0 0.0
  %653 = vmatpush1.msra.mxu0 0.0
  %654 = vmatprep.subr.mxu0 0.0
  %655 = vmatpush1.msra.mxu0 0.0
  %656 = vmatprep.subr.mxu0 0.0
  %657 = vmatpush1.msra.mxu0 0.0
  %658 = vmatprep.subr.mxu0 0.0
  %659 = vmatpush1.msra.mxu0 0.0
  %660 = vmatprep.subr.mxu0 0.0
  %661 = vmatpush1.msra.mxu0 0.0
  %662 = vmatprep.subr.mxu0 0.0
  %663 = vmatpush1.msra.mxu0 0.0
  %664 = vmatprep.subr.mxu0 0.0
  %665 = vmatpush1.msra.mxu0 0.0
  %666 = vmatprep.subr.mxu0 0.0
  %667 = vmatpush1.msra.mxu0 0.0
  %668 = vmatprep.subr.mxu0 0.0
  %669 = vmatpush1.msra.mxu0 0.0
  %670 = vmatprep.subr.mxu0 0.0
  %671 = vmatpush1.msra.mxu0 0.0
  %672 = vmatprep.subr.mxu0 0.0
  %673 = vmatpush1.msra.mxu0 0.0
  %674 = vmatprep.subr.mxu0 0.0
  %675 = vmatpush1.msra.mxu0 0.0
  %676 = vmatprep.subr.mxu0 0.0
  %677 = vmatpush1.msra.mxu0 0.0
  %678 = vmatprep.subr.mxu0 0.0
  %679 = vmatpush1.msra.mxu0 0.0
  %680 = vmatprep.subr.mxu0 0.0
  %681 = vmatpush1.msra.mxu0 0.0
  %682 = vmatprep.subr.mxu0 0.0
  %683 = vmatpush1.msra.mxu0 0.0
  %684 = vmatprep.subr.mxu0 0.0
  %685 = vmatpush1.msra.mxu0 0.0
  %686 = vmatprep.subr.mxu0 0.0
  %687 = vmatpush1.msra.mxu0 0.0
  %688 = vmatprep.subr.mxu0 0.0
  %689 = vmatpush1.msra.mxu0 0.0
  %690 = vmatprep.subr.mxu0 0.0
  %691 = vmatpush1.msra.mxu0 0.0
  %692 = vmatprep.subr.mxu0 0.0
  %693 = vmatpush1.msra.mxu0 0.0
  %694 = vmatprep.subr.mxu0 0.0
  %695 = vmatpush1.msra.mxu0 0.0
  %696 = vmatprep.subr.mxu0 0.0
  %697 = vmatpush1.msra.mxu0 0.0
  %698 = vmatprep.subr.mxu0 0.0
  %699 = vmatpush1.msra.mxu0 0.0
  %700 = vmatprep.subr.mxu0 0.0
  %701 = vmatpush1.msra.mxu0 0.0
  %702 = vmatprep.subr.mxu0 0.0
  %703 = vmatpush1.msra.mxu0 0.0
  %704 = vmatprep.subr.mxu0 0.0
  %705 = vmatpush1.msra.mxu0 0.0
  %706 = vmatprep.subr.mxu0 0.0
  %707 = vmatpush1.msra.mxu0 0.0
  %708 = vmatprep.mubr.f32.mxu0 0.0
  %709 = vmatmul.mubr.f32.gmra.mrb[0].mxu0 %v642
  %v710 = vpop.f32.mrb[0].mxu0
  %v711 = vadd.f32 %v639, %v710
  %v712 = vpop.f32.mrb[0].mxu0
  %713 = vdwg.mxu0
  %s714 = scalar_lea.vmem %s3, 32
  %v715 = vld [vmem:[%s714] sm:$0xff]
  %v716 = vld [vmem:[%s714 + $0x8] sm:$0xff]
  %v717 = vrot.slane %v560, 2
  %v718 = vsel %vm569, %v717, 0
  %720 = vmatprep.subr.mxu0 0.0
  %721 = vmatpush1.msra.mxu0 %v715
  %722 = vmatprep.subr.mxu0 0.0
  %723 = vmatpush1.msra.mxu0 %v716
  %724 = vmatprep.subr.mxu0 0.0
  %725 = vmatpush1.msra.mxu0 0.0
  %726 = vmatprep.subr.mxu0 0.0
  %727 = vmatpush1.msra.mxu0 0.0
  %728 = vmatprep.subr.mxu0 0.0
  %729 = vmatpush1.msra.mxu0 0.0
  %730 = vmatprep.subr.mxu0 0.0
  %731 = vmatpush1.msra.mxu0 0.0
  %732 = vmatprep.subr.mxu0 0.0
  %733 = vmatpush1.msra.mxu0 0.0
  %734 = vmatprep.subr.mxu0 0.0
  %735 = vmatpush1.msra.mxu0 0.0
  %736 = vmatprep.subr.mxu0 0.0
  %737 = vmatpush1.msra.mxu0 0.0
  %738 = vmatprep.subr.mxu0 0.0
  %739 = vmatpush1.msra.mxu0 0.0
  %740 = vmatprep.subr.mxu0 0.0
  %741 = vmatpush1.msra.mxu0 0.0
  %742 = vmatprep.subr.mxu0 0.0
  %743 = vmatpush1.msra.mxu0 0.0
  %744 = vmatprep.subr.mxu0 0.0
  %745 = vmatpush1.msra.mxu0 0.0
  %746 = vmatprep.subr.mxu0 0.0
  %747 = vmatpush1.msra.mxu0 0.0
  %748 = vmatprep.subr.mxu0 0.0
  %749 = vmatpush1.msra.mxu0 0.0
  %750 = vmatprep.subr.mxu0 0.0
  %751 = vmatpush1.msra.mxu0 0.0
  %752 = vmatprep.subr.mxu0 0.0
  %753 = vmatpush1.msra.mxu0 0.0
  %754 = vmatprep.subr.mxu0 0.0
  %755 = vmatpush1.msra.mxu0 0.0
  %756 = vmatprep.subr.mxu0 0.0
  %757 = vmatpush1.msra.mxu0 0.0
  %758 = vmatprep.subr.mxu0 0.0
  %759 = vmatpush1.msra.mxu0 0.0
  %760 = vmatprep.subr.mxu0 0.0
  %761 = vmatpush1.msra.mxu0 0.0
  %762 = vmatprep.subr.mxu0 0.0
  %763 = vmatpush1.msra.mxu0 0.0
  %764 = vmatprep.subr.mxu0 0.0
  %765 = vmatpush1.msra.mxu0 0.0
  %766 = vmatprep.subr.mxu0 0.0
  %767 = vmatpush1.msra.mxu0 0.0
  %768 = vmatprep.subr.mxu0 0.0
  %769 = vmatpush1.msra.mxu0 0.0
  %770 = vmatprep.subr.mxu0 0.0
  %771 = vmatpush1.msra.mxu0 0.0
  %772 = vmatprep.subr.mxu0 0.0
  %773 = vmatpush1.msra.mxu0 0.0
  %774 = vmatprep.subr.mxu0 0.0
  %775 = vmatpush1.msra.mxu0 0.0
  %776 = vmatprep.subr.mxu0 0.0
  %777 = vmatpush1.msra.mxu0 0.0
  %778 = vmatprep.subr.mxu0 0.0
  %779 = vmatpush1.msra.mxu0 0.0
  %780 = vmatprep.subr.mxu0 0.0
  %781 = vmatpush1.msra.mxu0 0.0
  %782 = vmatprep.subr.mxu0 0.0
  %783 = vmatpush1.msra.mxu0 0.0
  %784 = vmatprep.mubr.f32.mxu0 0.0
  %785 = vmatmul.mubr.f32.gmra.mrb[0].mxu0 %v718
  %v786 = vpop.f32.mrb[0].mxu0
  %v787 = vadd.f32 0.0, %v786
  %v788 = vpop.f32.mrb[0].mxu0
  %789 = vdwg.mxu0
  %v790 = vadd.f32 %v711, %v787
  %s791 = scalar_lea.vmem %s3, 48
  %v792 = vld [vmem:[%s791] sm:$0xff]
  %v793 = vld [vmem:[%s791 + $0x8] sm:$0xff]
  %v794 = vrot.slane %v560, 3
  %v795 = vsel %vm569, %v794, 0
  %797 = vmatprep.subr.mxu0 0.0
  %798 = vmatpush1.msra.mxu0 %v792
  %799 = vmatprep.subr.mxu0 0.0
  %800 = vmatpush1.msra.mxu0 %v793
  %801 = vmatprep.subr.mxu0 0.0
  %802 = vmatpush1.msra.mxu0 0.0
  %803 = vmatprep.subr.mxu0 0.0
  %804 = vmatpush1.msra.mxu0 0.0
  %805 = vmatprep.subr.mxu0 0.0
  %806 = vmatpush1.msra.mxu0 0.0
  %807 = vmatprep.subr.mxu0 0.0
  %808 = vmatpush1.msra.mxu0 0.0
  %809 = vmatprep.subr.mxu0 0.0
  %810 = vmatpush1.msra.mxu0 0.0
  %811 = vmatprep.subr.mxu0 0.0
  %812 = vmatpush1.msra.mxu0 0.0
  %813 = vmatprep.subr.mxu0 0.0
  %814 = vmatpush1.msra.mxu0 0.0
  %815 = vmatprep.subr.mxu0 0.0
  %816 = vmatpush1.msra.mxu0 0.0
  %817 = vmatprep.subr.mxu0 0.0
  %818 = vmatpush1.msra.mxu0 0.0
  %819 = vmatprep.subr.mxu0 0.0
  %820 = vmatpush1.msra.mxu0 0.0
  %821 = vmatprep.subr.mxu0 0.0
  %822 = vmatpush1.msra.mxu0 0.0
  %823 = vmatprep.subr.mxu0 0.0
  %824 = vmatpush1.msra.mxu0 0.0
  %825 = vmatprep.subr.mxu0 0.0
  %826 = vmatpush1.msra.mxu0 0.0
  %827 = vmatprep.subr.mxu0 0.0
  %828 = vmatpush1.msra.mxu0 0.0
  %829 = vmatprep.subr.mxu0 0.0
  %830 = vmatpush1.msra.mxu0 0.0
  %831 = vmatprep.subr.mxu0 0.0
  %832 = vmatpush1.msra.mxu0 0.0
  %833 = vmatprep.subr.mxu0 0.0
  %834 = vmatpush1.msra.mxu0 0.0
  %835 = vmatprep.subr.mxu0 0.0
  %836 = vmatpush1.msra.mxu0 0.0
  %837 = vmatprep.subr.mxu0 0.0
  %838 = vmatpush1.msra.mxu0 0.0
  %839 = vmatprep.subr.mxu0 0.0
  %840 = vmatpush1.msra.mxu0 0.0
  %841 = vmatprep.subr.mxu0 0.0
  %842 = vmatpush1.msra.mxu0 0.0
  %843 = vmatprep.subr.mxu0 0.0
  %844 = vmatpush1.msra.mxu0 0.0
  %845 = vmatprep.subr.mxu0 0.0
  %846 = vmatpush1.msra.mxu0 0.0
  %847 = vmatprep.subr.mxu0 0.0
  %848 = vmatpush1.msra.mxu0 0.0
  %849 = vmatprep.subr.mxu0 0.0
  %850 = vmatpush1.msra.mxu0 0.0
  %851 = vmatprep.subr.mxu0 0.0
  %852 = vmatpush1.msra.mxu0 0.0
  %853 = vmatprep.subr.mxu0 0.0
  %854 = vmatpush1.msra.mxu0 0.0
  %855 = vmatprep.subr.mxu0 0.0
  %856 = vmatpush1.msra.mxu0 0.0
  %857 = vmatprep.subr.mxu0 0.0
  %858 = vmatpush1.msra.mxu0 0.0
  %859 = vmatprep.subr.mxu0 0.0
  %860 = vmatpush1.msra.mxu0 0.0
  %861 = vmatprep.mubr.f32.mxu0 0.0
  %862 = vmatmul.mubr.f32.gmra.mrb[0].mxu0 %v795
  %v863 = vpop.f32.mrb[0].mxu0
  %v864 = vadd.f32 0.0, %v863
  %v865 = vpop.f32.mrb[0].mxu0
  %866 = vdwg.mxu0
  %v867 = vadd.f32 %v790, %v864
  %s868 = scalar_lea.vmem %s3, 64
  %v869 = vld [vmem:[%s868] sm:$0xff]
  %v870 = vld [vmem:[%s868 + $0x8] sm:$0xff]
  %v871 = vrot.slane %v560, 4
  %v872 = vsel %vm569, %v871, 0
  %874 = vmatprep.subr.mxu0 0.0
  %875 = vmatpush1.msra.mxu0 %v869
  %876 = vmatprep.subr.mxu0 0.0
  %877 = vmatpush1.msra.mxu0 %v870
  %878 = vmatprep.subr.mxu0 0.0
  %879 = vmatpush1.msra.mxu0 0.0
  %880 = vmatprep.subr.mxu0 0.0
  %881 = vmatpush1.msra.mxu0 0.0
  %882 = vmatprep.subr.mxu0 0.0
  %883 = vmatpush1.msra.mxu0 0.0
  %884 = vmatprep.subr.mxu0 0.0
  %885 = vmatpush1.msra.mxu0 0.0
  %886 = vmatprep.subr.mxu0 0.0
  %887 = vmatpush1.msra.mxu0 0.0
  %888 = vmatprep.subr.mxu0 0.0
  %889 = vmatpush1.msra.mxu0 0.0
  %890 = vmatprep.subr.mxu0 0.0
  %891 = vmatpush1.msra.mxu0 0.0
  %892 = vmatprep.subr.mxu0 0.0
  %893 = vmatpush1.msra.mxu0 0.0
  %894 = vmatprep.subr.mxu0 0.0
  %895 = vmatpush1.msra.mxu0 0.0
  %896 = vmatprep.subr.mxu0 0.0
  %897 = vmatpush1.msra.mxu0 0.0
  %898 = vmatprep.subr.mxu0 0.0
  %899 = vmatpush1.msra.mxu0 0.0
  %900 = vmatprep.subr.mxu0 0.0
  %901 = vmatpush1.msra.mxu0 0.0
  %902 = vmatprep.subr.mxu0 0.0
  %903 = vmatpush1.msra.mxu0 0.0
  %904 = vmatprep.subr.mxu0 0.0
  %905 = vmatpush1.msra.mxu0 0.0
  %906 = vmatprep.subr.mxu0 0.0
  %907 = vmatpush1.msra.mxu0 0.0
  %908 = vmatprep.subr.mxu0 0.0
  %909 = vmatpush1.msra.mxu0 0.0
  %910 = vmatprep.subr.mxu0 0.0
  %911 = vmatpush1.msra.mxu0 0.0
  %912 = vmatprep.subr.mxu0 0.0
  %913 = vmatpush1.msra.mxu0 0.0
  %914 = vmatprep.subr.mxu0 0.0
  %915 = vmatpush1.msra.mxu0 0.0
  %916 = vmatprep.subr.mxu0 0.0
  %917 = vmatpush1.msra.mxu0 0.0
  %918 = vmatprep.subr.mxu0 0.0
  %919 = vmatpush1.msra.mxu0 0.0
  %920 = vmatprep.subr.mxu0 0.0
  %921 = vmatpush1.msra.mxu0 0.0
  %922 = vmatprep.subr.mxu0 0.0
  %923 = vmatpush1.msra.mxu0 0.0
  %924 = vmatprep.subr.mxu0 0.0
  %925 = vmatpush1.msra.mxu0 0.0
  %926 = vmatprep.subr.mxu0 0.0
  %927 = vmatpush1.msra.mxu0 0.0
  %928 = vmatprep.subr.mxu0 0.0
  %929 = vmatpush1.msra.mxu0 0.0
  %930 = vmatprep.subr.mxu0 0.0
  %931 = vmatpush1.msra.mxu0 0.0
  %932 = vmatprep.subr.mxu0 0.0
  %933 = vmatpush1.msra.mxu0 0.0
  %934 = vmatprep.subr.mxu0 0.0
  %935 = vmatpush1.msra.mxu0 0.0
  %936 = vmatprep.subr.mxu0 0.0
  %937 = vmatpush1.msra.mxu0 0.0
  %938 = vmatprep.mubr.f32.mxu0 0.0
  %939 = vmatmul.mubr.f32.gmra.mrb[0].mxu0 %v872
  %v940 = vpop.f32.mrb[0].mxu0
  %v941 = vadd.f32 0.0, %v940
  %v942 = vpop.f32.mrb[0].mxu0
  %943 = vdwg.mxu0
  %v944 = vadd.f32 %v867, %v941
  %s945 = scalar_lea.vmem %s3, 80
  %v946 = vld [vmem:[%s945] sm:$0xff]
  %v947 = vld [vmem:[%s945 + $0x8] sm:$0xff]
  %v948 = vrot.slane %v560, 5
  %v949 = vsel %vm569, %v948, 0
  %951 = vmatprep.subr.mxu0 0.0
  %952 = vmatpush1.msra.mxu0 %v946
  %953 = vmatprep.subr.mxu0 0.0
  %954 = vmatpush1.msra.mxu0 %v947
  %955 = vmatprep.subr.mxu0 0.0
  %956 = vmatpush1.msra.mxu0 0.0
  %957 = vmatprep.subr.mxu0 0.0
  %958 = vmatpush1.msra.mxu0 0.0
  %959 = vmatprep.subr.mxu0 0.0
  %960 = vmatpush1.msra.mxu0 0.0
  %961 = vmatprep.subr.mxu0 0.0
  %962 = vmatpush1.msra.mxu0 0.0
  %963 = vmatprep.subr.mxu0 0.0
  %964 = vmatpush1.msra.mxu0 0.0
  %965 = vmatprep.subr.mxu0 0.0
  %966 = vmatpush1.msra.mxu0 0.0
  %967 = vmatprep.subr.mxu0 0.0
  %968 = vmatpush1.msra.mxu0 0.0
  %969 = vmatprep.subr.mxu0 0.0
  %970 = vmatpush1.msra.mxu0 0.0
  %971 = vmatprep.subr.mxu0 0.0
  %972 = vmatpush1.msra.mxu0 0.0
  %973 = vmatprep.subr.mxu0 0.0
  %974 = vmatpush1.msra.mxu0 0.0
  %975 = vmatprep.subr.mxu0 0.0
  %976 = vmatpush1.msra.mxu0 0.0
  %977 = vmatprep.subr.mxu0 0.0
  %978 = vmatpush1.msra.mxu0 0.0
  %979 = vmatprep.subr.mxu0 0.0
  %980 = vmatpush1.msra.mxu0 0.0
  %981 = vmatprep.subr.mxu0 0.0
  %982 = vmatpush1.msra.mxu0 0.0
  %983 = vmatprep.subr.mxu0 0.0
  %984 = vmatpush1.msra.mxu0 0.0
  %985 = vmatprep.subr.mxu0 0.0
  %986 = vmatpush1.msra.mxu0 0.0
  %987 = vmatprep.subr.mxu0 0.0
  %988 = vmatpush1.msra.mxu0 0.0
  %989 = vmatprep.subr.mxu0 0.0
  %990 = vmatpush1.msra.mxu0 0.0
  %991 = vmatprep.subr.mxu0 0.0
  %992 = vmatpush1.msra.mxu0 0.0
  %993 = vmatprep.subr.mxu0 0.0
  %994 = vmatpush1.msra.mxu0 0.0
  %995 = vmatprep.subr.mxu0 0.0
  %996 = vmatpush1.msra.mxu0 0.0
  %997 = vmatprep.subr.mxu0 0.0
  %998 = vmatpush1.msra.mxu0 0.0
  %999 = vmatprep.subr.mxu0 0.0
  %1000 = vmatpush1.msra.mxu0 0.0
  %1001 = vmatprep.subr.mxu0 0.0
  %1002 = vmatpush1.msra.mxu0 0.0
  %1003 = vmatprep.subr.mxu0 0.0
  %1004 = vmatpush1.msra.mxu0 0.0
  %1005 = vmatprep.subr.mxu0 0.0
  %1006 = vmatpush1.msra.mxu0 0.0
  %1007 = vmatprep.subr.mxu0 0.0
  %1008 = vmatpush1.msra.mxu0 0.0
  %1009 = vmatprep.subr.mxu0 0.0
  %1010 = vmatpush1.msra.mxu0 0.0
  %1011 = vmatprep.subr.mxu0 0.0
  %1012 = vmatpush1.msra.mxu0 0.0
  %1013 = vmatprep.subr.mxu0 0.0
  %1014 = vmatpush1.msra.mxu0 0.0
  %1015 = vmatprep.mubr.f32.mxu0 0.0
  %1016 = vmatmul.mubr.f32.gmra.mrb[0].mxu0 %v949
  %v1017 = vpop.f32.mrb[0].mxu0
  %v1018 = vadd.f32 0.0, %v1017
  %v1019 = vpop.f32.mrb[0].mxu0
  %1020 = vdwg.mxu0
  %v1021 = vadd.f32 %v944, %v1018
  %s1022 = scalar_lea.vmem %s3, 96
  %v1023 = vld [vmem:[%s1022] sm:$0xff]
  %v1024 = vld [vmem:[%s1022 + $0x8] sm:$0xff]
  %v1025 = vrot.slane %v560, 6
  %v1026 = vsel %vm569, %v1025, 0
  %1028 = vmatprep.subr.mxu0 0.0
  %1029 = vmatpush1.msra.mxu0 %v1023
  %1030 = vmatprep.subr.mxu0 0.0
  %1031 = vmatpush1.msra.mxu0 %v1024
  %1032 = vmatprep.subr.mxu0 0.0
  %1033 = vmatpush1.msra.mxu0 0.0
  %1034 = vmatprep.subr.mxu0 0.0
  %1035 = vmatpush1.msra.mxu0 0.0
  %1036 = vmatprep.subr.mxu0 0.0
  %1037 = vmatpush1.msra.mxu0 0.0
  %1038 = vmatprep.subr.mxu0 0.0
  %1039 = vmatpush1.msra.mxu0 0.0
  %1040 = vmatprep.subr.mxu0 0.0
  %1041 = vmatpush1.msra.mxu0 0.0
  %1042 = vmatprep.subr.mxu0 0.0
  %1043 = vmatpush1.msra.mxu0 0.0
  %1044 = vmatprep.subr.mxu0 0.0
  %1045 = vmatpush1.msra.mxu0 0.0
  %1046 = vmatprep.subr.mxu0 0.0
  %1047 = vmatpush1.msra.mxu0 0.0
  %1048 = vmatprep.subr.mxu0 0.0
  %1049 = vmatpush1.msra.mxu0 0.0
  %1050 = vmatprep.subr.mxu0 0.0
  %1051 = vmatpush1.msra.mxu0 0.0
  %1052 = vmatprep.subr.mxu0 0.0
  %1053 = vmatpush1.msra.mxu0 0.0
  %1054 = vmatprep.subr.mxu0 0.0
  %1055 = vmatpush1.msra.mxu0 0.0
  %1056 = vmatprep.subr.mxu0 0.0
  %1057 = vmatpush1.msra.mxu0 0.0
  %1058 = vmatprep.subr.mxu0 0.0
  %1059 = vmatpush1.msra.mxu0 0.0
  %1060 = vmatprep.subr.mxu0 0.0
  %1061 = vmatpush1.msra.mxu0 0.0
  %1062 = vmatprep.subr.mxu0 0.0
  %1063 = vmatpush1.msra.mxu0 0.0
  %1064 = vmatprep.subr.mxu0 0.0
  %1065 = vmatpush1.msra.mxu0 0.0
  %1066 = vmatprep.subr.mxu0 0.0
  %1067 = vmatpush1.msra.mxu0 0.0
  %1068 = vmatprep.subr.mxu0 0.0
  %1069 = vmatpush1.msra.mxu0 0.0
  %1070 = vmatprep.subr.mxu0 0.0
  %1071 = vmatpush1.msra.mxu0 0.0
  %1072 = vmatprep.subr.mxu0 0.0
  %1073 = vmatpush1.msra.mxu0 0.0
  %1074 = vmatprep.subr.mxu0 0.0
  %1075 = vmatpush1.msra.mxu0 0.0
  %1076 = vmatprep.subr.mxu0 0.0
  %1077 = vmatpush1.msra.mxu0 0.0
  %1078 = vmatprep.subr.mxu0 0.0
  %1079 = vmatpush1.msra.mxu0 0.0
  %1080 = vmatprep.subr.mxu0 0.0
  %1081 = vmatpush1.msra.mxu0 0.0
  %1082 = vmatprep.subr.mxu0 0.0
  %1083 = vmatpush1.msra.mxu0 0.0
  %1084 = vmatprep.subr.mxu0 0.0
  %1085 = vmatpush1.msra.mxu0 0.0
  %1086 = vmatprep.subr.mxu0 0.0
  %1087 = vmatpush1.msra.mxu0 0.0
  %1088 = vmatprep.subr.mxu0 0.0
  %1089 = vmatpush1.msra.mxu0 0.0
  %1090 = vmatprep.subr.mxu0 0.0
  %1091 = vmatpush1.msra.mxu0 0.0
  %1092 = vmatprep.mubr.f32.mxu0 0.0
  %1093 = vmatmul.mubr.f32.gmra.mrb[0].mxu0 %v1026
  %v1094 = vpop.f32.mrb[0].mxu0
  %v1095 = vadd.f32 0.0, %v1094
  %v1096 = vpop.f32.mrb[0].mxu0
  %1097 = vdwg.mxu0
  %v1098 = vadd.f32 %v1021, %v1095
  %s1099 = scalar_lea.vmem %s3, 112
  %v1100 = vld [vmem:[%s1099] sm:$0xff]
  %v1101 = vld [vmem:[%s1099 + $0x8] sm:$0xff]
  %v1102 = vrot.slane %v560, 7
  %v1103 = vsel %vm569, %v1102, 0
  %1105 = vmatprep.subr.mxu0 0.0
  %1106 = vmatpush1.msra.mxu0 %v1100
  %1107 = vmatprep.subr.mxu0 0.0
  %1108 = vmatpush1.msra.mxu0 %v1101
  %1109 = vmatprep.subr.mxu0 0.0
  %1110 = vmatpush1.msra.mxu0 0.0
  %1111 = vmatprep.subr.mxu0 0.0
  %1112 = vmatpush1.msra.mxu0 0.0
  %1113 = vmatprep.subr.mxu0 0.0
  %1114 = vmatpush1.msra.mxu0 0.0
  %1115 = vmatprep.subr.mxu0 0.0
  %1116 = vmatpush1.msra.mxu0 0.0
  %1117 = vmatprep.subr.mxu0 0.0
  %1118 = vmatpush1.msra.mxu0 0.0
  %1119 = vmatprep.subr.mxu0 0.0
  %1120 = vmatpush1.msra.mxu0 0.0
  %1121 = vmatprep.subr.mxu0 0.0
  %1122 = vmatpush1.msra.mxu0 0.0
  %1123 = vmatprep.subr.mxu0 0.0
  %1124 = vmatpush1.msra.mxu0 0.0
  %1125 = vmatprep.subr.mxu0 0.0
  %1126 = vmatpush1.msra.mxu0 0.0
  %1127 = vmatprep.subr.mxu0 0.0
  %1128 = vmatpush1.msra.mxu0 0.0
  %1129 = vmatprep.subr.mxu0 0.0
  %1130 = vmatpush1.msra.mxu0 0.0
  %1131 = vmatprep.subr.mxu0 0.0
  %1132 = vmatpush1.msra.mxu0 0.0
  %1133 = vmatprep.subr.mxu0 0.0
  %1134 = vmatpush1.msra.mxu0 0.0
  %1135 = vmatprep.subr.mxu0 0.0
  %1136 = vmatpush1.msra.mxu0 0.0
  %1137 = vmatprep.subr.mxu0 0.0
  %1138 = vmatpush1.msra.mxu0 0.0
  %1139 = vmatprep.subr.mxu0 0.0
  %1140 = vmatpush1.msra.mxu0 0.0
  %1141 = vmatprep.subr.mxu0 0.0
  %1142 = vmatpush1.msra.mxu0 0.0
  %1143 = vmatprep.subr.mxu0 0.0
  %1144 = vmatpush1.msra.mxu0 0.0
  %1145 = vmatprep.subr.mxu0 0.0
  %1146 = vmatpush1.msra.mxu0 0.0
  %1147 = vmatprep.subr.mxu0 0.0
  %1148 = vmatpush1.msra.mxu0 0.0
  %1149 = vmatprep.subr.mxu0 0.0
  %1150 = vmatpush1.msra.mxu0 0.0
  %1151 = vmatprep.subr.mxu0 0.0
  %1152 = vmatpush1.msra.mxu0 0.0
  %1153 = vmatprep.subr.mxu0 0.0
  %1154 = vmatpush1.msra.mxu0 0.0
  %1155 = vmatprep.subr.mxu0 0.0
  %1156 = vmatpush1.msra.mxu0 0.0
  %1157 = vmatprep.subr.mxu0 0.0
  %1158 = vmatpush1.msra.mxu0 0.0
  %1159 = vmatprep.subr.mxu0 0.0
  %1160 = vmatpush1.msra.mxu0 0.0
  %1161 = vmatprep.subr.mxu0 0.0
  %1162 = vmatpush1.msra.mxu0 0.0
  %1163 = vmatprep.subr.mxu0 0.0
  %1164 = vmatpush1.msra.mxu0 0.0
  %1165 = vmatprep.subr.mxu0 0.0
  %1166 = vmatpush1.msra.mxu0 0.0
  %1167 = vmatprep.subr.mxu0 0.0
  %1168 = vmatpush1.msra.mxu0 0.0
  %1169 = vmatprep.mubr.f32.mxu0 0.0
  %1170 = vmatmul.mubr.f32.gmra.mrb[0].mxu0 %v1103
  %v1171 = vpop.f32.mrb[0].mxu0
  %v1172 = vadd.f32 0.0, %v1171
  %v1173 = vpop.f32.mrb[0].mxu0
  %1174 = vdwg.mxu0
  %v1175 = vadd.f32 %v1098, %v1172
  %s1176 = scalar_lea.vmem %s3, 128
  %v1177 = vld [vmem:[%s1176] sm:$0xff]
  %v1178 = vld [vmem:[%s1176 + $0x8] sm:$0xff]
  %v1180 = vsel %vm569, %v561, 0
  %1182 = vmatprep.subr.mxu0 0.0
  %1183 = vmatpush1.msra.mxu0 %v1177
  %1184 = vmatprep.subr.mxu0 0.0
  %1185 = vmatpush1.msra.mxu0 %v1178
  %1186 = vmatprep.subr.mxu0 0.0
  %1187 = vmatpush1.msra.mxu0 0.0
  %1188 = vmatprep.subr.mxu0 0.0
  %1189 = vmatpush1.msra.mxu0 0.0
  %1190 = vmatprep.subr.mxu0 0.0
  %1191 = vmatpush1.msra.mxu0 0.0
  %1192 = vmatprep.subr.mxu0 0.0
  %1193 = vmatpush1.msra.mxu0 0.0
  %1194 = vmatprep.subr.mxu0 0.0
  %1195 = vmatpush1.msra.mxu0 0.0
  %1196 = vmatprep.subr.mxu0 0.0
  %1197 = vmatpush1.msra.mxu0 0.0
  %1198 = vmatprep.subr.mxu0 0.0
  %1199 = vmatpush1.msra.mxu0 0.0
  %1200 = vmatprep.subr.mxu0 0.0
  %1201 = vmatpush1.msra.mxu0 0.0
  %1202 = vmatprep.subr.mxu0 0.0
  %1203 = vmatpush1.msra.mxu0 0.0
  %1204 = vmatprep.subr.mxu0 0.0
  %1205 = vmatpush1.msra.mxu0 0.0
  %1206 = vmatprep.subr.mxu0 0.0
  %1207 = vmatpush1.msra.mxu0 0.0
  %1208 = vmatprep.subr.mxu0 0.0
  %1209 = vmatpush1.msra.mxu0 0.0
  %1210 = vmatprep.subr.mxu0 0.0
  %1211 = vmatpush1.msra.mxu0 0.0
  %1212 = vmatprep.subr.mxu0 0.0
  %1213 = vmatpush1.msra.mxu0 0.0
  %1214 = vmatprep.subr.mxu0 0.0
  %1215 = vmatpush1.msra.mxu0 0.0
  %1216 = vmatprep.subr.mxu0 0.0
  %1217 = vmatpush1.msra.mxu0 0.0
  %1218 = vmatprep.subr.mxu0 0.0
  %1219 = vmatpush1.msra.mxu0 0.0
  %1220 = vmatprep.subr.mxu0 0.0
  %1221 = vmatpush1.msra.mxu0 0.0
  %1222 = vmatprep.subr.mxu0 0.0
  %1223 = vmatpush1.msra.mxu0 0.0
  %1224 = vmatprep.subr.mxu0 0.0
  %1225 = vmatpush1.msra.mxu0 0.0
  %1226 = vmatprep.subr.mxu0 0.0
  %1227 = vmatpush1.msra.mxu0 0.0
  %1228 = vmatprep.subr.mxu0 0.0
  %1229 = vmatpush1.msra.mxu0 0.0
  %1230 = vmatprep.subr.mxu0 0.0
  %1231 = vmatpush1.msra.mxu0 0.0
  %1232 = vmatprep.subr.mxu0 0.0
  %1233 = vmatpush1.msra.mxu0 0.0
  %1234 = vmatprep.subr.mxu0 0.0
  %1235 = vmatpush1.msra.mxu0 0.0
  %1236 = vmatprep.subr.mxu0 0.0
  %1237 = vmatpush1.msra.mxu0 0.0
  %1238 = vmatprep.subr.mxu0 0.0
  %1239 = vmatpush1.msra.mxu0 0.0
  %1240 = vmatprep.subr.mxu0 0.0
  %1241 = vmatpush1.msra.mxu0 0.0
  %1242 = vmatprep.subr.mxu0 0.0
  %1243 = vmatpush1.msra.mxu0 0.0
  %1244 = vmatprep.subr.mxu0 0.0
  %1245 = vmatpush1.msra.mxu0 0.0
  %1246 = vmatprep.mubr.f32.mxu0 0.0
  %1247 = vmatmul.mubr.f32.gmra.mrb[0].mxu0 %v1180
  %v1248 = vpop.f32.mrb[0].mxu0
  %v1249 = vadd.f32 0.0, %v1248
  %v1250 = vpop.f32.mrb[0].mxu0
  %1251 = vdwg.mxu0
  %v1252 = vadd.f32 %v1175, %v1249
  %s1253 = scalar_lea.vmem %s3, 144
  %v1254 = vld [vmem:[%s1253] sm:$0xff]
  %v1255 = vld [vmem:[%s1253 + $0x8] sm:$0xff]
  %v1256 = vrot.slane %v561, 1
  %v1257 = vsel %vm569, %v1256, 0
  %1259 = vmatprep.subr.mxu0 0.0
  %1260 = vmatpush1.msra.mxu0 %v1254
  %1261 = vmatprep.subr.mxu0 0.0
  %1262 = vmatpush1.msra.mxu0 %v1255
  %1263 = vmatprep.subr.mxu0 0.0
  %1264 = vmatpush1.msra.mxu0 0.0
  %1265 = vmatprep.subr.mxu0 0.0
  %1266 = vmatpush1.msra.mxu0 0.0
  %1267 = vmatprep.subr.mxu0 0.0
  %1268 = vmatpush1.msra.mxu0 0.0
  %1269 = vmatprep.subr.mxu0 0.0
  %1270 = vmatpush1.msra.mxu0 0.0
  %1271 = vmatprep.subr.mxu0 0.0
  %1272 = vmatpush1.msra.mxu0 0.0
  %1273 = vmatprep.subr.mxu0 0.0
  %1274 = vmatpush1.msra.mxu0 0.0
  %1275 = vmatprep.subr.mxu0 0.0
  %1276 = vmatpush1.msra.mxu0 0.0
  %1277 = vmatprep.subr.mxu0 0.0
  %1278 = vmatpush1.msra.mxu0 0.0
  %1279 = vmatprep.subr.mxu0 0.0
  %1280 = vmatpush1.msra.mxu0 0.0
  %1281 = vmatprep.subr.mxu0 0.0
  %1282 = vmatpush1.msra.mxu0 0.0
  %1283 = vmatprep.subr.mxu0 0.0
  %1284 = vmatpush1.msra.mxu0 0.0
  %1285 = vmatprep.subr.mxu0 0.0
  %1286 = vmatpush1.msra.mxu0 0.0
  %1287 = vmatprep.subr.mxu0 0.0
  %1288 = vmatpush1.msra.mxu0 0.0
  %1289 = vmatprep.subr.mxu0 0.0
  %1290 = vmatpush1.msra.mxu0 0.0
  %1291 = vmatprep.subr.mxu0 0.0
  %1292 = vmatpush1.msra.mxu0 0.0
  %1293 = vmatprep.subr.mxu0 0.0
  %1294 = vmatpush1.msra.mxu0 0.0
  %1295 = vmatprep.subr.mxu0 0.0
  %1296 = vmatpush1.msra.mxu0 0.0
  %1297 = vmatprep.subr.mxu0 0.0
  %1298 = vmatpush1.msra.mxu0 0.0
  %1299 = vmatprep.subr.mxu0 0.0
  %1300 = vmatpush1.msra.mxu0 0.0
  %1301 = vmatprep.subr.mxu0 0.0
  %1302 = vmatpush1.msra.mxu0 0.0
  %1303 = vmatprep.subr.mxu0 0.0
  %1304 = vmatpush1.msra.mxu0 0.0
  %1305 = vmatprep.subr.mxu0 0.0
  %1306 = vmatpush1.msra.mxu0 0.0
  %1307 = vmatprep.subr.mxu0 0.0
  %1308 = vmatpush1.msra.mxu0 0.0
  %1309 = vmatprep.subr.mxu0 0.0
  %1310 = vmatpush1.msra.mxu0 0.0
  %1311 = vmatprep.subr.mxu0 0.0
  %1312 = vmatpush1.msra.mxu0 0.0
  %1313 = vmatprep.subr.mxu0 0.0
  %1314 = vmatpush1.msra.mxu0 0.0
  %1315 = vmatprep.subr.mxu0 0.0
  %1316 = vmatpush1.msra.mxu0 0.0
  %1317 = vmatprep.subr.mxu0 0.0
  %1318 = vmatpush1.msra.mxu0 0.0
  %1319 = vmatprep.subr.mxu0 0.0
  %1320 = vmatpush1.msra.mxu0 0.0
  %1321 = vmatprep.subr.mxu0 0.0
  %1322 = vmatpush1.msra.mxu0 0.0
  %1323 = vmatprep.mubr.f32.mxu0 0.0
  %1324 = vmatmul.mubr.f32.gmra.mrb[0].mxu0 %v1257
  %v1325 = vpop.f32.mrb[0].mxu0
  %v1326 = vadd.f32 0.0, %v1325
  %v1327 = vpop.f32.mrb[0].mxu0
  %1328 = vdwg.mxu0
  %v1329 = vadd.f32 %v1252, %v1326
  %s1330 = scalar_lea.vmem %s3, 160
  %v1331 = vld [vmem:[%s1330] sm:$0xff]
  %v1332 = vld [vmem:[%s1330 + $0x8] sm:$0xff]
  %v1333 = vrot.slane %v561, 2
  %v1334 = vsel %vm569, %v1333, 0
  %1336 = vmatprep.subr.mxu0 0.0
  %1337 = vmatpush1.msra.mxu0 %v1331
  %1338 = vmatprep.subr.mxu0 0.0
  %1339 = vmatpush1.msra.mxu0 %v1332
  %1340 = vmatprep.subr.mxu0 0.0
  %1341 = vmatpush1.msra.mxu0 0.0
  %1342 = vmatprep.subr.mxu0 0.0
  %1343 = vmatpush1.msra.mxu0 0.0
  %1344 = vmatprep.subr.mxu0 0.0
  %1345 = vmatpush1.msra.mxu0 0.0
  %1346 = vmatprep.subr.mxu0 0.0
  %1347 = vmatpush1.msra.mxu0 0.0
  %1348 = vmatprep.subr.mxu0 0.0
  %1349 = vmatpush1.msra.mxu0 0.0
  %1350 = vmatprep.subr.mxu0 0.0
  %1351 = vmatpush1.msra.mxu0 0.0
  %1352 = vmatprep.subr.mxu0 0.0
  %1353 = vmatpush1.msra.mxu0 0.0
  %1354 = vmatprep.subr.mxu0 0.0
  %1355 = vmatpush1.msra.mxu0 0.0
  %1356 = vmatprep.subr.mxu0 0.0
  %1357 = vmatpush1.msra.mxu0 0.0
  %1358 = vmatprep.subr.mxu0 0.0
  %1359 = vmatpush1.msra.mxu0 0.0
  %1360 = vmatprep.subr.mxu0 0.0
  %1361 = vmatpush1.msra.mxu0 0.0
  %1362 = vmatprep.subr.mxu0 0.0
  %1363 = vmatpush1.msra.mxu0 0.0
  %1364 = vmatprep.subr.mxu0 0.0
  %1365 = vmatpush1.msra.mxu0 0.0
  %1366 = vmatprep.subr.mxu0 0.0
  %1367 = vmatpush1.msra.mxu0 0.0
  %1368 = vmatprep.subr.mxu0 0.0
  %1369 = vmatpush1.msra.mxu0 0.0
  %1370 = vmatprep.subr.mxu0 0.0
  %1371 = vmatpush1.msra.mxu0 0.0
  %1372 = vmatprep.subr.mxu0 0.0
  %1373 = vmatpush1.msra.mxu0 0.0
  %1374 = vmatprep.subr.mxu0 0.0
  %1375 = vmatpush1.msra.mxu0 0.0
  %1376 = vmatprep.subr.mxu0 0.0
  %1377 = vmatpush1.msra.mxu0 0.0
  %1378 = vmatprep.subr.mxu0 0.0
  %1379 = vmatpush1.msra.mxu0 0.0
  %1380 = vmatprep.subr.mxu0 0.0
  %1381 = vmatpush1.msra.mxu0 0.0
  %1382 = vmatprep.subr.mxu0 0.0
  %1383 = vmatpush1.msra.mxu0 0.0
  %1384 = vmatprep.subr.mxu0 0.0
  %1385 = vmatpush1.msra.mxu0 0.0
  %1386 = vmatprep.subr.mxu0 0.0
  %1387 = vmatpush1.msra.mxu0 0.0
  %1388 = vmatprep.subr.mxu0 0.0
  %1389 = vmatpush1.msra.mxu0 0.0
  %1390 = vmatprep.subr.mxu0 0.0
  %1391 = vmatpush1.msra.mxu0 0.0
  %1392 = vmatprep.subr.mxu0 0.0
  %1393 = vmatpush1.msra.mxu0 0.0
  %1394 = vmatprep.subr.mxu0 0.0
  %1395 = vmatpush1.msra.mxu0 0.0
  %1396 = vmatprep.subr.mxu0 0.0
  %1397 = vmatpush1.msra.mxu0 0.0
  %1398 = vmatprep.subr.mxu0 0.0
  %1399 = vmatpush1.msra.mxu0 0.0
  %1400 = vmatprep.mubr.f32.mxu0 0.0
  %1401 = vmatmul.mubr.f32.gmra.mrb[0].mxu0 %v1334
  %v1402 = vpop.f32.mrb[0].mxu0
  %v1403 = vadd.f32 0.0, %v1402
  %v1404 = vpop.f32.mrb[0].mxu0
  %1405 = vdwg.mxu0
  %v1406 = vadd.f32 %v1329, %v1403
  %s1407 = scalar_lea.vmem %s3, 176
  %v1408 = vld [vmem:[%s1407] sm:$0xff]
  %v1409 = vld [vmem:[%s1407 + $0x8] sm:$0xff]
  %v1410 = vrot.slane %v561, 3
  %v1411 = vsel %vm569, %v1410, 0
  %1413 = vmatprep.subr.mxu0 0.0
  %1414 = vmatpush1.msra.mxu0 %v1408
  %1415 = vmatprep.subr.mxu0 0.0
  %1416 = vmatpush1.msra.mxu0 %v1409
  %1417 = vmatprep.subr.mxu0 0.0
  %1418 = vmatpush1.msra.mxu0 0.0
  %1419 = vmatprep.subr.mxu0 0.0
  %1420 = vmatpush1.msra.mxu0 0.0
  %1421 = vmatprep.subr.mxu0 0.0
  %1422 = vmatpush1.msra.mxu0 0.0
  %1423 = vmatprep.subr.mxu0 0.0
  %1424 = vmatpush1.msra.mxu0 0.0
  %1425 = vmatprep.subr.mxu0 0.0
  %1426 = vmatpush1.msra.mxu0 0.0
  %1427 = vmatprep.subr.mxu0 0.0
  %1428 = vmatpush1.msra.mxu0 0.0
  %1429 = vmatprep.subr.mxu0 0.0
  %1430 = vmatpush1.msra.mxu0 0.0
  %1431 = vmatprep.subr.mxu0 0.0
  %1432 = vmatpush1.msra.mxu0 0.0
  %1433 = vmatprep.subr.mxu0 0.0
  %1434 = vmatpush1.msra.mxu0 0.0
  %1435 = vmatprep.subr.mxu0 0.0
  %1436 = vmatpush1.msra.mxu0 0.0
  %1437 = vmatprep.subr.mxu0 0.0
  %1438 = vmatpush1.msra.mxu0 0.0
  %1439 = vmatprep.subr.mxu0 0.0
  %1440 = vmatpush1.msra.mxu0 0.0
  %1441 = vmatprep.subr.mxu0 0.0
  %1442 = vmatpush1.msra.mxu0 0.0
  %1443 = vmatprep.subr.mxu0 0.0
  %1444 = vmatpush1.msra.mxu0 0.0
  %1445 = vmatprep.subr.mxu0 0.0
  %1446 = vmatpush1.msra.mxu0 0.0
  %1447 = vmatprep.subr.mxu0 0.0
  %1448 = vmatpush1.msra.mxu0 0.0
  %1449 = vmatprep.subr.mxu0 0.0
  %1450 = vmatpush1.msra.mxu0 0.0
  %1451 = vmatprep.subr.mxu0 0.0
  %1452 = vmatpush1.msra.mxu0 0.0
  %1453 = vmatprep.subr.mxu0 0.0
  %1454 = vmatpush1.msra.mxu0 0.0
  %1455 = vmatprep.subr.mxu0 0.0
  %1456 = vmatpush1.msra.mxu0 0.0
  %1457 = vmatprep.subr.mxu0 0.0
  %1458 = vmatpush1.msra.mxu0 0.0
  %1459 = vmatprep.subr.mxu0 0.0
  %1460 = vmatpush1.msra.mxu0 0.0
  %1461 = vmatprep.subr.mxu0 0.0
  %1462 = vmatpush1.msra.mxu0 0.0
  %1463 = vmatprep.subr.mxu0 0.0
  %1464 = vmatpush1.msra.mxu0 0.0
  %1465 = vmatprep.subr.mxu0 0.0
  %1466 = vmatpush1.msra.mxu0 0.0
  %1467 = vmatprep.subr.mxu0 0.0
  %1468 = vmatpush1.msra.mxu0 0.0
  %1469 = vmatprep.subr.mxu0 0.0
  %1470 = vmatpush1.msra.mxu0 0.0
  %1471 = vmatprep.subr.mxu0 0.0
  %1472 = vmatpush1.msra.mxu0 0.0
  %1473 = vmatprep.subr.mxu0 0.0
  %1474 = vmatpush1.msra.mxu0 0.0
  %1475 = vmatprep.subr.mxu0 0.0
  %1476 = vmatpush1.msra.mxu0 0.0
  %1477 = vmatprep.mubr.f32.mxu0 0.0
  %1478 = vmatmul.mubr.f32.gmra.mrb[0].mxu0 %v1411
  %v1479 = vpop.f32.mrb[0].mxu0
  %v1480 = vadd.f32 0.0, %v1479
  %v1481 = vpop.f32.mrb[0].mxu0
  %1482 = vdwg.mxu0
  %v1483 = vadd.f32 %v1406, %v1480
  %s1484 = scalar_lea.vmem %s3, 192
  %v1485 = vld [vmem:[%s1484] sm:$0xff]
  %v1486 = vld [vmem:[%s1484 + $0x8] sm:$0xff]
  %v1487 = vrot.slane %v561, 4
  %v1488 = vsel %vm569, %v1487, 0
  %1490 = vmatprep.subr.mxu0 0.0
  %1491 = vmatpush1.msra.mxu0 %v1485
  %1492 = vmatprep.subr.mxu0 0.0
  %1493 = vmatpush1.msra.mxu0 %v1486
  %1494 = vmatprep.subr.mxu0 0.0
  %1495 = vmatpush1.msra.mxu0 0.0
  %1496 = vmatprep.subr.mxu0 0.0
  %1497 = vmatpush1.msra.mxu0 0.0
  %1498 = vmatprep.subr.mxu0 0.0
  %1499 = vmatpush1.msra.mxu0 0.0
  %1500 = vmatprep.subr.mxu0 0.0
  %1501 = vmatpush1.msra.mxu0 0.0
  %1502 = vmatprep.subr.mxu0 0.0
  %1503 = vmatpush1.msra.mxu0 0.0
  %1504 = vmatprep.subr.mxu0 0.0
  %1505 = vmatpush1.msra.mxu0 0.0
  %1506 = vmatprep.subr.mxu0 0.0
  %1507 = vmatpush1.msra.mxu0 0.0
  %1508 = vmatprep.subr.mxu0 0.0
  %1509 = vmatpush1.msra.mxu0 0.0
  %1510 = vmatprep.subr.mxu0 0.0
  %1511 = vmatpush1.msra.mxu0 0.0
  %1512 = vmatprep.subr.mxu0 0.0
  %1513 = vmatpush1.msra.mxu0 0.0
  %1514 = vmatprep.subr.mxu0 0.0
  %1515 = vmatpush1.msra.mxu0 0.0
  %1516 = vmatprep.subr.mxu0 0.0
  %1517 = vmatpush1.msra.mxu0 0.0
  %1518 = vmatprep.subr.mxu0 0.0
  %1519 = vmatpush1.msra.mxu0 0.0
  %1520 = vmatprep.subr.mxu0 0.0
  %1521 = vmatpush1.msra.mxu0 0.0
  %1522 = vmatprep.subr.mxu0 0.0
  %1523 = vmatpush1.msra.mxu0 0.0
  %1524 = vmatprep.subr.mxu0 0.0
  %1525 = vmatpush1.msra.mxu0 0.0
  %1526 = vmatprep.subr.mxu0 0.0
  %1527 = vmatpush1.msra.mxu0 0.0
  %1528 = vmatprep.subr.mxu0 0.0
  %1529 = vmatpush1.msra.mxu0 0.0
  %1530 = vmatprep.subr.mxu0 0.0
  %1531 = vmatpush1.msra.mxu0 0.0
  %1532 = vmatprep.subr.mxu0 0.0
  %1533 = vmatpush1.msra.mxu0 0.0
  %1534 = vmatprep.subr.mxu0 0.0
  %1535 = vmatpush1.msra.mxu0 0.0
  %1536 = vmatprep.subr.mxu0 0.0
  %1537 = vmatpush1.msra.mxu0 0.0
  %1538 = vmatprep.subr.mxu0 0.0
  %1539 = vmatpush1.msra.mxu0 0.0
  %1540 = vmatprep.subr.mxu0 0.0
  %1541 = vmatpush1.msra.mxu0 0.0
  %1542 = vmatprep.subr.mxu0 0.0
  %1543 = vmatpush1.msra.mxu0 0.0
  %1544 = vmatprep.subr.mxu0 0.0
  %1545 = vmatpush1.msra.mxu0 0.0
  %1546 = vmatprep.subr.mxu0 0.0
  %1547 = vmatpush1.msra.mxu0 0.0
  %1548 = vmatprep.subr.mxu0 0.0
  %1549 = vmatpush1.msra.mxu0 0.0
  %1550 = vmatprep.subr.mxu0 0.0
  %1551 = vmatpush1.msra.mxu0 0.0
  %1552 = vmatprep.subr.mxu0 0.0
  %1553 = vmatpush1.msra.mxu0 0.0
  %1554 = vmatprep.mubr.f32.mxu0 0.0
  %1555 = vmatmul.mubr.f32.gmra.mrb[0].mxu0 %v1488
  %v1556 = vpop.f32.mrb[0].mxu0
  %v1557 = vadd.f32 0.0, %v1556
  %v1558 = vpop.f32.mrb[0].mxu0
  %1559 = vdwg.mxu0
  %v1560 = vadd.f32 %v1483, %v1557
  %s1561 = scalar_lea.vmem %s3, 208
  %v1562 = vld [vmem:[%s1561] sm:$0xff]
  %v1563 = vld [vmem:[%s1561 + $0x8] sm:$0xff]
  %v1564 = vrot.slane %v561, 5
  %v1565 = vsel %vm569, %v1564, 0
  %1567 = vmatprep.subr.mxu0 0.0
  %1568 = vmatpush1.msra.mxu0 %v1562
  %1569 = vmatprep.subr.mxu0 0.0
  %1570 = vmatpush1.msra.mxu0 %v1563
  %1571 = vmatprep.subr.mxu0 0.0
  %1572 = vmatpush1.msra.mxu0 0.0
  %1573 = vmatprep.subr.mxu0 0.0
  %1574 = vmatpush1.msra.mxu0 0.0
  %1575 = vmatprep.subr.mxu0 0.0
  %1576 = vmatpush1.msra.mxu0 0.0
  %1577 = vmatprep.subr.mxu0 0.0
  %1578 = vmatpush1.msra.mxu0 0.0
  %1579 = vmatprep.subr.mxu0 0.0
  %1580 = vmatpush1.msra.mxu0 0.0
  %1581 = vmatprep.subr.mxu0 0.0
  %1582 = vmatpush1.msra.mxu0 0.0
  %1583 = vmatprep.subr.mxu0 0.0
  %1584 = vmatpush1.msra.mxu0 0.0
  %1585 = vmatprep.subr.mxu0 0.0
  %1586 = vmatpush1.msra.mxu0 0.0
  %1587 = vmatprep.subr.mxu0 0.0
  %1588 = vmatpush1.msra.mxu0 0.0
  %1589 = vmatprep.subr.mxu0 0.0
  %1590 = vmatpush1.msra.mxu0 0.0
  %1591 = vmatprep.subr.mxu0 0.0
  %1592 = vmatpush1.msra.mxu0 0.0
  %1593 = vmatprep.subr.mxu0 0.0
  %1594 = vmatpush1.msra.mxu0 0.0
  %1595 = vmatprep.subr.mxu0 0.0
  %1596 = vmatpush1.msra.mxu0 0.0
  %1597 = vmatprep.subr.mxu0 0.0
  %1598 = vmatpush1.msra.mxu0 0.0
  %1599 = vmatprep.subr.mxu0 0.0
  %1600 = vmatpush1.msra.mxu0 0.0
  %1601 = vmatprep.subr.mxu0 0.0
  %1602 = vmatpush1.msra.mxu0 0.0
  %1603 = vmatprep.subr.mxu0 0.0
  %1604 = vmatpush1.msra.mxu0 0.0
  %1605 = vmatprep.subr.mxu0 0.0
  %1606 = vmatpush1.msra.mxu0 0.0
  %1607 = vmatprep.subr.mxu0 0.0
  %1608 = vmatpush1.msra.mxu0 0.0
  %1609 = vmatprep.subr.mxu0 0.0
  %1610 = vmatpush1.msra.mxu0 0.0
  %1611 = vmatprep.subr.mxu0 0.0
  %1612 = vmatpush1.msra.mxu0 0.0
  %1613 = vmatprep.subr.mxu0 0.0
  %1614 = vmatpush1.msra.mxu0 0.0
  %1615 = vmatprep.subr.mxu0 0.0
  %1616 = vmatpush1.msra.mxu0 0.0
  %1617 = vmatprep.subr.mxu0 0.0
  %1618 = vmatpush1.msra.mxu0 0.0
  %1619 = vmatprep.subr.mxu0 0.0
  %1620 = vmatpush1.msra.mxu0 0.0
  %1621 = vmatprep.subr.mxu0 0.0
  %1622 = vmatpush1.msra.mxu0 0.0
  %1623 = vmatprep.subr.mxu0 0.0
  %1624 = vmatpush1.msra.mxu0 0.0
  %1625 = vmatprep.subr.mxu0 0.0
  %1626 = vmatpush1.msra.mxu0 0.0
  %1627 = vmatprep.subr.mxu0 0.0
  %1628 = vmatpush1.msra.mxu0 0.0
  %1629 = vmatprep.subr.mxu0 0.0
  %1630 = vmatpush1.msra.mxu0 0.0
  %1631 = vmatprep.mubr.f32.mxu0 0.0
  %1632 = vmatmul.mubr.f32.gmra.mrb[0].mxu0 %v1565
  %v1633 = vpop.f32.mrb[0].mxu0
  %v1634 = vadd.f32 0.0, %v1633
  %v1635 = vpop.f32.mrb[0].mxu0
  %1636 = vdwg.mxu0
  %v1637 = vadd.f32 %v1560, %v1634
  %s1638 = scalar_lea.vmem %s3, 224
  %v1639 = vld [vmem:[%s1638] sm:$0xff]
  %v1640 = vld [vmem:[%s1638 + $0x8] sm:$0xff]
  %v1641 = vrot.slane %v561, 6
  %v1642 = vsel %vm569, %v1641, 0
  %1644 = vmatprep.subr.mxu0 0.0
  %1645 = vmatpush1.msra.mxu0 %v1639
  %1646 = vmatprep.subr.mxu0 0.0
  %1647 = vmatpush1.msra.mxu0 %v1640
  %1648 = vmatprep.subr.mxu0 0.0
  %1649 = vmatpush1.msra.mxu0 0.0
  %1650 = vmatprep.subr.mxu0 0.0
  %1651 = vmatpush1.msra.mxu0 0.0
  %1652 = vmatprep.subr.mxu0 0.0
  %1653 = vmatpush1.msra.mxu0 0.0
  %1654 = vmatprep.subr.mxu0 0.0
  %1655 = vmatpush1.msra.mxu0 0.0
  %1656 = vmatprep.subr.mxu0 0.0
  %1657 = vmatpush1.msra.mxu0 0.0
  %1658 = vmatprep.subr.mxu0 0.0
  %1659 = vmatpush1.msra.mxu0 0.0
  %1660 = vmatprep.subr.mxu0 0.0
  %1661 = vmatpush1.msra.mxu0 0.0
  %1662 = vmatprep.subr.mxu0 0.0
  %1663 = vmatpush1.msra.mxu0 0.0
  %1664 = vmatprep.subr.mxu0 0.0
  %1665 = vmatpush1.msra.mxu0 0.0
  %1666 = vmatprep.subr.mxu0 0.0
  %1667 = vmatpush1.msra.mxu0 0.0
  %1668 = vmatprep.subr.mxu0 0.0
  %1669 = vmatpush1.msra.mxu0 0.0
  %1670 = vmatprep.subr.mxu0 0.0
  %1671 = vmatpush1.msra.mxu0 0.0
  %1672 = vmatprep.subr.mxu0 0.0
  %1673 = vmatpush1.msra.mxu0 0.0
  %1674 = vmatprep.subr.mxu0 0.0
  %1675 = vmatpush1.msra.mxu0 0.0
  %1676 = vmatprep.subr.mxu0 0.0
  %1677 = vmatpush1.msra.mxu0 0.0
  %1678 = vmatprep.subr.mxu0 0.0
  %1679 = vmatpush1.msra.mxu0 0.0
  %1680 = vmatprep.subr.mxu0 0.0
  %1681 = vmatpush1.msra.mxu0 0.0
  %1682 = vmatprep.subr.mxu0 0.0
  %1683 = vmatpush1.msra.mxu0 0.0
  %1684 = vmatprep.subr.mxu0 0.0
  %1685 = vmatpush1.msra.mxu0 0.0
  %1686 = vmatprep.subr.mxu0 0.0
  %1687 = vmatpush1.msra.mxu0 0.0
  %1688 = vmatprep.subr.mxu0 0.0
  %1689 = vmatpush1.msra.mxu0 0.0
  %1690 = vmatprep.subr.mxu0 0.0
  %1691 = vmatpush1.msra.mxu0 0.0
  %1692 = vmatprep.subr.mxu0 0.0
  %1693 = vmatpush1.msra.mxu0 0.0
  %1694 = vmatprep.subr.mxu0 0.0
  %1695 = vmatpush1.msra.mxu0 0.0
  %1696 = vmatprep.subr.mxu0 0.0
  %1697 = vmatpush1.msra.mxu0 0.0
  %1698 = vmatprep.subr.mxu0 0.0
  %1699 = vmatpush1.msra.mxu0 0.0
  %1700 = vmatprep.subr.mxu0 0.0
  %1701 = vmatpush1.msra.mxu0 0.0
  %1702 = vmatprep.subr.mxu0 0.0
  %1703 = vmatpush1.msra.mxu0 0.0
  %1704 = vmatprep.subr.mxu0 0.0
  %1705 = vmatpush1.msra.mxu0 0.0
  %1706 = vmatprep.subr.mxu0 0.0
  %1707 = vmatpush1.msra.mxu0 0.0
  %1708 = vmatprep.mubr.f32.mxu0 0.0
  %1709 = vmatmul.mubr.f32.gmra.mrb[0].mxu0 %v1642
  %v1710 = vpop.f32.mrb[0].mxu0
  %v1711 = vadd.f32 0.0, %v1710
  %v1712 = vpop.f32.mrb[0].mxu0
  %1713 = vdwg.mxu0
  %v1714 = vadd.f32 %v1637, %v1711
  %s1715 = scalar_lea.vmem %s3, 240
  %v1716 = vld [vmem:[%s1715] sm:$0xff]
  %v1717 = vld [vmem:[%s1715 + $0x8] sm:$0xff]
  %v1718 = vrot.slane %v561, 7
  %v1719 = vsel %vm569, %v1718, 0
  %1721 = vmatprep.subr.mxu0 0.0
  %1722 = vmatpush1.msra.mxu0 %v1716
  %1723 = vmatprep.subr.mxu0 0.0
  %1724 = vmatpush1.msra.mxu0 %v1717
  %1725 = vmatprep.subr.mxu0 0.0
  %1726 = vmatpush1.msra.mxu0 0.0
  %1727 = vmatprep.subr.mxu0 0.0
  %1728 = vmatpush1.msra.mxu0 0.0
  %1729 = vmatprep.subr.mxu0 0.0
  %1730 = vmatpush1.msra.mxu0 0.0
  %1731 = vmatprep.subr.mxu0 0.0
  %1732 = vmatpush1.msra.mxu0 0.0
  %1733 = vmatprep.subr.mxu0 0.0
  %1734 = vmatpush1.msra.mxu0 0.0
  %1735 = vmatprep.subr.mxu0 0.0
  %1736 = vmatpush1.msra.mxu0 0.0
  %1737 = vmatprep.subr.mxu0 0.0
  %1738 = vmatpush1.msra.mxu0 0.0
  %1739 = vmatprep.subr.mxu0 0.0
  %1740 = vmatpush1.msra.mxu0 0.0
  %1741 = vmatprep.subr.mxu0 0.0
  %1742 = vmatpush1.msra.mxu0 0.0
  %1743 = vmatprep.subr.mxu0 0.0
  %1744 = vmatpush1.msra.mxu0 0.0
  %1745 = vmatprep.subr.mxu0 0.0
  %1746 = vmatpush1.msra.mxu0 0.0
  %1747 = vmatprep.subr.mxu0 0.0
  %1748 = vmatpush1.msra.mxu0 0.0
  %1749 = vmatprep.subr.mxu0 0.0
  %1750 = vmatpush1.msra.mxu0 0.0
  %1751 = vmatprep.subr.mxu0 0.0
  %1752 = vmatpush1.msra.mxu0 0.0
  %1753 = vmatprep.subr.mxu0 0.0
  %1754 = vmatpush1.msra.mxu0 0.0
  %1755 = vmatprep.subr.mxu0 0.0
  %1756 = vmatpush1.msra.mxu0 0.0
  %1757 = vmatprep.subr.mxu0 0.0
  %1758 = vmatpush1.msra.mxu0 0.0
  %1759 = vmatprep.subr.mxu0 0.0
  %1760 = vmatpush1.msra.mxu0 0.0
  %1761 = vmatprep.subr.mxu0 0.0
  %1762 = vmatpush1.msra.mxu0 0.0
  %1763 = vmatprep.subr.mxu0 0.0
  %1764 = vmatpush1.msra.mxu0 0.0
  %1765 = vmatprep.subr.mxu0 0.0
  %1766 = vmatpush1.msra.mxu0 0.0
  %1767 = vmatprep.subr.mxu0 0.0
  %1768 = vmatpush1.msra.mxu0 0.0
  %1769 = vmatprep.subr.mxu0 0.0
  %1770 = vmatpush1.msra.mxu0 0.0
  %1771 = vmatprep.subr.mxu0 0.0
  %1772 = vmatpush1.msra.mxu0 0.0
  %1773 = vmatprep.subr.mxu0 0.0
  %1774 = vmatpush1.msra.mxu0 0.0
  %1775 = vmatprep.subr.mxu0 0.0
  %1776 = vmatpush1.msra.mxu0 0.0
  %1777 = vmatprep.subr.mxu0 0.0
  %1778 = vmatpush1.msra.mxu0 0.0
  %1779 = vmatprep.subr.mxu0 0.0
  %1780 = vmatpush1.msra.mxu0 0.0
  %1781 = vmatprep.subr.mxu0 0.0
  %1782 = vmatpush1.msra.mxu0 0.0
  %1783 = vmatprep.subr.mxu0 0.0
  %1784 = vmatpush1.msra.mxu0 0.0
  %1785 = vmatprep.mubr.f32.mxu0 0.0
  %1786 = vmatmul.mubr.f32.gmra.mrb[0].mxu0 %v1719
  %v1787 = vpop.f32.mrb[0].mxu0
  %v1788 = vadd.f32 0.0, %v1787
  %v1789 = vpop.f32.mrb[0].mxu0
  %1790 = vdwg.mxu0
  %v1791 = vadd.f32 %v1714, %v1788
  %v1792 = vld [vmem:[%s4] sm:$0x1]
  %v1793 = vadd.f32 %v1791, %v1792
  %v1794 = vtanh.pop %v1793
  %v1795 = vld [vmem:[%s5] sm:$0xff]
  %v1796 = vld [vmem:[%s5 + $0x8] sm:$0xff]
  %v1797 = vld [vmem:[%s5 + $0x10] sm:$0xff]
  %v1798 = vld [vmem:[%s5 + $0x18] sm:$0xff]
  %v1799 = vld [vmem:[%s5 + $0x20] sm:$0xff]
  %v1800 = vld [vmem:[%s5 + $0x28] sm:$0xff]
  %v1801 = vld [vmem:[%s5 + $0x30] sm:$0xff]
  %v1802 = vld [vmem:[%s5 + $0x38] sm:$0xff]
  %v1803 = vld [vmem:[%s5 + $0x40] sm:$0xff]
  %v1804 = vld [vmem:[%s5 + $0x48] sm:$0xff]
  %v1805 = vld [vmem:[%s5 + $0x50] sm:$0xff]
  %v1806 = vld [vmem:[%s5 + $0x58] sm:$0xff]
  %v1807 = vld [vmem:[%s5 + $0x60] sm:$0xff]
  %v1808 = vld [vmem:[%s5 + $0x68] sm:$0xff]
  %v1809 = vld [vmem:[%s5 + $0x70] sm:$0xff]
  %v1810 = vld [vmem:[%s6] sm:$0x1]
  %vm1811 = vcmask 982016
  %v1813 = vsel %vm1811, %v1794, 0
  %1815 = vmatprep.subr.mxu0 0.0
  %1816 = vmatpush1.msra.mxu0 %v1795
  %1817 = vmatprep.subr.mxu0 0.0
  %1818 = vmatpush1.msra.mxu0 %v1796
  %1819 = vmatprep.subr.mxu0 0.0
  %1820 = vmatpush1.msra.mxu0 %v1797
  %1821 = vmatprep.subr.mxu0 0.0
  %1822 = vmatpush1.msra.mxu0 %v1798
  %1823 = vmatprep.subr.mxu0 0.0
  %1824 = vmatpush1.msra.mxu0 %v1799
  %1825 = vmatprep.subr.mxu0 0.0
  %1826 = vmatpush1.msra.mxu0 %v1800
  %1827 = vmatprep.subr.mxu0 0.0
  %1828 = vmatpush1.msra.mxu0 %v1801
  %1829 = vmatprep.subr.mxu0 0.0
  %1830 = vmatpush1.msra.mxu0 %v1802
  %1831 = vmatprep.subr.mxu0 0.0
  %1832 = vmatpush1.msra.mxu0 %v1803
  %1833 = vmatprep.subr.mxu0 0.0
  %1834 = vmatpush1.msra.mxu0 %v1804
  %1835 = vmatprep.subr.mxu0 0.0
  %1836 = vmatpush1.msra.mxu0 %v1805
  %1837 = vmatprep.subr.mxu0 0.0
  %1838 = vmatpush1.msra.mxu0 %v1806
  %1839 = vmatprep.subr.mxu0 0.0
  %1840 = vmatpush1.msra.mxu0 %v1807
  %1841 = vmatprep.subr.mxu0 0.0
  %1842 = vmatpush1.msra.mxu0 %v1808
  %1843 = vmatprep.subr.mxu0 0.0
  %1844 = vmatpush1.msra.mxu0 %v1809
  %1845 = vmatprep.subr.mxu0 0.0
  %1846 = vmatpush1.msra.mxu0 0.0
  %1847 = vmatprep.subr.mxu0 0.0
  %1848 = vmatpush1.msra.mxu0 0.0
  %1849 = vmatprep.subr.mxu0 0.0
  %1850 = vmatpush1.msra.mxu0 0.0
  %1851 = vmatprep.subr.mxu0 0.0
  %1852 = vmatpush1.msra.mxu0 0.0
  %1853 = vmatprep.subr.mxu0 0.0
  %1854 = vmatpush1.msra.mxu0 0.0
  %1855 = vmatprep.subr.mxu0 0.0
  %1856 = vmatpush1.msra.mxu0 0.0
  %1857 = vmatprep.subr.mxu0 0.0
  %1858 = vmatpush1.msra.mxu0 0.0
  %1859 = vmatprep.subr.mxu0 0.0
  %1860 = vmatpush1.msra.mxu0 0.0
  %1861 = vmatprep.subr.mxu0 0.0
  %1862 = vmatpush1.msra.mxu0 0.0
  %1863 = vmatprep.subr.mxu0 0.0
  %1864 = vmatpush1.msra.mxu0 0.0
  %1865 = vmatprep.subr.mxu0 0.0
  %1866 = vmatpush1.msra.mxu0 0.0
  %1867 = vmatprep.subr.mxu0 0.0
  %1868 = vmatpush1.msra.mxu0 0.0
  %1869 = vmatprep.subr.mxu0 0.0
  %1870 = vmatpush1.msra.mxu0 0.0
  %1871 = vmatprep.subr.mxu0 0.0
  %1872 = vmatpush1.msra.mxu0 0.0
  %1873 = vmatprep.subr.mxu0 0.0
  %1874 = vmatpush1.msra.mxu0 0.0
  %1875 = vmatprep.subr.mxu0 0.0
  %1876 = vmatpush1.msra.mxu0 0.0
  %1877 = vmatprep.subr.mxu0 0.0
  %1878 = vmatpush1.msra.mxu0 0.0
  %1879 = vmatprep.mubr.f32.mxu0 0.0
  %1880 = vmatmul.mubr.f32.gmra.mrb[0].mxu0 %v1813
  %v1881 = vpop.f32.mrb[0].mxu0
  %v1882 = vadd.f32 %v1810, %v1881
  %v1883 = vpop.f32.mrb[0].mxu0
  %1884 = vdwg.mxu0
  %v1885 = vtanh.pop %v1882
  %v1886 = vld [vmem:[%s7] sm:$0x1]
  %v1887 = vmul.f32 %v1885, %v1886
  %vm1888 = vcmask 679936
  %v1889 = vsel %vm1888, %v1887, 0.0
  %1890 = vadd.xlane.f32.xlu0 %v1889
  %v1891 = vpop.xlane.xlu0 %1890
  %v1892 = vld [vmem:[#allocation2] sm:$0x1]
  %v1893 = vadd.f32 %v1891, %v1892
  %v1894 = vsub.f32 0.0, %v1893
  %v1895 = vmul.f32 %v1894, 1.442695
  %v1896 = vpow.pop %v1895
  %v1897 = vadd.f32 %v1896, 1.0
  %v1898 = vrcp.pop %v1897
  %v1899 = vmul.f32 1.0, %v1898
  %s1900 = scalar_lea.vmem %s0, 304
  %v1901 = vld [vmem:[%s1900] sm:$0xf]
  %v1902 = vld [vmem:[%s1900 + $0x4] sm:$0xf]
  %v1903 = vld [vmem:[%s1900 + $0x8] sm:$0xf]
  %v1904 = vld [vmem:[%s1900 + $0xc] sm:$0xf]
  %v1905 = vld [vmem:[%s1900 + $0x10] sm:$0xf]
  %v1906 = vld [vmem:[%s1900 + $0x14] sm:$0xf]
  %v1907 = vld [vmem:[%s1900 + $0x18] sm:$0xf]
  %v1908 = vld [vmem:[%s1900 + $0x1c] sm:$0xf]
  %v1909 = vld [vmem:[%s1900 + $0x20] sm:$0xf]
  %v1910 = vld [vmem:[%s1900 + $0x24] sm:$0xf]
  %v1911 = vld [vmem:[%s1900 + $0x28] sm:$0xf]
  %v1912 = vld [vmem:[%s1900 + $0x2c] sm:$0xf]
  %v1913 = vld [vmem:[%s1900 + $0x30] sm:$0xf]
  %v1914 = vld [vmem:[%s1900 + $0x34] sm:$0xf]
  %v1915 = vld [vmem:[%s1900 + $0x38] sm:$0xf]
  %v1916 = vld [vmem:[%s1900 + $0x3c] sm:$0xf]
  %v1917 = vld [vmem:[%s1900 + $0x40] sm:$0xf]
  %v1918 = vld [vmem:[%s1900 + $0x44] sm:$0xf]
  %v1919 = vld [vmem:[%s1900 + $0x48] sm:$0x7]
  %v1939 = vunpack.c.l.b16 %v1901
  %v1940 = vunpack.c.l.b16 %v1902
  %v1941 = vunpack.c.l.b16 %v1903
  %v1942 = vunpack.c.l.b16 %v1904
  %v1943 = vunpack.c.l.b16 %v1905
  %v1944 = vunpack.c.l.b16 %v1906
  %v1945 = vunpack.c.l.b16 %v1907
  %v1946 = vunpack.c.l.b16 %v1908
  %v1947 = vunpack.c.l.b16 %v1909
  %v1948 = vunpack.c.l.b16 %v1910
  %v1949 = vunpack.c.l.b16 %v1911
  %v1950 = vunpack.c.l.b16 %v1912
  %v1951 = vunpack.c.l.b16 %v1913
  %v1952 = vunpack.c.l.b16 %v1914
  %v1953 = vunpack.c.l.b16 %v1915
  %v1954 = vunpack.c.l.b16 %v1916
  %v1955 = vunpack.c.l.b16 %v1917
  %v1956 = vunpack.c.l.b16 %v1918
  %v1957 = vunpack.c.l.b16 %v1919
  %v1958 = vpack.c.b16 %v1940, %v1939
  %v1959 = vpack.c.b16 %v1942, %v1941
  %v1960 = vpack.c.b16 %v1944, %v1943
  %v1961 = vpack.c.b16 %v1946, %v1945
  %v1962 = vpack.c.b16 %v1948, %v1947
  %v1963 = vpack.c.b16 %v1950, %v1949
  %v1964 = vpack.c.b16 %v1952, %v1951
  %v1965 = vpack.c.b16 %v1954, %v1953
  %v1966 = vpack.c.b16 %v1956, %v1955
  %v1967 = vpack.c.b16 %v1957, %v1957
  %v1978 = vsel %vm138, %v1967, 0
  %1980 = vmatprep.subr.bf16.mxu0 0
  %1981 = vmatpush1.bf16.msra.mxu0 %v1958
  %1982 = vmatprep.subr.bf16.mxu0 0
  %1983 = vmatpush1.bf16.msra.mxu0 %v1959
  %1984 = vmatprep.subr.bf16.mxu0 0
  %1985 = vmatpush1.bf16.msra.mxu0 %v1960
  %1986 = vmatprep.subr.bf16.mxu0 0
  %1987 = vmatpush1.bf16.msra.mxu0 %v1961
  %1988 = vmatprep.subr.bf16.mxu0 0
  %1989 = vmatpush1.bf16.msra.mxu0 %v1962
  %1990 = vmatprep.subr.bf16.mxu0 0
  %1991 = vmatpush1.bf16.msra.mxu0 %v1963
  %1992 = vmatprep.subr.bf16.mxu0 0
  %1993 = vmatpush1.bf16.msra.mxu0 %v1964
  %1994 = vmatprep.subr.bf16.mxu0 0
  %1995 = vmatpush1.bf16.msra.mxu0 %v1965
  %1996 = vmatprep.subr.bf16.mxu0 0
  %1997 = vmatpush1.bf16.msra.mxu0 %v1966
  %1998 = vmatprep.subr.bf16.mxu0 0
  %1999 = vmatpush1.bf16.msra.mxu0 %v1978
  %2000 = vmatprep.subr.bf16.mxu0 0
  %2001 = vmatpush1.bf16.msra.mxu0 0
  %2002 = vmatprep.subr.bf16.mxu0 0
  %2003 = vmatpush1.bf16.msra.mxu0 0
  %2004 = vmatprep.subr.bf16.mxu0 0
  %2005 = vmatpush1.bf16.msra.mxu0 0
  %2006 = vmatprep.subr.bf16.mxu0 0
  %2007 = vmatpush1.bf16.msra.mxu0 0
  %2008 = vmatprep.subr.bf16.mxu0 0
  %2009 = vmatpush1.bf16.msra.mxu0 0
  %2010 = vmatprep.subr.bf16.mxu0 0
  %2011 = vmatpush1.bf16.msra.mxu0 0
  %2012 = vmatprep.mubr.bf16.mxu0 %v136
  %2013 = vmatmul.mubr.bf16.gmra.mrb[0].mxu0 %v74
  %v2014 = vpop.f32.mrb[0].mxu0
  %v2015 = vadd.f32 %v61, %v2014
  %v2016 = vpop.f32.mrb[0].mxu0
  %v2017 = vpop.f32.mrb[0].mxu0
  %v2018 = vadd.f32 %v66, %v2017
  %v2019 = vpop.f32.mrb[0].mxu0
  %2020 = vdwg.mxu0
  %v2021 = vtanh.pop %v2015
  %v2022 = vtanh.pop %v2018
  %s2023 = scalar_lea.vmem %s0, 380
  %v2024 = vld [vmem:[%s2023] sm:$0xf]
  %v2025 = vld [vmem:[%s2023 + $0x4] sm:$0xf]
  %v2026 = vld [vmem:[%s2023 + $0x8] sm:$0xf]
  %v2027 = vld [vmem:[%s2023 + $0xc] sm:$0xf]
  %v2028 = vld [vmem:[%s2023 + $0x10] sm:$0xf]
  %v2029 = vld [vmem:[%s2023 + $0x14] sm:$0xf]
  %v2030 = vld [vmem:[%s2023 + $0x18] sm:$0xf]
  %v2031 = vld [vmem:[%s2023 + $0x1c] sm:$0xf]
  %v2032 = vld [vmem:[%s2023 + $0x20] sm:$0xf]
  %v2033 = vld [vmem:[%s2023 + $0x24] sm:$0xf]
  %v2034 = vld [vmem:[%s2023 + $0x28] sm:$0xf]
  %v2035 = vld [vmem:[%s2023 + $0x2c] sm:$0xf]
  %v2036 = vld [vmem:[%s2023 + $0x30] sm:$0xf]
  %v2037 = vld [vmem:[%s2023 + $0x34] sm:$0xf]
  %v2038 = vld [vmem:[%s2023 + $0x38] sm:$0xf]
  %v2039 = vld [vmem:[%s2023 + $0x3c] sm:$0xf]
  %v2040 = vld [vmem:[%s2023 + $0x40] sm:$0xf]
  %v2041 = vld [vmem:[%s2023 + $0x44] sm:$0xf]
  %v2042 = vld [vmem:[%s2023 + $0x48] sm:$0x7]
  %v2062 = vunpack.c.l.b16 %v2024
  %v2063 = vunpack.c.l.b16 %v2025
  %v2064 = vunpack.c.l.b16 %v2026
  %v2065 = vunpack.c.l.b16 %v2027
  %v2066 = vunpack.c.l.b16 %v2028
  %v2067 = vunpack.c.l.b16 %v2029
  %v2068 = vunpack.c.l.b16 %v2030
  %v2069 = vunpack.c.l.b16 %v2031
  %v2070 = vunpack.c.l.b16 %v2032
  %v2071 = vunpack.c.l.b16 %v2033
  %v2072 = vunpack.c.l.b16 %v2034
  %v2073 = vunpack.c.l.b16 %v2035
  %v2074 = vunpack.c.l.b16 %v2036
  %v2075 = vunpack.c.l.b16 %v2037
  %v2076 = vunpack.c.l.b16 %v2038
  %v2077 = vunpack.c.l.b16 %v2039
  %v2078 = vunpack.c.l.b16 %v2040
  %v2079 = vunpack.c.l.b16 %v2041
  %v2080 = vunpack.c.l.b16 %v2042
  %v2081 = vpack.c.b16 %v2063, %v2062
  %v2082 = vpack.c.b16 %v2065, %v2064
  %v2083 = vpack.c.b16 %v2067, %v2066
  %v2084 = vpack.c.b16 %v2069, %v2068
  %v2085 = vpack.c.b16 %v2071, %v2070
  %v2086 = vpack.c.b16 %v2073, %v2072
  %v2087 = vpack.c.b16 %v2075, %v2074
  %v2088 = vpack.c.b16 %v2077, %v2076
  %v2089 = vpack.c.b16 %v2079, %v2078
  %v2090 = vpack.c.b16 %v2080, %v2080
  %v2101 = vsel %vm138, %v2090, 0
  %2103 = vmatprep.subr.bf16.mxu0 0
  %2104 = vmatpush1.bf16.msra.mxu0 %v2081
  %2105 = vmatprep.subr.bf16.mxu0 0
  %2106 = vmatpush1.bf16.msra.mxu0 %v2082
  %2107 = vmatprep.subr.bf16.mxu0 0
  %2108 = vmatpush1.bf16.msra.mxu0 %v2083
  %2109 = vmatprep.subr.bf16.mxu0 0
  %2110 = vmatpush1.bf16.msra.mxu0 %v2084
  %2111 = vmatprep.subr.bf16.mxu0 0
  %2112 = vmatpush1.bf16.msra.mxu0 %v2085
  %2113 = vmatprep.subr.bf16.mxu0 0
  %2114 = vmatpush1.bf16.msra.mxu0 %v2086
  %2115 = vmatprep.subr.bf16.mxu0 0
  %2116 = vmatpush1.bf16.msra.mxu0 %v2087
  %2117 = vmatprep.subr.bf16.mxu0 0
  %2118 = vmatpush1.bf16.msra.mxu0 %v2088
  %2119 = vmatprep.subr.bf16.mxu0 0
  %2120 = vmatpush1.bf16.msra.mxu0 %v2089
  %2121 = vmatprep.subr.bf16.mxu0 0
  %2122 = vmatpush1.bf16.msra.mxu0 %v2101
  %2123 = vmatprep.subr.bf16.mxu0 0
  %2124 = vmatpush1.bf16.msra.mxu0 0
  %2125 = vmatprep.subr.bf16.mxu0 0
  %2126 = vmatpush1.bf16.msra.mxu0 0
  %2127 = vmatprep.subr.bf16.mxu0 0
  %2128 = vmatpush1.bf16.msra.mxu0 0
  %2129 = vmatprep.subr.bf16.mxu0 0
  %2130 = vmatpush1.bf16.msra.mxu0 0
  %2131 = vmatprep.subr.bf16.mxu0 0
  %2132 = vmatpush1.bf16.msra.mxu0 0
  %2133 = vmatprep.subr.bf16.mxu0 0
  %2134 = vmatpush1.bf16.msra.mxu0 0
  %2135 = vmatprep.mubr.bf16.mxu0 %v136
  %2136 = vmatmul.mubr.bf16.gmra.mrb[0].mxu0 %v74
  %v2137 = vpop.f32.mrb[0].mxu0
  %v2138 = vadd.f32 %v61, %v2137
  %v2139 = vpop.f32.mrb[0].mxu0
  %v2140 = vpop.f32.mrb[0].mxu0
  %v2141 = vadd.f32 %v66, %v2140
  %v2142 = vpop.f32.mrb[0].mxu0
  %2143 = vdwg.mxu0
  %v2144 = vtanh.pop %v2138
  %v2145 = vtanh.pop %v2141
  %v2146 = vadd.f32 %v2021, %v2144
  %v2147 = vadd.f32 %v2022, %v2145
  %s2148 = scalar_lea.vmem %s0, 456
  %v2149 = vld [vmem:[%s2148] sm:$0xf]
  %v2150 = vld [vmem:[%s2148 + $0x4] sm:$0xf]
  %v2151 = vld [vmem:[%s2148 + $0x8] sm:$0xf]
  %v2152 = vld [vmem:[%s2148 + $0xc] sm:$0xf]
  %v2153 = vld [vmem:[%s2148 + $0x10] sm:$0xf]
  %v2154 = vld [vmem:[%s2148 + $0x14] sm:$0xf]
  %v2155 = vld [vmem:[%s2148 + $0x18] sm:$0xf]
  %v2156 = vld [vmem:[%s2148 + $0x1c] sm:$0xf]
  %v2157 = vld [vmem:[%s2148 + $0x20] sm:$0xf]
  %v2158 = vld [vmem:[%s2148 + $0x24] sm:$0xf]
  %v2159 = vld [vmem:[%s2148 + $0x28] sm:$0xf]
  %v2160 = vld [vmem:[%s2148 + $0x2c] sm:$0xf]
  %v2161 = vld [vmem:[%s2148 + $0x30] sm:$0xf]
  %v2162 = vld [vmem:[%s2148 + $0x34] sm:$0xf]
  %v2163 = vld [vmem:[%s2148 + $0x38] sm:$0xf]
  %v2164 = vld [vmem:[%s2148 + $0x3c] sm:$0xf]
  %v2165 = vld [vmem:[%s2148 + $0x40] sm:$0xf]
  %v2166 = vld [vmem:[%s2148 + $0x44] sm:$0xf]
  %v2167 = vld [vmem:[%s2148 + $0x48] sm:$0x7]
  %v2187 = vunpack.c.l.b16 %v2149
  %v2188 = vunpack.c.l.b16 %v2150
  %v2189 = vunpack.c.l.b16 %v2151
  %v2190 = vunpack.c.l.b16 %v2152
  %v2191 = vunpack.c.l.b16 %v2153
  %v2192 = vunpack.c.l.b16 %v2154
  %v2193 = vunpack.c.l.b16 %v2155
  %v2194 = vunpack.c.l.b16 %v2156
  %v2195 = vunpack.c.l.b16 %v2157
  %v2196 = vunpack.c.l.b16 %v2158
  %v2197 = vunpack.c.l.b16 %v2159
  %v2198 = vunpack.c.l.b16 %v2160
  %v2199 = vunpack.c.l.b16 %v2161
  %v2200 = vunpack.c.l.b16 %v2162
  %v2201 = vunpack.c.l.b16 %v2163
  %v2202 = vunpack.c.l.b16 %v2164
  %v2203 = vunpack.c.l.b16 %v2165
  %v2204 = vunpack.c.l.b16 %v2166
  %v2205 = vunpack.c.l.b16 %v2167
  %v2206 = vpack.c.b16 %v2188, %v2187
  %v2207 = vpack.c.b16 %v2190, %v2189
  %v2208 = vpack.c.b16 %v2192, %v2191
  %v2209 = vpack.c.b16 %v2194, %v2193
  %v2210 = vpack.c.b16 %v2196, %v2195
  %v2211 = vpack.c.b16 %v2198, %v2197
  %v2212 = vpack.c.b16 %v2200, %v2199
  %v2213 = vpack.c.b16 %v2202, %v2201
  %v2214 = vpack.c.b16 %v2204, %v2203
  %v2215 = vpack.c.b16 %v2205, %v2205
  %v2226 = vsel %vm138, %v2215, 0
  %2228 = vmatprep.subr.bf16.mxu0 0
  %2229 = vmatpush1.bf16.msra.mxu0 %v2206
  %2230 = vmatprep.subr.bf16.mxu0 0
  %2231 = vmatpush1.bf16.msra.mxu0 %v2207
  %2232 = vmatprep.subr.bf16.mxu0 0
  %2233 = vmatpush1.bf16.msra.mxu0 %v2208
  %2234 = vmatprep.subr.bf16.mxu0 0
  %2235 = vmatpush1.bf16.msra.mxu0 %v2209
  %2236 = vmatprep.subr.bf16.mxu0 0
  %2237 = vmatpush1.bf16.msra.mxu0 %v2210
  %2238 = vmatprep.subr.bf16.mxu0 0
  %2239 = vmatpush1.bf16.msra.mxu0 %v2211
  %2240 = vmatprep.subr.bf16.mxu0 0
  %2241 = vmatpush1.bf16.msra.mxu0 %v2212
  %2242 = vmatprep.subr.bf16.mxu0 0
  %2243 = vmatpush1.bf16.msra.mxu0 %v2213
  %2244 = vmatprep.subr.bf16.mxu0 0
  %2245 = vmatpush1.bf16.msra.mxu0 %v2214
  %2246 = vmatprep.subr.bf16.mxu0 0
  %2247 = vmatpush1.bf16.msra.mxu0 %v2226
  %2248 = vmatprep.subr.bf16.mxu0 0
  %2249 = vmatpush1.bf16.msra.mxu0 0
  %2250 = vmatprep.subr.bf16.mxu0 0
  %2251 = vmatpush1.bf16.msra.mxu0 0
  %2252 = vmatprep.subr.bf16.mxu0 0
  %2253 = vmatpush1.bf16.msra.mxu0 0
  %2254 = vmatprep.subr.bf16.mxu0 0
  %2255 = vmatpush1.bf16.msra.mxu0 0
  %2256 = vmatprep.subr.bf16.mxu0 0
  %2257 = vmatpush1.bf16.msra.mxu0 0
  %2258 = vmatprep.subr.bf16.mxu0 0
  %2259 = vmatpush1.bf16.msra.mxu0 0
  %2260 = vmatprep.mubr.bf16.mxu0 %v136
  %2261 = vmatmul.mubr.bf16.gmra.mrb[0].mxu0 %v74
  %v2262 = vpop.f32.mrb[0].mxu0
  %v2263 = vadd.f32 %v61, %v2262
  %v2264 = vpop.f32.mrb[0].mxu0
  %v2265 = vpop.f32.mrb[0].mxu0
  %v2266 = vadd.f32 %v66, %v2265
  %v2267 = vpop.f32.mrb[0].mxu0
  %2268 = vdwg.mxu0
  %v2269 = vtanh.pop %v2263
  %v2270 = vtanh.pop %v2266
  %v2271 = vadd.f32 %v2146, %v2269
  %v2272 = vadd.f32 %v2147, %v2270
  %s2273 = scalar_lea.vmem %s0, 532
  %v2274 = vld [vmem:[%s2273] sm:$0xf]
  %v2275 = vld [vmem:[%s2273 + $0x4] sm:$0xf]
  %v2276 = vld [vmem:[%s2273 + $0x8] sm:$0xf]
  %v2277 = vld [vmem:[%s2273 + $0xc] sm:$0xf]
  %v2278 = vld [vmem:[%s2273 + $0x10] sm:$0xf]
  %v2279 = vld [vmem:[%s2273 + $0x14] sm:$0xf]
  %v2280 = vld [vmem:[%s2273 + $0x18] sm:$0xf]
  %v2281 = vld [vmem:[%s2273 + $0x1c] sm:$0xf]
  %v2282 = vld [vmem:[%s2273 + $0x20] sm:$0xf]
  %v2283 = vld [vmem:[%s2273 + $0x24] sm:$0xf]
  %v2284 = vld [vmem:[%s2273 + $0x28] sm:$0xf]
  %v2285 = vld [vmem:[%s2273 + $0x2c] sm:$0xf]
  %v2286 = vld [vmem:[%s2273 + $0x30] sm:$0xf]
  %v2287 = vld [vmem:[%s2273 + $0x34] sm:$0xf]
  %v2288 = vld [vmem:[%s2273 + $0x38] sm:$0xf]
  %v2289 = vld [vmem:[%s2273 + $0x3c] sm:$0xf]
  %v2290 = vld [vmem:[%s2273 + $0x40] sm:$0xf]
  %v2291 = vld [vmem:[%s2273 + $0x44] sm:$0xf]
  %v2292 = vld [vmem:[%s2273 + $0x48] sm:$0x7]
  %v2312 = vunpack.c.l.b16 %v2274
  %v2313 = vunpack.c.l.b16 %v2275
  %v2314 = vunpack.c.l.b16 %v2276
  %v2315 = vunpack.c.l.b16 %v2277
  %v2316 = vunpack.c.l.b16 %v2278
  %v2317 = vunpack.c.l.b16 %v2279
  %v2318 = vunpack.c.l.b16 %v2280
  %v2319 = vunpack.c.l.b16 %v2281
  %v2320 = vunpack.c.l.b16 %v2282
  %v2321 = vunpack.c.l.b16 %v2283
  %v2322 = vunpack.c.l.b16 %v2284
  %v2323 = vunpack.c.l.b16 %v2285
  %v2324 = vunpack.c.l.b16 %v2286
  %v2325 = vunpack.c.l.b16 %v2287
  %v2326 = vunpack.c.l.b16 %v2288
  %v2327 = vunpack.c.l.b16 %v2289
  %v2328 = vunpack.c.l.b16 %v2290
  %v2329 = vunpack.c.l.b16 %v2291
  %v2330 = vunpack.c.l.b16 %v2292
  %v2331 = vpack.c.b16 %v2313, %v2312
  %v2332 = vpack.c.b16 %v2315, %v2314
  %v2333 = vpack.c.b16 %v2317, %v2316
  %v2334 = vpack.c.b16 %v2319, %v2318
  %v2335 = vpack.c.b16 %v2321, %v2320
  %v2336 = vpack.c.b16 %v2323, %v2322
  %v2337 = vpack.c.b16 %v2325, %v2324
  %v2338 = vpack.c.b16 %v2327, %v2326
  %v2339 = vpack.c.b16 %v2329, %v2328
  %v2340 = vpack.c.b16 %v2330, %v2330
  %v2351 = vsel %vm138, %v2340, 0
  %2353 = vmatprep.subr.bf16.mxu0 0
  %2354 = vmatpush1.bf16.msra.mxu0 %v2331
  %2355 = vmatprep.subr.bf16.mxu0 0
  %2356 = vmatpush1.bf16.msra.mxu0 %v2332
  %2357 = vmatprep.subr.bf16.mxu0 0
  %2358 = vmatpush1.bf16.msra.mxu0 %v2333
  %2359 = vmatprep.subr.bf16.mxu0 0
  %2360 = vmatpush1.bf16.msra.mxu0 %v2334
  %2361 = vmatprep.subr.bf16.mxu0 0
  %2362 = vmatpush1.bf16.msra.mxu0 %v2335
  %2363 = vmatprep.subr.bf16.mxu0 0
  %2364 = vmatpush1.bf16.msra.mxu0 %v2336
  %2365 = vmatprep.subr.bf16.mxu0 0
  %2366 = vmatpush1.bf16.msra.mxu0 %v2337
  %2367 = vmatprep.subr.bf16.mxu0 0
  %2368 = vmatpush1.bf16.msra.mxu0 %v2338
  %2369 = vmatprep.subr.bf16.mxu0 0
  %2370 = vmatpush1.bf16.msra.mxu0 %v2339
  %2371 = vmatprep.subr.bf16.mxu0 0
  %2372 = vmatpush1.bf16.msra.mxu0 %v2351
  %2373 = vmatprep.subr.bf16.mxu0 0
  %2374 = vmatpush1.bf16.msra.mxu0 0
  %2375 = vmatprep.subr.bf16.mxu0 0
  %2376 = vmatpush1.bf16.msra.mxu0 0
  %2377 = vmatprep.subr.bf16.mxu0 0
  %2378 = vmatpush1.bf16.msra.mxu0 0
  %2379 = vmatprep.subr.bf16.mxu0 0
  %2380 = vmatpush1.bf16.msra.mxu0 0
  %2381 = vmatprep.subr.bf16.mxu0 0
  %2382 = vmatpush1.bf16.msra.mxu0 0
  %2383 = vmatprep.subr.bf16.mxu0 0
  %2384 = vmatpush1.bf16.msra.mxu0 0
  %2385 = vmatprep.mubr.bf16.mxu0 %v136
  %2386 = vmatmul.mubr.bf16.gmra.mrb[0].mxu0 %v74
  %v2387 = vpop.f32.mrb[0].mxu0
  %v2388 = vadd.f32 %v61, %v2387
  %v2389 = vpop.f32.mrb[0].mxu0
  %v2390 = vpop.f32.mrb[0].mxu0
  %v2391 = vadd.f32 %v66, %v2390
  %v2392 = vpop.f32.mrb[0].mxu0
  %2393 = vdwg.mxu0
  %v2394 = vtanh.pop %v2388
  %v2395 = vtanh.pop %v2391
  %v2396 = vadd.f32 %v2271, %v2394
  %v2397 = vadd.f32 %v2272, %v2395
  %v2398 = vmul.f32 %v2396, 0.25
  %v2399 = vmul.f32 %v2397, 0.25
  %v2401 = vrot.slane %v2398, 1
  %v2402 = vsel %vm569, %v2401, 0
  %2404 = vmatprep.subr.mxu0 0.0
  %2405 = vmatpush1.msra.mxu0 %v565
  %2406 = vmatprep.subr.mxu0 0.0
  %2407 = vmatpush1.msra.mxu0 %v566
  %2408 = vmatprep.subr.mxu0 0.0
  %2409 = vmatpush1.msra.mxu0 0.0
  %2410 = vmatprep.subr.mxu0 0.0
  %2411 = vmatpush1.msra.mxu0 0.0
  %2412 = vmatprep.subr.mxu0 0.0
  %2413 = vmatpush1.msra.mxu0 0.0
  %2414 = vmatprep.subr.mxu0 0.0
  %2415 = vmatpush1.msra.mxu0 0.0
  %2416 = vmatprep.subr.mxu0 0.0
  %2417 = vmatpush1.msra.mxu0 0.0
  %2418 = vmatprep.subr.mxu0 0.0
  %2419 = vmatpush1.msra.mxu0 0.0
  %2420 = vmatprep.subr.mxu0 0.0
  %2421 = vmatpush1.msra.mxu0 0.0
  %2422 = vmatprep.subr.mxu0 0.0
  %2423 = vmatpush1.msra.mxu0 0.0
  %2424 = vmatprep.subr.mxu0 0.0
  %2425 = vmatpush1.msra.mxu0 0.0
  %2426 = vmatprep.subr.mxu0 0.0
  %2427 = vmatpush1.msra.mxu0 0.0
  %2428 = vmatprep.subr.mxu0 0.0
  %2429 = vmatpush1.msra.mxu0 0.0
  %2430 = vmatprep.subr.mxu0 0.0
  %2431 = vmatpush1.msra.mxu0 0.0
  %2432 = vmatprep.subr.mxu0 0.0
  %2433 = vmatpush1.msra.mxu0 0.0
  %2434 = vmatprep.subr.mxu0 0.0
  %2435 = vmatpush1.msra.mxu0 0.0
  %2436 = vmatprep.subr.mxu0 0.0
  %2437 = vmatpush1.msra.mxu0 0.0
  %2438 = vmatprep.subr.mxu0 0.0
  %2439 = vmatpush1.msra.mxu0 0.0
  %2440 = vmatprep.subr.mxu0 0.0
  %2441 = vmatpush1.msra.mxu0 0.0
  %2442 = vmatprep.subr.mxu0 0.0
  %2443 = vmatpush1.msra.mxu0 0.0
  %2444 = vmatprep.subr.mxu0 0.0
  %2445 = vmatpush1.msra.mxu0 0.0
  %2446 = vmatprep.subr.mxu0 0.0
  %2447 = vmatpush1.msra.mxu0 0.0
  %2448 = vmatprep.subr.mxu0 0.0
  %2449 = vmatpush1.msra.mxu0 0.0
  %2450 = vmatprep.subr.mxu0 0.0
  %2451 = vmatpush1.msra.mxu0 0.0
  %2452 = vmatprep.subr.mxu0 0.0
  %2453 = vmatpush1.msra.mxu0 0.0
  %2454 = vmatprep.subr.mxu0 0.0
  %2455 = vmatpush1.msra.mxu0 0.0
  %2456 = vmatprep.subr.mxu0 0.0
  %2457 = vmatpush1.msra.mxu0 0.0
  %2458 = vmatprep.subr.mxu0 0.0
  %2459 = vmatpush1.msra.mxu0 0.0
  %2460 = vmatprep.subr.mxu0 0.0
  %2461 = vmatpush1.msra.mxu0 0.0
  %2462 = vmatprep.subr.mxu0 0.0
  %2463 = vmatpush1.msra.mxu0 0.0
  %2464 = vmatprep.subr.mxu0 0.0
  %2465 = vmatpush1.msra.mxu0 0.0
  %2466 = vmatprep.subr.mxu0 0.0
  %2467 = vmatpush1.msra.mxu0 0.0
  %2468 = vmatprep.mubr.f32.mxu0 0.0
  %2469 = vmatmul.mubr.f32.gmra.mrb[0].mxu0 %v2402
  %v2470 = vpop.f32.mrb[0].mxu0
  %v2471 = vadd.f32 0.0, %v2470
  %v2472 = vpop.f32.mrb[0].mxu0
  %2473 = vdwg.mxu0
  %v2474 = vsel %vm569, %v2398, 0
  %2476 = vmatprep.subr.mxu0 0.0
  %2477 = vmatpush1.msra.mxu0 %v562
  %2478 = vmatprep.subr.mxu0 0.0
  %2479 = vmatpush1.msra.mxu0 %v563
  %2480 = vmatprep.subr.mxu0 0.0
  %2481 = vmatpush1.msra.mxu0 0.0
  %2482 = vmatprep.subr.mxu0 0.0
  %2483 = vmatpush1.msra.mxu0 0.0
  %2484 = vmatprep.subr.mxu0 0.0
  %2485 = vmatpush1.msra.mxu0 0.0
  %2486 = vmatprep.subr.mxu0 0.0
  %2487 = vmatpush1.msra.mxu0 0.0
  %2488 = vmatprep.subr.mxu0 0.0
  %2489 = vmatpush1.msra.mxu0 0.0
  %2490 = vmatprep.subr.mxu0 0.0
  %2491 = vmatpush1.msra.mxu0 0.0
  %2492 = vmatprep.subr.mxu0 0.0
  %2493 = vmatpush1.msra.mxu0 0.0
  %2494 = vmatprep.subr.mxu0 0.0
  %2495 = vmatpush1.msra.mxu0 0.0
  %2496 = vmatprep.subr.mxu0 0.0
  %2497 = vmatpush1.msra.mxu0 0.0
  %2498 = vmatprep.subr.mxu0 0.0
  %2499 = vmatpush1.msra.mxu0 0.0
  %2500 = vmatprep.subr.mxu0 0.0
  %2501 = vmatpush1.msra.mxu0 0.0
  %2502 = vmatprep.subr.mxu0 0.0
  %2503 = vmatpush1.msra.mxu0 0.0
  %2504 = vmatprep.subr.mxu0 0.0
  %2505 = vmatpush1.msra.mxu0 0.0
  %2506 = vmatprep.subr.mxu0 0.0
  %2507 = vmatpush1.msra.mxu0 0.0
  %2508 = vmatprep.subr.mxu0 0.0
  %2509 = vmatpush1.msra.mxu0 0.0
  %2510 = vmatprep.subr.mxu0 0.0
  %2511 = vmatpush1.msra.mxu0 0.0
  %2512 = vmatprep.subr.mxu0 0.0
  %2513 = vmatpush1.msra.mxu0 0.0
  %2514 = vmatprep.subr.mxu0 0.0
  %2515 = vmatpush1.msra.mxu0 0.0
  %2516 = vmatprep.subr.mxu0 0.0
  %2517 = vmatpush1.msra.mxu0 0.0
  %2518 = vmatprep.subr.mxu0 0.0
  %2519 = vmatpush1.msra.mxu0 0.0
  %2520 = vmatprep.subr.mxu0 0.0
  %2521 = vmatpush1.msra.mxu0 0.0
  %2522 = vmatprep.subr.mxu0 0.0
  %2523 = vmatpush1.msra.mxu0 0.0
  %2524 = vmatprep.subr.mxu0 0.0
  %2525 = vmatpush1.msra.mxu0 0.0
  %2526 = vmatprep.subr.mxu0 0.0
  %2527 = vmatpush1.msra.mxu0 0.0
  %2528 = vmatprep.subr.mxu0 0.0
  %2529 = vmatpush1.msra.mxu0 0.0
  %2530 = vmatprep.subr.mxu0 0.0
  %2531 = vmatpush1.msra.mxu0 0.0
  %2532 = vmatprep.subr.mxu0 0.0
  %2533 = vmatpush1.msra.mxu0 0.0
  %2534 = vmatprep.subr.mxu0 0.0
  %2535 = vmatpush1.msra.mxu0 0.0
  %2536 = vmatprep.subr.mxu0 0.0
  %2537 = vmatpush1.msra.mxu0 0.0
  %2538 = vmatprep.subr.mxu0 0.0
  %2539 = vmatpush1.msra.mxu0 0.0
  %2540 = vmatprep.mubr.f32.mxu0 0.0
  %2541 = vmatmul.mubr.f32.gmra.mrb[0].mxu0 %v2474
  %v2542 = vpop.f32.mrb[0].mxu0
  %v2543 = vadd.f32 %v2471, %v2542
  %v2544 = vpop.f32.mrb[0].mxu0
  %2545 = vdwg.mxu0
  %v2546 = vrot.slane %v2398, 2
  %v2547 = vsel %vm569, %v2546, 0
  %2549 = vmatprep.subr.mxu0 0.0
  %2550 = vmatpush1.msra.mxu0 %v715
  %2551 = vmatprep.subr.mxu0 0.0
  %2552 = vmatpush1.msra.mxu0 %v716
  %2553 = vmatprep.subr.mxu0 0.0
  %2554 = vmatpush1.msra.mxu0 0.0
  %2555 = vmatprep.subr.mxu0 0.0
  %2556 = vmatpush1.msra.mxu0 0.0
  %2557 = vmatprep.subr.mxu0 0.0
  %2558 = vmatpush1.msra.mxu0 0.0
  %2559 = vmatprep.subr.mxu0 0.0
  %2560 = vmatpush1.msra.mxu0 0.0
  %2561 = vmatprep.subr.mxu0 0.0
  %2562 = vmatpush1.msra.mxu0 0.0
  %2563 = vmatprep.subr.mxu0 0.0
  %2564 = vmatpush1.msra.mxu0 0.0
  %2565 = vmatprep.subr.mxu0 0.0
  %2566 = vmatpush1.msra.mxu0 0.0
  %2567 = vmatprep.subr.mxu0 0.0
  %2568 = vmatpush1.msra.mxu0 0.0
  %2569 = vmatprep.subr.mxu0 0.0
  %2570 = vmatpush1.msra.mxu0 0.0
  %2571 = vmatprep.subr.mxu0 0.0
  %2572 = vmatpush1.msra.mxu0 0.0
  %2573 = vmatprep.subr.mxu0 0.0
  %2574 = vmatpush1.msra.mxu0 0.0
  %2575 = vmatprep.subr.mxu0 0.0
  %2576 = vmatpush1.msra.mxu0 0.0
  %2577 = vmatprep.subr.mxu0 0.0
  %2578 = vmatpush1.msra.mxu0 0.0
  %2579 = vmatprep.subr.mxu0 0.0
  %2580 = vmatpush1.msra.mxu0 0.0
  %2581 = vmatprep.subr.mxu0 0.0
  %2582 = vmatpush1.msra.mxu0 0.0
  %2583 = vmatprep.subr.mxu0 0.0
  %2584 = vmatpush1.msra.mxu0 0.0
  %2585 = vmatprep.subr.mxu0 0.0
  %2586 = vmatpush1.msra.mxu0 0.0
  %2587 = vmatprep.subr.mxu0 0.0
  %2588 = vmatpush1.msra.mxu0 0.0
  %2589 = vmatprep.subr.mxu0 0.0
  %2590 = vmatpush1.msra.mxu0 0.0
  %2591 = vmatprep.subr.mxu0 0.0
  %2592 = vmatpush1.msra.mxu0 0.0
  %2593 = vmatprep.subr.mxu0 0.0
  %2594 = vmatpush1.msra.mxu0 0.0
  %2595 = vmatprep.subr.mxu0 0.0
  %2596 = vmatpush1.msra.mxu0 0.0
  %2597 = vmatprep.subr.mxu0 0.0
  %2598 = vmatpush1.msra.mxu0 0.0
  %2599 = vmatprep.subr.mxu0 0.0
  %2600 = vmatpush1.msra.mxu0 0.0
  %2601 = vmatprep.subr.mxu0 0.0
  %2602 = vmatpush1.msra.mxu0 0.0
  %2603 = vmatprep.subr.mxu0 0.0
  %2604 = vmatpush1.msra.mxu0 0.0
  %2605 = vmatprep.subr.mxu0 0.0
  %2606 = vmatpush1.msra.mxu0 0.0
  %2607 = vmatprep.subr.mxu0 0.0
  %2608 = vmatpush1.msra.mxu0 0.0
  %2609 = vmatprep.subr.mxu0 0.0
  %2610 = vmatpush1.msra.mxu0 0.0
  %2611 = vmatprep.subr.mxu0 0.0
  %2612 = vmatpush1.msra.mxu0 0.0
  %2613 = vmatprep.mubr.f32.mxu0 0.0
  %2614 = vmatmul.mubr.f32.gmra.mrb[0].mxu0 %v2547
  %v2615 = vpop.f32.mrb[0].mxu0
  %v2616 = vadd.f32 0.0, %v2615
  %v2617 = vpop.f32.mrb[0].mxu0
  %2618 = vdwg.mxu0
  %v2619 = vadd.f32 %v2543, %v2616
  %v2620 = vrot.slane %v2398, 3
  %v2621 = vsel %vm569, %v2620, 0
  %2623 = vmatprep.subr.mxu0 0.0
  %2624 = vmatpush1.msra.mxu0 %v792
  %2625 = vmatprep.subr.mxu0 0.0
  %2626 = vmatpush1.msra.mxu0 %v793
  %2627 = vmatprep.subr.mxu0 0.0
  %2628 = vmatpush1.msra.mxu0 0.0
  %2629 = vmatprep.subr.mxu0 0.0
  %2630 = vmatpush1.msra.mxu0 0.0
  %2631 = vmatprep.subr.mxu0 0.0
  %2632 = vmatpush1.msra.mxu0 0.0
  %2633 = vmatprep.subr.mxu0 0.0
  %2634 = vmatpush1.msra.mxu0 0.0
  %2635 = vmatprep.subr.mxu0 0.0
  %2636 = vmatpush1.msra.mxu0 0.0
  %2637 = vmatprep.subr.mxu0 0.0
  %2638 = vmatpush1.msra.mxu0 0.0
  %2639 = vmatprep.subr.mxu0 0.0
  %2640 = vmatpush1.msra.mxu0 0.0
  %2641 = vmatprep.subr.mxu0 0.0
  %2642 = vmatpush1.msra.mxu0 0.0
  %2643 = vmatprep.subr.mxu0 0.0
  %2644 = vmatpush1.msra.mxu0 0.0
  %2645 = vmatprep.subr.mxu0 0.0
  %2646 = vmatpush1.msra.mxu0 0.0
  %2647 = vmatprep.subr.mxu0 0.0
  %2648 = vmatpush1.msra.mxu0 0.0
  %2649 = vmatprep.subr.mxu0 0.0
  %2650 = vmatpush1.msra.mxu0 0.0
  %2651 = vmatprep.subr.mxu0 0.0
  %2652 = vmatpush1.msra.mxu0 0.0
  %2653 = vmatprep.subr.mxu0 0.0
  %2654 = vmatpush1.msra.mxu0 0.0
  %2655 = vmatprep.subr.mxu0 0.0
  %2656 = vmatpush1.msra.mxu0 0.0
  %2657 = vmatprep.subr.mxu0 0.0
  %2658 = vmatpush1.msra.mxu0 0.0
  %2659 = vmatprep.subr.mxu0 0.0
  %2660 = vmatpush1.msra.mxu0 0.0
  %2661 = vmatprep.subr.mxu0 0.0
  %2662 = vmatpush1.msra.mxu0 0.0
  %2663 = vmatprep.subr.mxu0 0.0
  %2664 = vmatpush1.msra.mxu0 0.0
  %2665 = vmatprep.subr.mxu0 0.0
  %2666 = vmatpush1.msra.mxu0 0.0
  %2667 = vmatprep.subr.mxu0 0.0
  %2668 = vmatpush1.msra.mxu0 0.0
  %2669 = vmatprep.subr.mxu0 0.0
  %2670 = vmatpush1.msra.mxu0 0.0
  %2671 = vmatprep.subr.mxu0 0.0
  %2672 = vmatpush1.msra.mxu0 0.0
  %2673 = vmatprep.subr.mxu0 0.0
  %2674 = vmatpush1.msra.mxu0 0.0
  %2675 = vmatprep.subr.mxu0 0.0
  %2676 = vmatpush1.msra.mxu0 0.0
  %2677 = vmatprep.subr.mxu0 0.0
  %2678 = vmatpush1.msra.mxu0 0.0
  %2679 = vmatprep.subr.mxu0 0.0
  %2680 = vmatpush1.msra.mxu0 0.0
  %2681 = vmatprep.subr.mxu0 0.0
  %2682 = vmatpush1.msra.mxu0 0.0
  %2683 = vmatprep.subr.mxu0 0.0
  %2684 = vmatpush1.msra.mxu0 0.0
  %2685 = vmatprep.subr.mxu0 0.0
  %2686 = vmatpush1.msra.mxu0 0.0
  %2687 = vmatprep.mubr.f32.mxu0 0.0
  %2688 = vmatmul.mubr.f32.gmra.mrb[0].mxu0 %v2621
  %v2689 = vpop.f32.mrb[0].mxu0
  %v2690 = vadd.f32 0.0, %v2689
  %v2691 = vpop.f32.mrb[0].mxu0
  %2692 = vdwg.mxu0
  %v2693 = vadd.f32 %v2619, %v2690
  %v2694 = vrot.slane %v2398, 4
  %v2695 = vsel %vm569, %v2694, 0
  %2697 = vmatprep.subr.mxu0 0.0
  %2698 = vmatpush1.msra.mxu0 %v869
  %2699 = vmatprep.subr.mxu0 0.0
  %2700 = vmatpush1.msra.mxu0 %v870
  %2701 = vmatprep.subr.mxu0 0.0
  %2702 = vmatpush1.msra.mxu0 0.0
  %2703 = vmatprep.subr.mxu0 0.0
  %2704 = vmatpush1.msra.mxu0 0.0
  %2705 = vmatprep.subr.mxu0 0.0
  %2706 = vmatpush1.msra.mxu0 0.0
  %2707 = vmatprep.subr.mxu0 0.0
  %2708 = vmatpush1.msra.mxu0 0.0
  %2709 = vmatprep.subr.mxu0 0.0
  %2710 = vmatpush1.msra.mxu0 0.0
  %2711 = vmatprep.subr.mxu0 0.0
  %2712 = vmatpush1.msra.mxu0 0.0
  %2713 = vmatprep.subr.mxu0 0.0
  %2714 = vmatpush1.msra.mxu0 0.0
  %2715 = vmatprep.subr.mxu0 0.0
  %2716 = vmatpush1.msra.mxu0 0.0
  %2717 = vmatprep.subr.mxu0 0.0
  %2718 = vmatpush1.msra.mxu0 0.0
  %2719 = vmatprep.subr.mxu0 0.0
  %2720 = vmatpush1.msra.mxu0 0.0
  %2721 = vmatprep.subr.mxu0 0.0
  %2722 = vmatpush1.msra.mxu0 0.0
  %2723 = vmatprep.subr.mxu0 0.0
  %2724 = vmatpush1.msra.mxu0 0.0
  %2725 = vmatprep.subr.mxu0 0.0
  %2726 = vmatpush1.msra.mxu0 0.0
  %2727 = vmatprep.subr.mxu0 0.0
  %2728 = vmatpush1.msra.mxu0 0.0
  %2729 = vmatprep.subr.mxu0 0.0
  %2730 = vmatpush1.msra.mxu0 0.0
  %2731 = vmatprep.subr.mxu0 0.0
  %2732 = vmatpush1.msra.mxu0 0.0
  %2733 = vmatprep.subr.mxu0 0.0
  %2734 = vmatpush1.msra.mxu0 0.0
  %2735 = vmatprep.subr.mxu0 0.0
  %2736 = vmatpush1.msra.mxu0 0.0
  %2737 = vmatprep.subr.mxu0 0.0
  %2738 = vmatpush1.msra.mxu0 0.0
  %2739 = vmatprep.subr.mxu0 0.0
  %2740 = vmatpush1.msra.mxu0 0.0
  %2741 = vmatprep.subr.mxu0 0.0
  %2742 = vmatpush1.msra.mxu0 0.0
  %2743 = vmatprep.subr.mxu0 0.0
  %2744 = vmatpush1.msra.mxu0 0.0
  %2745 = vmatprep.subr.mxu0 0.0
  %2746 = vmatpush1.msra.mxu0 0.0
  %2747 = vmatprep.subr.mxu0 0.0
  %2748 = vmatpush1.msra.mxu0 0.0
  %2749 = vmatprep.subr.mxu0 0.0
  %2750 = vmatpush1.msra.mxu0 0.0
  %2751 = vmatprep.subr.mxu0 0.0
  %2752 = vmatpush1.msra.mxu0 0.0
  %2753 = vmatprep.subr.mxu0 0.0
  %2754 = vmatpush1.msra.mxu0 0.0
  %2755 = vmatprep.subr.mxu0 0.0
  %2756 = vmatpush1.msra.mxu0 0.0
  %2757 = vmatprep.subr.mxu0 0.0
  %2758 = vmatpush1.msra.mxu0 0.0
  %2759 = vmatprep.subr.mxu0 0.0
  %2760 = vmatpush1.msra.mxu0 0.0
  %2761 = vmatprep.mubr.f32.mxu0 0.0
  %2762 = vmatmul.mubr.f32.gmra.mrb[0].mxu0 %v2695
  %v2763 = vpop.f32.mrb[0].mxu0
  %v2764 = vadd.f32 0.0, %v2763
  %v2765 = vpop.f32.mrb[0].mxu0
  %2766 = vdwg.mxu0
  %v2767 = vadd.f32 %v2693, %v2764
  %v2768 = vrot.slane %v2398, 5
  %v2769 = vsel %vm569, %v2768, 0
  %2771 = vmatprep.subr.mxu0 0.0
  %2772 = vmatpush1.msra.mxu0 %v946
  %2773 = vmatprep.subr.mxu0 0.0
  %2774 = vmatpush1.msra.mxu0 %v947
  %2775 = vmatprep.subr.mxu0 0.0
  %2776 = vmatpush1.msra.mxu0 0.0
  %2777 = vmatprep.subr.mxu0 0.0
  %2778 = vmatpush1.msra.mxu0 0.0
  %2779 = vmatprep.subr.mxu0 0.0
  %2780 = vmatpush1.msra.mxu0 0.0
  %2781 = vmatprep.subr.mxu0 0.0
  %2782 = vmatpush1.msra.mxu0 0.0
  %2783 = vmatprep.subr.mxu0 0.0
  %2784 = vmatpush1.msra.mxu0 0.0
  %2785 = vmatprep.subr.mxu0 0.0
  %2786 = vmatpush1.msra.mxu0 0.0
  %2787 = vmatprep.subr.mxu0 0.0
  %2788 = vmatpush1.msra.mxu0 0.0
  %2789 = vmatprep.subr.mxu0 0.0
  %2790 = vmatpush1.msra.mxu0 0.0
  %2791 = vmatprep.subr.mxu0 0.0
  %2792 = vmatpush1.msra.mxu0 0.0
  %2793 = vmatprep.subr.mxu0 0.0
  %2794 = vmatpush1.msra.mxu0 0.0
  %2795 = vmatprep.subr.mxu0 0.0
  %2796 = vmatpush1.msra.mxu0 0.0
  %2797 = vmatprep.subr.mxu0 0.0
  %2798 = vmatpush1.msra.mxu0 0.0
  %2799 = vmatprep.subr.mxu0 0.0
  %2800 = vmatpush1.msra.mxu0 0.0
  %2801 = vmatprep.subr.mxu0 0.0
  %2802 = vmatpush1.msra.mxu0 0.0
  %2803 = vmatprep.subr.mxu0 0.0
  %2804 = vmatpush1.msra.mxu0 0.0
  %2805 = vmatprep.subr.mxu0 0.0
  %2806 = vmatpush1.msra.mxu0 0.0
  %2807 = vmatprep.subr.mxu0 0.0
  %2808 = vmatpush1.msra.mxu0 0.0
  %2809 = vmatprep.subr.mxu0 0.0
  %2810 = vmatpush1.msra.mxu0 0.0
  %2811 = vmatprep.subr.mxu0 0.0
  %2812 = vmatpush1.msra.mxu0 0.0
  %2813 = vmatprep.subr.mxu0 0.0
  %2814 = vmatpush1.msra.mxu0 0.0
  %2815 = vmatprep.subr.mxu0 0.0
  %2816 = vmatpush1.msra.mxu0 0.0
  %2817 = vmatprep.subr.mxu0 0.0
  %2818 = vmatpush1.msra.mxu0 0.0
  %2819 = vmatprep.subr.mxu0 0.0
  %2820 = vmatpush1.msra.mxu0 0.0
  %2821 = vmatprep.subr.mxu0 0.0
  %2822 = vmatpush1.msra.mxu0 0.0
  %2823 = vmatprep.subr.mxu0 0.0
  %2824 = vmatpush1.msra.mxu0 0.0
  %2825 = vmatprep.subr.mxu0 0.0
  %2826 = vmatpush1.msra.mxu0 0.0
  %2827 = vmatprep.subr.mxu0 0.0
  %2828 = vmatpush1.msra.mxu0 0.0
  %2829 = vmatprep.subr.mxu0 0.0
  %2830 = vmatpush1.msra.mxu0 0.0
  %2831 = vmatprep.subr.mxu0 0.0
  %2832 = vmatpush1.msra.mxu0 0.0
  %2833 = vmatprep.subr.mxu0 0.0
  %2834 = vmatpush1.msra.mxu0 0.0
  %2835 = vmatprep.mubr.f32.mxu0 0.0
  %2836 = vmatmul.mubr.f32.gmra.mrb[0].mxu0 %v2769
  %v2837 = vpop.f32.mrb[0].mxu0
  %v2838 = vadd.f32 0.0, %v2837
  %v2839 = vpop.f32.mrb[0].mxu0
  %2840 = vdwg.mxu0
  %v2841 = vadd.f32 %v2767, %v2838
  %v2842 = vrot.slane %v2398, 6
  %v2843 = vsel %vm569, %v2842, 0
  %2845 = vmatprep.subr.mxu0 0.0
  %2846 = vmatpush1.msra.mxu0 %v1023
  %2847 = vmatprep.subr.mxu0 0.0
  %2848 = vmatpush1.msra.mxu0 %v1024
  %2849 = vmatprep.subr.mxu0 0.0
  %2850 = vmatpush1.msra.mxu0 0.0
  %2851 = vmatprep.subr.mxu0 0.0
  %2852 = vmatpush1.msra.mxu0 0.0
  %2853 = vmatprep.subr.mxu0 0.0
  %2854 = vmatpush1.msra.mxu0 0.0
  %2855 = vmatprep.subr.mxu0 0.0
  %2856 = vmatpush1.msra.mxu0 0.0
  %2857 = vmatprep.subr.mxu0 0.0
  %2858 = vmatpush1.msra.mxu0 0.0
  %2859 = vmatprep.subr.mxu0 0.0
  %2860 = vmatpush1.msra.mxu0 0.0
  %2861 = vmatprep.subr.mxu0 0.0
  %2862 = vmatpush1.msra.mxu0 0.0
  %2863 = vmatprep.subr.mxu0 0.0
  %2864 = vmatpush1.msra.mxu0 0.0
  %2865 = vmatprep.subr.mxu0 0.0
  %2866 = vmatpush1.msra.mxu0 0.0
  %2867 = vmatprep.subr.mxu0 0.0
  %2868 = vmatpush1.msra.mxu0 0.0
  %2869 = vmatprep.subr.mxu0 0.0
  %2870 = vmatpush1.msra.mxu0 0.0
  %2871 = vmatprep.subr.mxu0 0.0
  %2872 = vmatpush1.msra.mxu0 0.0
  %2873 = vmatprep.subr.mxu0 0.0
  %2874 = vmatpush1.msra.mxu0 0.0
  %2875 = vmatprep.subr.mxu0 0.0
  %2876 = vmatpush1.msra.mxu0 0.0
  %2877 = vmatprep.subr.mxu0 0.0
  %2878 = vmatpush1.msra.mxu0 0.0
  %2879 = vmatprep.subr.mxu0 0.0
  %2880 = vmatpush1.msra.mxu0 0.0
  %2881 = vmatprep.subr.mxu0 0.0
  %2882 = vmatpush1.msra.mxu0 0.0
  %2883 = vmatprep.subr.mxu0 0.0
  %2884 = vmatpush1.msra.mxu0 0.0
  %2885 = vmatprep.subr.mxu0 0.0
  %2886 = vmatpush1.msra.mxu0 0.0
  %2887 = vmatprep.subr.mxu0 0.0
  %2888 = vmatpush1.msra.mxu0 0.0
  %2889 = vmatprep.subr.mxu0 0.0
  %2890 = vmatpush1.msra.mxu0 0.0
  %2891 = vmatprep.subr.mxu0 0.0
  %2892 = vmatpush1.msra.mxu0 0.0
  %2893 = vmatprep.subr.mxu0 0.0
  %2894 = vmatpush1.msra.mxu0 0.0
  %2895 = vmatprep.subr.mxu0 0.0
  %2896 = vmatpush1.msra.mxu0 0.0
  %2897 = vmatprep.subr.mxu0 0.0
  %2898 = vmatpush1.msra.mxu0 0.0
  %2899 = vmatprep.subr.mxu0 0.0
  %2900 = vmatpush1.msra.mxu0 0.0
  %2901 = vmatprep.subr.mxu0 0.0
  %2902 = vmatpush1.msra.mxu0 0.0
  %2903 = vmatprep.subr.mxu0 0.0
  %2904 = vmatpush1.msra.mxu0 0.0
  %2905 = vmatprep.subr.mxu0 0.0
  %2906 = vmatpush1.msra.mxu0 0.0
  %2907 = vmatprep.subr.mxu0 0.0
  %2908 = vmatpush1.msra.mxu0 0.0
  %2909 = vmatprep.mubr.f32.mxu0 0.0
  %2910 = vmatmul.mubr.f32.gmra.mrb[0].mxu0 %v2843
  %v2911 = vpop.f32.mrb[0].mxu0
  %v2912 = vadd.f32 0.0, %v2911
  %v2913 = vpop.f32.mrb[0].mxu0
  %2914 = vdwg.mxu0
  %v2915 = vadd.f32 %v2841, %v2912
  %v2916 = vrot.slane %v2398, 7
  %v2917 = vsel %vm569, %v2916, 0
  %2919 = vmatprep.subr.mxu0 0.0
  %2920 = vmatpush1.msra.mxu0 %v1100
  %2921 = vmatprep.subr.mxu0 0.0
  %2922 = vmatpush1.msra.mxu0 %v1101
  %2923 = vmatprep.subr.mxu0 0.0
  %2924 = vmatpush1.msra.mxu0 0.0
  %2925 = vmatprep.subr.mxu0 0.0
  %2926 = vmatpush1.msra.mxu0 0.0
  %2927 = vmatprep.subr.mxu0 0.0
  %2928 = vmatpush1.msra.mxu0 0.0
  %2929 = vmatprep.subr.mxu0 0.0
  %2930 = vmatpush1.msra.mxu0 0.0
  %2931 = vmatprep.subr.mxu0 0.0
  %2932 = vmatpush1.msra.mxu0 0.0
  %2933 = vmatprep.subr.mxu0 0.0
  %2934 = vmatpush1.msra.mxu0 0.0
  %2935 = vmatprep.subr.mxu0 0.0
  %2936 = vmatpush1.msra.mxu0 0.0
  %2937 = vmatprep.subr.mxu0 0.0
  %2938 = vmatpush1.msra.mxu0 0.0
  %2939 = vmatprep.subr.mxu0 0.0
  %2940 = vmatpush1.msra.mxu0 0.0
  %2941 = vmatprep.subr.mxu0 0.0
  %2942 = vmatpush1.msra.mxu0 0.0
  %2943 = vmatprep.subr.mxu0 0.0
  %2944 = vmatpush1.msra.mxu0 0.0
  %2945 = vmatprep.subr.mxu0 0.0
  %2946 = vmatpush1.msra.mxu0 0.0
  %2947 = vmatprep.subr.mxu0 0.0
  %2948 = vmatpush1.msra.mxu0 0.0
  %2949 = vmatprep.subr.mxu0 0.0
  %2950 = vmatpush1.msra.mxu0 0.0
  %2951 = vmatprep.subr.mxu0 0.0
  %2952 = vmatpush1.msra.mxu0 0.0
  %2953 = vmatprep.subr.mxu0 0.0
  %2954 = vmatpush1.msra.mxu0 0.0
  %2955 = vmatprep.subr.mxu0 0.0
  %2956 = vmatpush1.msra.mxu0 0.0
  %2957 = vmatprep.subr.mxu0 0.0
  %2958 = vmatpush1.msra.mxu0 0.0
  %2959 = vmatprep.subr.mxu0 0.0
  %2960 = vmatpush1.msra.mxu0 0.0
  %2961 = vmatprep.subr.mxu0 0.0
  %2962 = vmatpush1.msra.mxu0 0.0
  %2963 = vmatprep.subr.mxu0 0.0
  %2964 = vmatpush1.msra.mxu0 0.0
  %2965 = vmatprep.subr.mxu0 0.0
  %2966 = vmatpush1.msra.mxu0 0.0
  %2967 = vmatprep.subr.mxu0 0.0
  %2968 = vmatpush1.msra.mxu0 0.0
  %2969 = vmatprep.subr.mxu0 0.0
  %2970 = vmatpush1.msra.mxu0 0.0
  %2971 = vmatprep.subr.mxu0 0.0
  %2972 = vmatpush1.msra.mxu0 0.0
  %2973 = vmatprep.subr.mxu0 0.0
  %2974 = vmatpush1.msra.mxu0 0.0
  %2975 = vmatprep.subr.mxu0 0.0
  %2976 = vmatpush1.msra.mxu0 0.0
  %2977 = vmatprep.subr.mxu0 0.0
  %2978 = vmatpush1.msra.mxu0 0.0
  %2979 = vmatprep.subr.mxu0 0.0
  %2980 = vmatpush1.msra.mxu0 0.0
  %2981 = vmatprep.subr.mxu0 0.0
  %2982 = vmatpush1.msra.mxu0 0.0
  %2983 = vmatprep.mubr.f32.mxu0 0.0
  %2984 = vmatmul.mubr.f32.gmra.mrb[0].mxu0 %v2917
  %v2985 = vpop.f32.mrb[0].mxu0
  %v2986 = vadd.f32 0.0, %v2985
  %v2987 = vpop.f32.mrb[0].mxu0
  %2988 = vdwg.mxu0
  %v2989 = vadd.f32 %v2915, %v2986
  %v2991 = vsel %vm569, %v2399, 0
  %2993 = vmatprep.subr.mxu0 0.0
  %2994 = vmatpush1.msra.mxu0 %v1177
  %2995 = vmatprep.subr.mxu0 0.0
  %2996 = vmatpush1.msra.mxu0 %v1178
  %2997 = vmatprep.subr.mxu0 0.0
  %2998 = vmatpush1.msra.mxu0 0.0
  %2999 = vmatprep.subr.mxu0 0.0
  %3000 = vmatpush1.msra.mxu0 0.0
  %3001 = vmatprep.subr.mxu0 0.0
  %3002 = vmatpush1.msra.mxu0 0.0
  %3003 = vmatprep.subr.mxu0 0.0
  %3004 = vmatpush1.msra.mxu0 0.0
  %3005 = vmatprep.subr.mxu0 0.0
  %3006 = vmatpush1.msra.mxu0 0.0
  %3007 = vmatprep.subr.mxu0 0.0
  %3008 = vmatpush1.msra.mxu0 0.0
  %3009 = vmatprep.subr.mxu0 0.0
  %3010 = vmatpush1.msra.mxu0 0.0
  %3011 = vmatprep.subr.mxu0 0.0
  %3012 = vmatpush1.msra.mxu0 0.0
  %3013 = vmatprep.subr.mxu0 0.0
  %3014 = vmatpush1.msra.mxu0 0.0
  %3015 = vmatprep.subr.mxu0 0.0
  %3016 = vmatpush1.msra.mxu0 0.0
  %3017 = vmatprep.subr.mxu0 0.0
  %3018 = vmatpush1.msra.mxu0 0.0
  %3019 = vmatprep.subr.mxu0 0.0
  %3020 = vmatpush1.msra.mxu0 0.0
  %3021 = vmatprep.subr.mxu0 0.0
  %3022 = vmatpush1.msra.mxu0 0.0
  %3023 = vmatprep.subr.mxu0 0.0
  %3024 = vmatpush1.msra.mxu0 0.0
  %3025 = vmatprep.subr.mxu0 0.0
  %3026 = vmatpush1.msra.mxu0 0.0
  %3027 = vmatprep.subr.mxu0 0.0
  %3028 = vmatpush1.msra.mxu0 0.0
  %3029 = vmatprep.subr.mxu0 0.0
  %3030 = vmatpush1.msra.mxu0 0.0
  %3031 = vmatprep.subr.mxu0 0.0
  %3032 = vmatpush1.msra.mxu0 0.0
  %3033 = vmatprep.subr.mxu0 0.0
  %3034 = vmatpush1.msra.mxu0 0.0
  %3035 = vmatprep.subr.mxu0 0.0
  %3036 = vmatpush1.msra.mxu0 0.0
  %3037 = vmatprep.subr.mxu0 0.0
  %3038 = vmatpush1.msra.mxu0 0.0
  %3039 = vmatprep.subr.mxu0 0.0
  %3040 = vmatpush1.msra.mxu0 0.0
  %3041 = vmatprep.subr.mxu0 0.0
  %3042 = vmatpush1.msra.mxu0 0.0
  %3043 = vmatprep.subr.mxu0 0.0
  %3044 = vmatpush1.msra.mxu0 0.0
  %3045 = vmatprep.subr.mxu0 0.0
  %3046 = vmatpush1.msra.mxu0 0.0
  %3047 = vmatprep.subr.mxu0 0.0
  %3048 = vmatpush1.msra.mxu0 0.0
  %3049 = vmatprep.subr.mxu0 0.0
  %3050 = vmatpush1.msra.mxu0 0.0
  %3051 = vmatprep.subr.mxu0 0.0
  %3052 = vmatpush1.msra.mxu0 0.0
  %3053 = vmatprep.subr.mxu0 0.0
  %3054 = vmatpush1.msra.mxu0 0.0
  %3055 = vmatprep.subr.mxu0 0.0
  %3056 = vmatpush1.msra.mxu0 0.0
  %3057 = vmatprep.mubr.f32.mxu0 0.0
  %3058 = vmatmul.mubr.f32.gmra.mrb[0].mxu0 %v2991
  %v3059 = vpop.f32.mrb[0].mxu0
  %v3060 = vadd.f32 0.0, %v3059
  %v3061 = vpop.f32.mrb[0].mxu0
  %3062 = vdwg.mxu0
  %v3063 = vadd.f32 %v2989, %v3060
  %v3064 = vrot.slane %v2399, 1
  %v3065 = vsel %vm569, %v3064, 0
  %3067 = vmatprep.subr.mxu0 0.0
  %3068 = vmatpush1.msra.mxu0 %v1254
  %3069 = vmatprep.subr.mxu0 0.0
  %3070 = vmatpush1.msra.mxu0 %v1255
  %3071 = vmatprep.subr.mxu0 0.0
  %3072 = vmatpush1.msra.mxu0 0.0
  %3073 = vmatprep.subr.mxu0 0.0
  %3074 = vmatpush1.msra.mxu0 0.0
  %3075 = vmatprep.subr.mxu0 0.0
  %3076 = vmatpush1.msra.mxu0 0.0
  %3077 = vmatprep.subr.mxu0 0.0
  %3078 = vmatpush1.msra.mxu0 0.0
  %3079 = vmatprep.subr.mxu0 0.0
  %3080 = vmatpush1.msra.mxu0 0.0
  %3081 = vmatprep.subr.mxu0 0.0
  %3082 = vmatpush1.msra.mxu0 0.0
  %3083 = vmatprep.subr.mxu0 0.0
  %3084 = vmatpush1.msra.mxu0 0.0
  %3085 = vmatprep.subr.mxu0 0.0
  %3086 = vmatpush1.msra.mxu0 0.0
  %3087 = vmatprep.subr.mxu0 0.0
  %3088 = vmatpush1.msra.mxu0 0.0
  %3089 = vmatprep.subr.mxu0 0.0
  %3090 = vmatpush1.msra.mxu0 0.0
  %3091 = vmatprep.subr.mxu0 0.0
  %3092 = vmatpush1.msra.mxu0 0.0
  %3093 = vmatprep.subr.mxu0 0.0
  %3094 = vmatpush1.msra.mxu0 0.0
  %3095 = vmatprep.subr.mxu0 0.0
  %3096 = vmatpush1.msra.mxu0 0.0
  %3097 = vmatprep.subr.mxu0 0.0
  %3098 = vmatpush1.msra.mxu0 0.0
  %3099 = vmatprep.subr.mxu0 0.0
  %3100 = vmatpush1.msra.mxu0 0.0
  %3101 = vmatprep.subr.mxu0 0.0
  %3102 = vmatpush1.msra.mxu0 0.0
  %3103 = vmatprep.subr.mxu0 0.0
  %3104 = vmatpush1.msra.mxu0 0.0
  %3105 = vmatprep.subr.mxu0 0.0
  %3106 = vmatpush1.msra.mxu0 0.0
  %3107 = vmatprep.subr.mxu0 0.0
  %3108 = vmatpush1.msra.mxu0 0.0
  %3109 = vmatprep.subr.mxu0 0.0
  %3110 = vmatpush1.msra.mxu0 0.0
  %3111 = vmatprep.subr.mxu0 0.0
  %3112 = vmatpush1.msra.mxu0 0.0
  %3113 = vmatprep.subr.mxu0 0.0
  %3114 = vmatpush1.msra.mxu0 0.0
  %3115 = vmatprep.subr.mxu0 0.0
  %3116 = vmatpush1.msra.mxu0 0.0
  %3117 = vmatprep.subr.mxu0 0.0
  %3118 = vmatpush1.msra.mxu0 0.0
  %3119 = vmatprep.subr.mxu0 0.0
  %3120 = vmatpush1.msra.mxu0 0.0
  %3121 = vmatprep.subr.mxu0 0.0
  %3122 = vmatpush1.msra.mxu0 0.0
  %3123 = vmatprep.subr.mxu0 0.0
  %3124 = vmatpush1.msra.mxu0 0.0
  %3125 = vmatprep.subr.mxu0 0.0
  %3126 = vmatpush1.msra.mxu0 0.0
  %3127 = vmatprep.subr.mxu0 0.0
  %3128 = vmatpush1.msra.mxu0 0.0
  %3129 = vmatprep.subr.mxu0 0.0
  %3130 = vmatpush1.msra.mxu0 0.0
  %3131 = vmatprep.mubr.f32.mxu0 0.0
  %3132 = vmatmul.mubr.f32.gmra.mrb[0].mxu0 %v3065
  %v3133 = vpop.f32.mrb[0].mxu0
  %v3134 = vadd.f32 0.0, %v3133
  %v3135 = vpop.f32.mrb[0].mxu0
  %3136 = vdwg.mxu0
  %v3137 = vadd.f32 %v3063, %v3134
  %v3138 = vrot.slane %v2399, 2
  %v3139 = vsel %vm569, %v3138, 0
  %3141 = vmatprep.subr.mxu0 0.0
  %3142 = vmatpush1.msra.mxu0 %v1331
  %3143 = vmatprep.subr.mxu0 0.0
  %3144 = vmatpush1.msra.mxu0 %v1332
  %3145 = vmatprep.subr.mxu0 0.0
  %3146 = vmatpush1.msra.mxu0 0.0
  %3147 = vmatprep.subr.mxu0 0.0
  %3148 = vmatpush1.msra.mxu0 0.0
  %3149 = vmatprep.subr.mxu0 0.0
  %3150 = vmatpush1.msra.mxu0 0.0
  %3151 = vmatprep.subr.mxu0 0.0
  %3152 = vmatpush1.msra.mxu0 0.0
  %3153 = vmatprep.subr.mxu0 0.0
  %3154 = vmatpush1.msra.mxu0 0.0
  %3155 = vmatprep.subr.mxu0 0.0
  %3156 = vmatpush1.msra.mxu0 0.0
  %3157 = vmatprep.subr.mxu0 0.0
  %3158 = vmatpush1.msra.mxu0 0.0
  %3159 = vmatprep.subr.mxu0 0.0
  %3160 = vmatpush1.msra.mxu0 0.0
  %3161 = vmatprep.subr.mxu0 0.0
  %3162 = vmatpush1.msra.mxu0 0.0
  %3163 = vmatprep.subr.mxu0 0.0
  %3164 = vmatpush1.msra.mxu0 0.0
  %3165 = vmatprep.subr.mxu0 0.0
  %3166 = vmatpush1.msra.mxu0 0.0
  %3167 = vmatprep.subr.mxu0 0.0
  %3168 = vmatpush1.msra.mxu0 0.0
  %3169 = vmatprep.subr.mxu0 0.0
  %3170 = vmatpush1.msra.mxu0 0.0
  %3171 = vmatprep.subr.mxu0 0.0
  %3172 = vmatpush1.msra.mxu0 0.0
  %3173 = vmatprep.subr.mxu0 0.0
  %3174 = vmatpush1.msra.mxu0 0.0
  %3175 = vmatprep.subr.mxu0 0.0
  %3176 = vmatpush1.msra.mxu0 0.0
  %3177 = vmatprep.subr.mxu0 0.0
  %3178 = vmatpush1.msra.mxu0 0.0
  %3179 = vmatprep.subr.mxu0 0.0
  %3180 = vmatpush1.msra.mxu0 0.0
  %3181 = vmatprep.subr.mxu0 0.0
  %3182 = vmatpush1.msra.mxu0 0.0
  %3183 = vmatprep.subr.mxu0 0.0
  %3184 = vmatpush1.msra.mxu0 0.0
  %3185 = vmatprep.subr.mxu0 0.0
  %3186 = vmatpush1.msra.mxu0 0.0
  %3187 = vmatprep.subr.mxu0 0.0
  %3188 = vmatpush1.msra.mxu0 0.0
  %3189 = vmatprep.subr.mxu0 0.0
  %3190 = vmatpush1.msra.mxu0 0.0
  %3191 = vmatprep.subr.mxu0 0.0
  %3192 = vmatpush1.msra.mxu0 0.0
  %3193 = vmatprep.subr.mxu0 0.0
  %3194 = vmatpush1.msra.mxu0 0.0
  %3195 = vmatprep.subr.mxu0 0.0
  %3196 = vmatpush1.msra.mxu0 0.0
  %3197 = vmatprep.subr.mxu0 0.0
  %3198 = vmatpush1.msra.mxu0 0.0
  %3199 = vmatprep.subr.mxu0 0.0
  %3200 = vmatpush1.msra.mxu0 0.0
  %3201 = vmatprep.subr.mxu0 0.0
  %3202 = vmatpush1.msra.mxu0 0.0
  %3203 = vmatprep.subr.mxu0 0.0
  %3204 = vmatpush1.msra.mxu0 0.0
  %3205 = vmatprep.mubr.f32.mxu0 0.0
  %3206 = vmatmul.mubr.f32.gmra.mrb[0].mxu0 %v3139
  %v3207 = vpop.f32.mrb[0].mxu0
  %v3208 = vadd.f32 0.0, %v3207
  %v3209 = vpop.f32.mrb[0].mxu0
  %3210 = vdwg.mxu0
  %v3211 = vadd.f32 %v3137, %v3208
  %v3212 = vrot.slane %v2399, 3
  %v3213 = vsel %vm569, %v3212, 0
  %3215 = vmatprep.subr.mxu0 0.0
  %3216 = vmatpush1.msra.mxu0 %v1408
  %3217 = vmatprep.subr.mxu0 0.0
  %3218 = vmatpush1.msra.mxu0 %v1409
  %3219 = vmatprep.subr.mxu0 0.0
  %3220 = vmatpush1.msra.mxu0 0.0
  %3221 = vmatprep.subr.mxu0 0.0
  %3222 = vmatpush1.msra.mxu0 0.0
  %3223 = vmatprep.subr.mxu0 0.0
  %3224 = vmatpush1.msra.mxu0 0.0
  %3225 = vmatprep.subr.mxu0 0.0
  %3226 = vmatpush1.msra.mxu0 0.0
  %3227 = vmatprep.subr.mxu0 0.0
  %3228 = vmatpush1.msra.mxu0 0.0
  %3229 = vmatprep.subr.mxu0 0.0
  %3230 = vmatpush1.msra.mxu0 0.0
  %3231 = vmatprep.subr.mxu0 0.0
  %3232 = vmatpush1.msra.mxu0 0.0
  %3233 = vmatprep.subr.mxu0 0.0
  %3234 = vmatpush1.msra.mxu0 0.0
  %3235 = vmatprep.subr.mxu0 0.0
  %3236 = vmatpush1.msra.mxu0 0.0
  %3237 = vmatprep.subr.mxu0 0.0
  %3238 = vmatpush1.msra.mxu0 0.0
  %3239 = vmatprep.subr.mxu0 0.0
  %3240 = vmatpush1.msra.mxu0 0.0
  %3241 = vmatprep.subr.mxu0 0.0
  %3242 = vmatpush1.msra.mxu0 0.0
  %3243 = vmatprep.subr.mxu0 0.0
  %3244 = vmatpush1.msra.mxu0 0.0
  %3245 = vmatprep.subr.mxu0 0.0
  %3246 = vmatpush1.msra.mxu0 0.0
  %3247 = vmatprep.subr.mxu0 0.0
  %3248 = vmatpush1.msra.mxu0 0.0
  %3249 = vmatprep.subr.mxu0 0.0
  %3250 = vmatpush1.msra.mxu0 0.0
  %3251 = vmatprep.subr.mxu0 0.0
  %3252 = vmatpush1.msra.mxu0 0.0
  %3253 = vmatprep.subr.mxu0 0.0
  %3254 = vmatpush1.msra.mxu0 0.0
  %3255 = vmatprep.subr.mxu0 0.0
  %3256 = vmatpush1.msra.mxu0 0.0
  %3257 = vmatprep.subr.mxu0 0.0
  %3258 = vmatpush1.msra.mxu0 0.0
  %3259 = vmatprep.subr.mxu0 0.0
  %3260 = vmatpush1.msra.mxu0 0.0
  %3261 = vmatprep.subr.mxu0 0.0
  %3262 = vmatpush1.msra.mxu0 0.0
  %3263 = vmatprep.subr.mxu0 0.0
  %3264 = vmatpush1.msra.mxu0 0.0
  %3265 = vmatprep.subr.mxu0 0.0
  %3266 = vmatpush1.msra.mxu0 0.0
  %3267 = vmatprep.subr.mxu0 0.0
  %3268 = vmatpush1.msra.mxu0 0.0
  %3269 = vmatprep.subr.mxu0 0.0
  %3270 = vmatpush1.msra.mxu0 0.0
  %3271 = vmatprep.subr.mxu0 0.0
  %3272 = vmatpush1.msra.mxu0 0.0
  %3273 = vmatprep.subr.mxu0 0.0
  %3274 = vmatpush1.msra.mxu0 0.0
  %3275 = vmatprep.subr.mxu0 0.0
  %3276 = vmatpush1.msra.mxu0 0.0
  %3277 = vmatprep.subr.mxu0 0.0
  %3278 = vmatpush1.msra.mxu0 0.0
  %3279 = vmatprep.mubr.f32.mxu0 0.0
  %3280 = vmatmul.mubr.f32.gmra.mrb[0].mxu0 %v3213
  %v3281 = vpop.f32.mrb[0].mxu0
  %v3282 = vadd.f32 0.0, %v3281
  %v3283 = vpop.f32.mrb[0].mxu0
  %3284 = vdwg.mxu0
  %v3285 = vadd.f32 %v3211, %v3282
  %v3286 = vrot.slane %v2399, 4
  %v3287 = vsel %vm569, %v3286, 0
  %3289 = vmatprep.subr.mxu0 0.0
  %3290 = vmatpush1.msra.mxu0 %v1485
  %3291 = vmatprep.subr.mxu0 0.0
  %3292 = vmatpush1.msra.mxu0 %v1486
  %3293 = vmatprep.subr.mxu0 0.0
  %3294 = vmatpush1.msra.mxu0 0.0
  %3295 = vmatprep.subr.mxu0 0.0
  %3296 = vmatpush1.msra.mxu0 0.0
  %3297 = vmatprep.subr.mxu0 0.0
  %3298 = vmatpush1.msra.mxu0 0.0
  %3299 = vmatprep.subr.mxu0 0.0
  %3300 = vmatpush1.msra.mxu0 0.0
  %3301 = vmatprep.subr.mxu0 0.0
  %3302 = vmatpush1.msra.mxu0 0.0
  %3303 = vmatprep.subr.mxu0 0.0
  %3304 = vmatpush1.msra.mxu0 0.0
  %3305 = vmatprep.subr.mxu0 0.0
  %3306 = vmatpush1.msra.mxu0 0.0
  %3307 = vmatprep.subr.mxu0 0.0
  %3308 = vmatpush1.msra.mxu0 0.0
  %3309 = vmatprep.subr.mxu0 0.0
  %3310 = vmatpush1.msra.mxu0 0.0
  %3311 = vmatprep.subr.mxu0 0.0
  %3312 = vmatpush1.msra.mxu0 0.0
  %3313 = vmatprep.subr.mxu0 0.0
  %3314 = vmatpush1.msra.mxu0 0.0
  %3315 = vmatprep.subr.mxu0 0.0
  %3316 = vmatpush1.msra.mxu0 0.0
  %3317 = vmatprep.subr.mxu0 0.0
  %3318 = vmatpush1.msra.mxu0 0.0
  %3319 = vmatprep.subr.mxu0 0.0
  %3320 = vmatpush1.msra.mxu0 0.0
  %3321 = vmatprep.subr.mxu0 0.0
  %3322 = vmatpush1.msra.mxu0 0.0
  %3323 = vmatprep.subr.mxu0 0.0
  %3324 = vmatpush1.msra.mxu0 0.0
  %3325 = vmatprep.subr.mxu0 0.0
  %3326 = vmatpush1.msra.mxu0 0.0
  %3327 = vmatprep.subr.mxu0 0.0
  %3328 = vmatpush1.msra.mxu0 0.0
  %3329 = vmatprep.subr.mxu0 0.0
  %3330 = vmatpush1.msra.mxu0 0.0
  %3331 = vmatprep.subr.mxu0 0.0
  %3332 = vmatpush1.msra.mxu0 0.0
  %3333 = vmatprep.subr.mxu0 0.0
  %3334 = vmatpush1.msra.mxu0 0.0
  %3335 = vmatprep.subr.mxu0 0.0
  %3336 = vmatpush1.msra.mxu0 0.0
  %3337 = vmatprep.subr.mxu0 0.0
  %3338 = vmatpush1.msra.mxu0 0.0
  %3339 = vmatprep.subr.mxu0 0.0
  %3340 = vmatpush1.msra.mxu0 0.0
  %3341 = vmatprep.subr.mxu0 0.0
  %3342 = vmatpush1.msra.mxu0 0.0
  %3343 = vmatprep.subr.mxu0 0.0
  %3344 = vmatpush1.msra.mxu0 0.0
  %3345 = vmatprep.subr.mxu0 0.0
  %3346 = vmatpush1.msra.mxu0 0.0
  %3347 = vmatprep.subr.mxu0 0.0
  %3348 = vmatpush1.msra.mxu0 0.0
  %3349 = vmatprep.subr.mxu0 0.0
  %3350 = vmatpush1.msra.mxu0 0.0
  %3351 = vmatprep.subr.mxu0 0.0
  %3352 = vmatpush1.msra.mxu0 0.0
  %3353 = vmatprep.mubr.f32.mxu0 0.0
  %3354 = vmatmul.mubr.f32.gmra.mrb[0].mxu0 %v3287
  %v3355 = vpop.f32.mrb[0].mxu0
  %v3356 = vadd.f32 0.0, %v3355
  %v3357 = vpop.f32.mrb[0].mxu0
  %3358 = vdwg.mxu0
  %v3359 = vadd.f32 %v3285, %v3356
  %v3360 = vrot.slane %v2399, 5
  %v3361 = vsel %vm569, %v3360, 0
  %3363 = vmatprep.subr.mxu0 0.0
  %3364 = vmatpush1.msra.mxu0 %v1562
  %3365 = vmatprep.subr.mxu0 0.0
  %3366 = vmatpush1.msra.mxu0 %v1563
  %3367 = vmatprep.subr.mxu0 0.0
  %3368 = vmatpush1.msra.mxu0 0.0
  %3369 = vmatprep.subr.mxu0 0.0
  %3370 = vmatpush1.msra.mxu0 0.0
  %3371 = vmatprep.subr.mxu0 0.0
  %3372 = vmatpush1.msra.mxu0 0.0
  %3373 = vmatprep.subr.mxu0 0.0
  %3374 = vmatpush1.msra.mxu0 0.0
  %3375 = vmatprep.subr.mxu0 0.0
  %3376 = vmatpush1.msra.mxu0 0.0
  %3377 = vmatprep.subr.mxu0 0.0
  %3378 = vmatpush1.msra.mxu0 0.0
  %3379 = vmatprep.subr.mxu0 0.0
  %3380 = vmatpush1.msra.mxu0 0.0
  %3381 = vmatprep.subr.mxu0 0.0
  %3382 = vmatpush1.msra.mxu0 0.0
  %3383 = vmatprep.subr.mxu0 0.0
  %3384 = vmatpush1.msra.mxu0 0.0
  %3385 = vmatprep.subr.mxu0 0.0
  %3386 = vmatpush1.msra.mxu0 0.0
  %3387 = vmatprep.subr.mxu0 0.0
  %3388 = vmatpush1.msra.mxu0 0.0
  %3389 = vmatprep.subr.mxu0 0.0
  %3390 = vmatpush1.msra.mxu0 0.0
  %3391 = vmatprep.subr.mxu0 0.0
  %3392 = vmatpush1.msra.mxu0 0.0
  %3393 = vmatprep.subr.mxu0 0.0
  %3394 = vmatpush1.msra.mxu0 0.0
  %3395 = vmatprep.subr.mxu0 0.0
  %3396 = vmatpush1.msra.mxu0 0.0
  %3397 = vmatprep.subr.mxu0 0.0
  %3398 = vmatpush1.msra.mxu0 0.0
  %3399 = vmatprep.subr.mxu0 0.0
  %3400 = vmatpush1.msra.mxu0 0.0
  %3401 = vmatprep.subr.mxu0 0.0
  %3402 = vmatpush1.msra.mxu0 0.0
  %3403 = vmatprep.subr.mxu0 0.0
  %3404 = vmatpush1.msra.mxu0 0.0
  %3405 = vmatprep.subr.mxu0 0.0
  %3406 = vmatpush1.msra.mxu0 0.0
  %3407 = vmatprep.subr.mxu0 0.0
  %3408 = vmatpush1.msra.mxu0 0.0
  %3409 = vmatprep.subr.mxu0 0.0
  %3410 = vmatpush1.msra.mxu0 0.0
  %3411 = vmatprep.subr.mxu0 0.0
  %3412 = vmatpush1.msra.mxu0 0.0
  %3413 = vmatprep.subr.mxu0 0.0
  %3414 = vmatpush1.msra.mxu0 0.0
  %3415 = vmatprep.subr.mxu0 0.0
  %3416 = vmatpush1.msra.mxu0 0.0
  %3417 = vmatprep.subr.mxu0 0.0
  %3418 = vmatpush1.msra.mxu0 0.0
  %3419 = vmatprep.subr.mxu0 0.0
  %3420 = vmatpush1.msra.mxu0 0.0
  %3421 = vmatprep.subr.mxu0 0.0
  %3422 = vmatpush1.msra.mxu0 0.0
  %3423 = vmatprep.subr.mxu0 0.0
  %3424 = vmatpush1.msra.mxu0 0.0
  %3425 = vmatprep.subr.mxu0 0.0
  %3426 = vmatpush1.msra.mxu0 0.0
  %3427 = vmatprep.mubr.f32.mxu0 0.0
  %3428 = vmatmul.mubr.f32.gmra.mrb[0].mxu0 %v3361
  %v3429 = vpop.f32.mrb[0].mxu0
  %v3430 = vadd.f32 0.0, %v3429
  %v3431 = vpop.f32.mrb[0].mxu0
  %3432 = vdwg.mxu0
  %v3433 = vadd.f32 %v3359, %v3430
  %v3434 = vrot.slane %v2399, 6
  %v3435 = vsel %vm569, %v3434, 0
  %3437 = vmatprep.subr.mxu0 0.0
  %3438 = vmatpush1.msra.mxu0 %v1639
  %3439 = vmatprep.subr.mxu0 0.0
  %3440 = vmatpush1.msra.mxu0 %v1640
  %3441 = vmatprep.subr.mxu0 0.0
  %3442 = vmatpush1.msra.mxu0 0.0
  %3443 = vmatprep.subr.mxu0 0.0
  %3444 = vmatpush1.msra.mxu0 0.0
  %3445 = vmatprep.subr.mxu0 0.0
  %3446 = vmatpush1.msra.mxu0 0.0
  %3447 = vmatprep.subr.mxu0 0.0
  %3448 = vmatpush1.msra.mxu0 0.0
  %3449 = vmatprep.subr.mxu0 0.0
  %3450 = vmatpush1.msra.mxu0 0.0
  %3451 = vmatprep.subr.mxu0 0.0
  %3452 = vmatpush1.msra.mxu0 0.0
  %3453 = vmatprep.subr.mxu0 0.0
  %3454 = vmatpush1.msra.mxu0 0.0
  %3455 = vmatprep.subr.mxu0 0.0
  %3456 = vmatpush1.msra.mxu0 0.0
  %3457 = vmatprep.subr.mxu0 0.0
  %3458 = vmatpush1.msra.mxu0 0.0
  %3459 = vmatprep.subr.mxu0 0.0
  %3460 = vmatpush1.msra.mxu0 0.0
  %3461 = vmatprep.subr.mxu0 0.0
  %3462 = vmatpush1.msra.mxu0 0.0
  %3463 = vmatprep.subr.mxu0 0.0
  %3464 = vmatpush1.msra.mxu0 0.0
  %3465 = vmatprep.subr.mxu0 0.0
  %3466 = vmatpush1.msra.mxu0 0.0
  %3467 = vmatprep.subr.mxu0 0.0
  %3468 = vmatpush1.msra.mxu0 0.0
  %3469 = vmatprep.subr.mxu0 0.0
  %3470 = vmatpush1.msra.mxu0 0.0
  %3471 = vmatprep.subr.mxu0 0.0
  %3472 = vmatpush1.msra.mxu0 0.0
  %3473 = vmatprep.subr.mxu0 0.0
  %3474 = vmatpush1.msra.mxu0 0.0
  %3475 = vmatprep.subr.mxu0 0.0
  %3476 = vmatpush1.msra.mxu0 0.0
  %3477 = vmatprep.subr.mxu0 0.0
  %3478 = vmatpush1.msra.mxu0 0.0
  %3479 = vmatprep.subr.mxu0 0.0
  %3480 = vmatpush1.msra.mxu0 0.0
  %3481 = vmatprep.subr.mxu0 0.0
  %3482 = vmatpush1.msra.mxu0 0.0
  %3483 = vmatprep.subr.mxu0 0.0
  %3484 = vmatpush1.msra.mxu0 0.0
  %3485 = vmatprep.subr.mxu0 0.0
  %3486 = vmatpush1.msra.mxu0 0.0
  %3487 = vmatprep.subr.mxu0 0.0
  %3488 = vmatpush1.msra.mxu0 0.0
  %3489 = vmatprep.subr.mxu0 0.0
  %3490 = vmatpush1.msra.mxu0 0.0
  %3491 = vmatprep.subr.mxu0 0.0
  %3492 = vmatpush1.msra.mxu0 0.0
  %3493 = vmatprep.subr.mxu0 0.0
  %3494 = vmatpush1.msra.mxu0 0.0
  %3495 = vmatprep.subr.mxu0 0.0
  %3496 = vmatpush1.msra.mxu0 0.0
  %3497 = vmatprep.subr.mxu0 0.0
  %3498 = vmatpush1.msra.mxu0 0.0
  %3499 = vmatprep.subr.mxu0 0.0
  %3500 = vmatpush1.msra.mxu0 0.0
  %3501 = vmatprep.mubr.f32.mxu0 0.0
  %3502 = vmatmul.mubr.f32.gmra.mrb[0].mxu0 %v3435
  %v3503 = vpop.f32.mrb[0].mxu0
  %v3504 = vadd.f32 0.0, %v3503
  %v3505 = vpop.f32.mrb[0].mxu0
  %3506 = vdwg.mxu0
  %v3507 = vadd.f32 %v3433, %v3504
  %v3508 = vrot.slane %v2399, 7
  %v3509 = vsel %vm569, %v3508, 0
  %3511 = vmatprep.subr.mxu0 0.0
  %3512 = vmatpush1.msra.mxu0 %v1716
  %3513 = vmatprep.subr.mxu0 0.0
  %3514 = vmatpush1.msra.mxu0 %v1717
  %3515 = vmatprep.subr.mxu0 0.0
  %3516 = vmatpush1.msra.mxu0 0.0
  %3517 = vmatprep.subr.mxu0 0.0
  %3518 = vmatpush1.msra.mxu0 0.0
  %3519 = vmatprep.subr.mxu0 0.0
  %3520 = vmatpush1.msra.mxu0 0.0
  %3521 = vmatprep.subr.mxu0 0.0
  %3522 = vmatpush1.msra.mxu0 0.0
  %3523 = vmatprep.subr.mxu0 0.0
  %3524 = vmatpush1.msra.mxu0 0.0
  %3525 = vmatprep.subr.mxu0 0.0
  %3526 = vmatpush1.msra.mxu0 0.0
  %3527 = vmatprep.subr.mxu0 0.0
  %3528 = vmatpush1.msra.mxu0 0.0
  %3529 = vmatprep.subr.mxu0 0.0
  %3530 = vmatpush1.msra.mxu0 0.0
  %3531 = vmatprep.subr.mxu0 0.0
  %3532 = vmatpush1.msra.mxu0 0.0
  %3533 = vmatprep.subr.mxu0 0.0
  %3534 = vmatpush1.msra.mxu0 0.0
  %3535 = vmatprep.subr.mxu0 0.0
  %3536 = vmatpush1.msra.mxu0 0.0
  %3537 = vmatprep.subr.mxu0 0.0
  %3538 = vmatpush1.msra.mxu0 0.0
  %3539 = vmatprep.subr.mxu0 0.0
  %3540 = vmatpush1.msra.mxu0 0.0
  %3541 = vmatprep.subr.mxu0 0.0
  %3542 = vmatpush1.msra.mxu0 0.0
  %3543 = vmatprep.subr.mxu0 0.0
  %3544 = vmatpush1.msra.mxu0 0.0
  %3545 = vmatprep.subr.mxu0 0.0
  %3546 = vmatpush1.msra.mxu0 0.0
  %3547 = vmatprep.subr.mxu0 0.0
  %3548 = vmatpush1.msra.mxu0 0.0
  %3549 = vmatprep.subr.mxu0 0.0
  %3550 = vmatpush1.msra.mxu0 0.0
  %3551 = vmatprep.subr.mxu0 0.0
  %3552 = vmatpush1.msra.mxu0 0.0
  %3553 = vmatprep.subr.mxu0 0.0
  %3554 = vmatpush1.msra.mxu0 0.0
  %3555 = vmatprep.subr.mxu0 0.0
  %3556 = vmatpush1.msra.mxu0 0.0
  %3557 = vmatprep.subr.mxu0 0.0
  %3558 = vmatpush1.msra.mxu0 0.0
  %3559 = vmatprep.subr.mxu0 0.0
  %3560 = vmatpush1.msra.mxu0 0.0
  %3561 = vmatprep.subr.mxu0 0.0
  %3562 = vmatpush1.msra.mxu0 0.0
  %3563 = vmatprep.subr.mxu0 0.0
  %3564 = vmatpush1.msra.mxu0 0.0
  %3565 = vmatprep.subr.mxu0 0.0
  %3566 = vmatpush1.msra.mxu0 0.0
  %3567 = vmatprep.subr.mxu0 0.0
  %3568 = vmatpush1.msra.mxu0 0.0
  %3569 = vmatprep.subr.mxu0 0.0
  %3570 = vmatpush1.msra.mxu0 0.0
  %3571 = vmatprep.subr.mxu0 0.0
  %3572 = vmatpush1.msra.mxu0 0.0
  %3573 = vmatprep.subr.mxu0 0.0
  %3574 = vmatpush1.msra.mxu0 0.0
  %3575 = vmatprep.mubr.f32.mxu0 0.0
  %3576 = vmatmul.mubr.f32.gmra.mrb[0].mxu0 %v3509
  %v3577 = vpop.f32.mrb[0].mxu0
  %v3578 = vadd.f32 0.0, %v3577
  %v3579 = vpop.f32.mrb[0].mxu0
  %3580 = vdwg.mxu0
  %v3581 = vadd.f32 %v3507, %v3578
  %v3582 = vadd.f32 %v3581, %v1792
  %v3583 = vtanh.pop %v3582
  %v3585 = vsel %vm1811, %v3583, 0
  %3587 = vmatprep.subr.mxu0 0.0
  %3588 = vmatpush1.msra.mxu0 %v1795
  %3589 = vmatprep.subr.mxu0 0.0
  %3590 = vmatpush1.msra.mxu0 %v1796
  %3591 = vmatprep.subr.mxu0 0.0
  %3592 = vmatpush1.msra.mxu0 %v1797
  %3593 = vmatprep.subr.mxu0 0.0
  %3594 = vmatpush1.msra.mxu0 %v1798
  %3595 = vmatprep.subr.mxu0 0.0
  %3596 = vmatpush1.msra.mxu0 %v1799
  %3597 = vmatprep.subr.mxu0 0.0
  %3598 = vmatpush1.msra.mxu0 %v1800
  %3599 = vmatprep.subr.mxu0 0.0
  %3600 = vmatpush1.msra.mxu0 %v1801
  %3601 = vmatprep.subr.mxu0 0.0
  %3602 = vmatpush1.msra.mxu0 %v1802
  %3603 = vmatprep.subr.mxu0 0.0
  %3604 = vmatpush1.msra.mxu0 %v1803
  %3605 = vmatprep.subr.mxu0 0.0
  %3606 = vmatpush1.msra.mxu0 %v1804
  %3607 = vmatprep.subr.mxu0 0.0
  %3608 = vmatpush1.msra.mxu0 %v1805
  %3609 = vmatprep.subr.mxu0 0.0
  %3610 = vmatpush1.msra.mxu0 %v1806
  %3611 = vmatprep.subr.mxu0 0.0
  %3612 = vmatpush1.msra.mxu0 %v1807
  %3613 = vmatprep.subr.mxu0 0.0
  %3614 = vmatpush1.msra.mxu0 %v1808
  %3615 = vmatprep.subr.mxu0 0.0
  %3616 = vmatpush1.msra.mxu0 %v1809
  %3617 = vmatprep.subr.mxu0 0.0
  %3618 = vmatpush1.msra.mxu0 0.0
  %3619 = vmatprep.subr.mxu0 0.0
  %3620 = vmatpush1.msra.mxu0 0.0
  %3621 = vmatprep.subr.mxu0 0.0
  %3622 = vmatpush1.msra.mxu0 0.0
  %3623 = vmatprep.subr.mxu0 0.0
  %3624 = vmatpush1.msra.mxu0 0.0
  %3625 = vmatprep.subr.mxu0 0.0
  %3626 = vmatpush1.msra.mxu0 0.0
  %3627 = vmatprep.subr.mxu0 0.0
  %3628 = vmatpush1.msra.mxu0 0.0
  %3629 = vmatprep.subr.mxu0 0.0
  %3630 = vmatpush1.msra.mxu0 0.0
  %3631 = vmatprep.subr.mxu0 0.0
  %3632 = vmatpush1.msra.mxu0 0.0
  %3633 = vmatprep.subr.mxu0 0.0
  %3634 = vmatpush1.msra.mxu0 0.0
  %3635 = vmatprep.subr.mxu0 0.0
  %3636 = vmatpush1.msra.mxu0 0.0
  %3637 = vmatprep.subr.mxu0 0.0
  %3638 = vmatpush1.msra.mxu0 0.0
  %3639 = vmatprep.subr.mxu0 0.0
  %3640 = vmatpush1.msra.mxu0 0.0
  %3641 = vmatprep.subr.mxu0 0.0
  %3642 = vmatpush1.msra.mxu0 0.0
  %3643 = vmatprep.subr.mxu0 0.0
  %3644 = vmatpush1.msra.mxu0 0.0
  %3645 = vmatprep.subr.mxu0 0.0
  %3646 = vmatpush1.msra.mxu0 0.0
  %3647 = vmatprep.subr.mxu0 0.0
  %3648 = vmatpush1.msra.mxu0 0.0
  %3649 = vmatprep.subr.mxu0 0.0
  %3650 = vmatpush1.msra.mxu0 0.0
  %3651 = vmatprep.mubr.f32.mxu0 0.0
  %3652 = vmatmul.mubr.f32.gmra.mrb[0].mxu0 %v3585
  %v3653 = vpop.f32.mrb[0].mxu0
  %v3654 = vadd.f32 %v1810, %v3653
  %v3655 = vpop.f32.mrb[0].mxu0
  %3656 = vdwg.mxu0
  %v3657 = vtanh.pop %v3654
  %v3658 = vmul.f32 %v3657, %v1886
  %v3659 = vsel %vm1888, %v3658, 0.0
  %3660 = vadd.xlane.f32.xlu0 %v3659
  %v3661 = vpop.xlane.xlu0 %3660
  %v3662 = vadd.f32 %v3661, %v1892
  %v3663 = vsub.f32 0.0, %v3662
  %v3664 = vmul.f32 %v3663, 1.442695
  %v3665 = vpow.pop %v3664
  %v3666 = vadd.f32 %v3665, 1.0
  %v3667 = vrcp.pop %v3666
  %v3668 = vmul.f32 1.0, %v3667
  %v3670 = vrot.slane %v3668, 7
  %vm3672 = vcmask 1040384
  %v3673 = vsel %vm3672, %v1899, %v3670
  %vm3674 = vcmask 1024
  %3675 = vst.msk [vmem:[%s9] sm:$0x3] %vm3674, %v3673
  // Predicated region
  $region38: #{cnn_forward.3} parent=0 // pred_check
    _
  $region39: #{cnn_forward.3} parent=0 // pred_check_branch
    %3677 = sbr.rel (0) target = $region41
  $region40: #{cnn_forward.3} parent=0 // pred_region
    _
  $region41: #{cnn_forward.3} parent=0 // pred_fallthru
    _
  // Predicated region
  $region42: #{cnn_forward.3} parent=0 // pred_check
    _
  $region43: #{cnn_forward.3} parent=0 // pred_check_branch
    %3679 = sbr.rel (0) target = $region45
  $region44: #{cnn_forward.3} parent=0 // pred_region
    _
  $region45: #{cnn_forward.3} parent=0 // pred_fallthru
    _

</llo_original>
